<compile_context>
chip_gen: v7x
topology: tpu7x:2x2x1
jax: 0.10.0
libtpu: 0.0.40
codegen_flags: <defaults>
</compile_context>

<pallas_src>
import functools

import jax
import jax.numpy as jnp
from jax import lax
from jax.experimental import pallas as pl
from jax.experimental.pallas import tpu as pltpu


def _round_up(x, m):
    return ((x + m - 1) // m) * m


# ----------------------------------------------------------------------------
# Fused kernel: all LSTM layers + FC head in a single pallas_call (no grid).
# ----------------------------------------------------------------------------
def _fused_lstm_classifier_kernel(*refs, seq_len, batch, hidden_pad, num_layers,
                                  matmul_dtype, unroll):
    n_in = 1 + 3 * num_layers + 2
    x_ref = refs[0]                              # (S, B, D) time-major, matmul_dtype
    layer_refs = refs[1:1 + 3 * num_layers]      # per layer: w_ih_t, w_hh_t, b
    fc_w_ref = refs[1 + 3 * num_layers]          # (Hp, C) matmul_dtype
    fc_b_ref = refs[2 + 3 * num_layers]          # (1, C)  f32
    out_ref = refs[n_in]                         # (B, C)
    xproj_scr = refs[n_in + 1]                   # (S, B, 4Hp) f32
    hseq_scr = refs[n_in + 2] if num_layers > 1 else None

    S, B, Hp = seq_len, batch, hidden_pad
    G = 4 * Hp

    h_final = jnp.zeros((B, Hp), jnp.float32)

    for layer in range(num_layers):
        w_ih = layer_refs[3 * layer][...]        # (D_l, 4Hp) matmul_dtype
        w_hh = layer_refs[3 * layer + 1][...]    # (Hp, 4Hp)  f32 (recurrent path)
        bias = layer_refs[3 * layer + 2][...]    # (1, 4Hp)   f32

        # ---- hoisted input projection: one (S*B, D_l) @ (D_l, 4Hp) matmul ----
        if layer == 0:
            inp2d = x_ref[...].reshape(S * B, x_ref.shape[-1])
        else:
            inp2d = hseq_scr[...].reshape(S * B, Hp)      # already matmul_dtype
        xproj_scr[...] = (jnp.dot(inp2d, w_ih, preferred_element_type=jnp.float32)
                          + bias).reshape(S, B, G)

        write_hseq = layer != num_layers - 1      # last layer: only h_T is needed

        # ---- serial recurrence: only h @ W_hh + gate math per step ----
        def step(t, carry, w_hh=w_hh, write_hseq=write_hseq):
            h, c = carry                                          # (B, Hp) f32, vregs
            gates = xproj_scr[t] + jnp.dot(h, w_hh,
                                           preferred_element_type=jnp.float32)
            # Hp is a multiple of 128 -> every gate slice is lane-aligned (no XLU).
            i_g = jax.nn.sigmoid(gates[:, 0 * Hp:1 * Hp])
            f_g = jax.nn.sigmoid(gates[:, 1 * Hp:2 * Hp])
            g_g = jnp.tanh(gates[:, 2 * Hp:3 * Hp])
            o_g = jax.nn.sigmoid(gates[:, 3 * Hp:4 * Hp])
            c_new = f_g * c + i_g * g_g
            h_new = o_g * jnp.tanh(c_new)
            if write_hseq:
                hseq_scr[t] = h_new.astype(hseq_scr.dtype)
            return h_new, c_new

        h0 = jnp.zeros((B, Hp), jnp.float32)
        c0 = jnp.zeros((B, Hp), jnp.float32)
        h_final, _ = lax.fori_loop(0, S, step, (h0, c0), unroll=unroll)

    # ---- classification head on the final hidden state of the last layer ----
    out_ref[...] = (jnp.dot(h_final.astype(matmul_dtype), fc_w_ref[...],
                            preferred_element_type=jnp.float32)
                    + fc_b_ref[...]).astype(out_ref.dtype)


# ----------------------------------------------------------------------------
# Wrapper: pad gates to 128-lane boundaries, transpose to kernel layout,
# cast MXU-only operands to matmul_dtype, and call the fused kernel.
# ----------------------------------------------------------------------------
def _prepare_params(raw, matmul_dtype, lane=128):
    H = raw["hidden_dim"]
    Hp = _round_up(H, lane)

    def pad_gate_rows(w):
        # (4H, ...) -> (4Hp, ...), zero-padding each gate block independently.
        if Hp == H:
            return w
        blocks = [w[k * H:(k + 1) * H] for k in range(4)]
        pad_width = [(0, Hp - H)] + [(0, 0)] * (w.ndim - 1)
        return jnp.concatenate([jnp.pad(b, pad_width) for b in blocks], axis=0)

    layers = []
    for l, lyr in enumerate(raw["lstm"]):
        w_ih = pad_gate_rows(lyr["w_ih"])                      # (4Hp, in_dim)
        w_hh = pad_gate_rows(lyr["w_hh"])                      # (4Hp, H)
        b = pad_gate_rows(lyr["b_ih"] + lyr["b_hh"])           # (4Hp,)
        w_hh = jnp.pad(w_hh, ((0, 0), (0, Hp - H)))            # (4Hp, Hp)
        if l > 0:
            w_ih = jnp.pad(w_ih, ((0, 0), (0, Hp - H)))        # (4Hp, Hp)
        layers.append(dict(
            w_ih_t=w_ih.T.astype(matmul_dtype),                # (D_l, 4Hp)
            w_hh_t=w_hh.T.astype(jnp.float32),                 # (Hp, 4Hp) f32
            b=b[None, :].astype(jnp.float32),                  # (1, 4Hp)
        ))
    fc_w = jnp.pad(raw["fc_w"], ((0, 0), (0, Hp - H)))         # (C, Hp)
    return dict(
        lstm=layers,
        fc_w_t=fc_w.T.astype(matmul_dtype),                    # (Hp, C)
        fc_b=raw["fc_b"][None, :].astype(jnp.float32),         # (1, C)
        hidden_pad=Hp,
    )


def lstm_classifier_forward(x, raw_params, matmul_dtype=jnp.float32):
    """x: (batch, seq_len, input_dim) batch_first -> logits (batch, num_classes)."""
    batch, seq_len, _ = x.shape
    num_layers = len(raw_params["lstm"])
    num_classes = raw_params["fc_w"].shape[0]

    kp = _prepare_params(raw_params, matmul_dtype)
    Hp = kp["hidden_pad"]

    # One XLA transpose + (optional) cast in HBM; everything inside the kernel is
    # then contiguous time-major.
    x_tm = jnp.transpose(x, (1, 0, 2)).astype(matmul_dtype)    # (S, B, D)

    flat_weights = []
    for lyr in kp["lstm"]:
        flat_weights += [lyr["w_ih_t"], lyr["w_hh_t"], lyr["b"]]
    flat_weights += [kp["fc_w_t"], kp["fc_b"]]

    # Fully unroll short recurrences; partial unroll for long ones.
    unroll = seq_len if seq_len <= 32 else 8

    kernel = functools.partial(
        _fused_lstm_classifier_kernel,
        seq_len=seq_len, batch=batch, hidden_pad=Hp,
        num_layers=num_layers, matmul_dtype=matmul_dtype, unroll=unroll)

    scratch_shapes = [pltpu.VMEM((seq_len, batch, 4 * Hp), jnp.float32)]  # xproj
    if num_layers > 1:
        scratch_shapes.append(pltpu.VMEM((seq_len, batch, Hp), matmul_dtype))  # hseq

    # Explicit VMEM budget: inputs + output + scratch, with headroom.
    mm_bytes = jnp.dtype(matmul_dtype).itemsize
    total = x_tm.size * mm_bytes
    total += sum(int(a.size) * a.dtype.itemsize for a in flat_weights)
    total += batch * num_classes * 4
    total += seq_len * batch * 4 * Hp * 4
    if num_layers > 1:
        total += seq_len * batch * Hp * mm_bytes
    vmem_limit = min(128 * 1024 * 1024,
                     max(32 * 1024 * 1024, int(1.5 * total) + (4 << 20)))

    return pl.pallas_call(
        kernel,
        out_shape=jax.ShapeDtypeStruct((batch, num_classes), jnp.float32),
        scratch_shapes=scratch_shapes,
        compiler_params=pltpu.CompilerParams(vmem_limit_bytes=vmem_limit),
    )(x_tm, *flat_weights)


# ----------------------------------------------------------------------------
# Deterministic PyTorch-layout parameter init (uniform(-1/sqrt(H), 1/sqrt(H))).
# ----------------------------------------------------------------------------
def init_params(key, input_dim, hidden_dim, num_layers, num_classes):
    k = 1.0 / (hidden_dim ** 0.5)
    layers = []
    for l in range(num_layers):
        in_dim = input_dim if l == 0 else hidden_dim
        key, k1, k2, k3, k4 = jax.random.split(key, 5)
        layers.append(dict(
            w_ih=jax.random.uniform(k1, (4 * hidden_dim, in_dim), jnp.float32, -k, k),
            w_hh=jax.random.uniform(k2, (4 * hidden_dim, hidden_dim), jnp.float32, -k, k),
            b_ih=jax.random.uniform(k3, (4 * hidden_dim,), jnp.float32, -k, k),
            b_hh=jax.random.uniform(k4, (4 * hidden_dim,), jnp.float32, -k, k),
        ))
    key, k5, k6 = jax.random.split(key, 3)
    fc_w = jax.random.uniform(k5, (num_classes, hidden_dim), jnp.float32, -k, k)
    fc_b = jax.random.uniform(k6, (num_classes,), jnp.float32, -k, k)
    return dict(lstm=layers, fc_w=fc_w, fc_b=fc_b, hidden_dim=hidden_dim)


# ----------------------------------------------------------------------------
# Pure-JAX reference (same math, unpadded) for a correctness check.
# ----------------------------------------------------------------------------
def reference_forward(x, raw):
    H = raw["hidden_dim"]
    B = x.shape[0]
    h_seq = jnp.transpose(x, (1, 0, 2))
    for lyr in raw["lstm"]:
        w_ih_t, w_hh_t = lyr["w_ih"].T, lyr["w_hh"].T
        b = (lyr["b_ih"] + lyr["b_hh"])[None, :]
        h = jnp.zeros((B, H), jnp.float32)
        c = jnp.zeros((B, H), jnp.float32)
        outs = []
        for t in range(h_seq.shape[0]):
            gates = h_seq[t] @ w_ih_t + h @ w_hh_t + b
            i_g = jax.nn.sigmoid(gates[:, 0 * H:1 * H])
            f_g = jax.nn.sigmoid(gates[:, 1 * H:2 * H])
            g_g = jnp.tanh(gates[:, 2 * H:3 * H])
            o_g = jax.nn.sigmoid(gates[:, 3 * H:4 * H])
            c = f_g * c + i_g * g_g
            h = o_g * jnp.tanh(c)
            outs.append(h)
        h_seq = jnp.stack(outs, axis=0)
    return h_seq[-1] @ raw["fc_w"].T + raw["fc_b"][None, :]


if __name__ == "__main__":
    # x: (batch, seq_len, input_dim)
    batch, seq_len, input_dim = 2, 8, 16
    hidden_dim, num_layers, num_classes = 32, 2, 4

    key = jax.random.PRNGKey(0)
    key, xk = jax.random.split(key)
    x = jax.random.normal(xk, (batch, seq_len, input_dim), jnp.float32)

    params = init_params(key, input_dim, hidden_dim, num_layers, num_classes)

    out = jax.block_until_ready(lstm_classifier_forward(x, params))
    ref = reference_forward(x, params)
    assert out.shape == (batch, num_classes)
    assert jnp.allclose(out, ref, atol=1e-4, rtol=1e-4), "mismatch vs reference"

    # bf16 path: bf16 MXU operands for the hoisted projections + FC only;
    # recurrence / gate math / state stay f32 (v6e/v7x win, v5e keeps f32 default).
    out_bf16 = jax.block_until_ready(
        lstm_classifier_forward(x, params, matmul_dtype=jnp.bfloat16))
    assert out_bf16.shape == (batch, num_classes)
    assert bool(jnp.all(jnp.isfinite(out_bf16)))
    assert jnp.allclose(out_bf16, ref, atol=1e-1, rtol=1e-1), "bf16 path diverged"

    print("KERNEL_OK")
</pallas_src>

<mosaic_0001>
module attributes {stable_mosaic.version = 11 : i64} {
  func.func @_fused_lstm_classifier_kernel(%arg0: memref<8x2x16xf32, #tpu.memory_space<vmem>>, %arg1: memref<16x512xf32, #tpu.memory_space<vmem>>, %arg2: memref<128x512xf32, #tpu.memory_space<vmem>>, %arg3: memref<1x512xf32, #tpu.memory_space<vmem>>, %arg4: memref<128x512xf32, #tpu.memory_space<vmem>>, %arg5: memref<128x512xf32, #tpu.memory_space<vmem>>, %arg6: memref<1x512xf32, #tpu.memory_space<vmem>>, %arg7: memref<128x4xf32, #tpu.memory_space<vmem>>, %arg8: memref<1x4xf32, #tpu.memory_space<vmem>>, %arg9: memref<2x4xf32, #tpu.memory_space<vmem>>, %arg10: memref<8x2x512xf32, #tpu.memory_space<vmem>>, %arg11: memref<8x2x128xf32, #tpu.memory_space<vmem>>) attributes {dimension_semantics = [], scalar_prefetch = 0 : i64, scratch_operands = 2 : i64, tpu.core_type = #tpu.core_type<tc>} {
    %c0 = arith.constant 0 : index
    %c0_0 = arith.constant 0 : index
    %0 = vector.load %arg1[%c0, %c0_0] : memref<16x512xf32, #tpu.memory_space<vmem>>, vector<16x512xf32>
    %c0_1 = arith.constant 0 : index
    %c0_2 = arith.constant 0 : index
    %1 = vector.load %arg2[%c0_1, %c0_2] : memref<128x512xf32, #tpu.memory_space<vmem>>, vector<128x512xf32>
    %c0_3 = arith.constant 0 : index
    %c0_4 = arith.constant 0 : index
    %2 = vector.load %arg3[%c0_3, %c0_4] : memref<1x512xf32, #tpu.memory_space<vmem>>, vector<1x512xf32>
    %c0_5 = arith.constant 0 : index
    %c0_6 = arith.constant 0 : index
    %c0_7 = arith.constant 0 : index
    %3 = vector.load %arg0[%c0_5, %c0_6, %c0_7] : memref<8x2x16xf32, #tpu.memory_space<vmem>>, vector<8x2x16xf32>
    %4 = vector.shape_cast %3 : vector<8x2x16xf32> to vector<16x16xf32>
    %cst = arith.constant dense<0.000000e+00> : vector<16x512xf32>
    %5 = tpu.matmul %4, %0, %cst {dimension_numbers = #tpu.dot_dimension_numbers<[1], [0], [0], [1], [0, 0, 1, 1], [], []>} : vector<16x16xf32>, vector<16x512xf32>, vector<16x512xf32> -> vector<16x512xf32>
    %6 = vector.broadcast %2 : vector<1x512xf32> to vector<16x512xf32>
    %7 = arith.addf %5, %6 : vector<16x512xf32>
    %8 = vector.shape_cast %7 : vector<16x512xf32> to vector<8x2x512xf32>
    %c0_8 = arith.constant 0 : index
    %c0_9 = arith.constant 0 : index
    %c0_10 = arith.constant 0 : index
    %9 = vector.load %arg10[%c0_8, %c0_9, %c0_10] : memref<8x2x512xf32, #tpu.memory_space<vmem>>, vector<8x2x512xf32>
    tpu.vector_store %arg10[%c0_8, %c0_9, %c0_10], %8 {strides = array<i32>} : memref<8x2x512xf32, #tpu.memory_space<vmem>>, vector<8x2x512xf32>,
    %cst_11 = arith.constant 0.000000e+00 : f32
    %10 = vector.broadcast %cst_11 : f32 to vector<2x128xf32>
    %cst_12 = arith.constant 0.000000e+00 : f32
    %11 = vector.broadcast %cst_12 : f32 to vector<2x128xf32>
    %c0_i32 = arith.constant 0 : i32
    %12 = arith.index_cast %c0_i32 : i32 to index
    %c0_13 = arith.constant 0 : index
    %c0_14 = arith.constant 0 : index
    %13 = vector.load %arg10[%12, %c0_13, %c0_14] : memref<8x2x512xf32, #tpu.memory_space<vmem>>, vector<1x2x512xf32>
    %14 = vector.shape_cast %13 : vector<1x2x512xf32> to vector<2x512xf32>
    %cst_15 = arith.constant dense<0.000000e+00> : vector<2x512xf32>
    %15 = tpu.matmul %10, %1, %cst_15 {dimension_numbers = #tpu.dot_dimension_numbers<[1], [0], [0], [1], [0, 0, 1, 1], [], []>} : vector<2x128xf32>, vector<128x512xf32>, vector<2x512xf32> -> vector<2x512xf32>
    %16 = arith.addf %14, %15 : vector<2x512xf32>
    %17 = vector.extract_strided_slice %16 {offsets = [0, 0], sizes = [2, 128], strides = [1, 1]} : vector<2x512xf32> to vector<2x128xf32>
    %18 = arith.negf %17 : vector<2x128xf32>
    %19 = math.exp %18 : vector<2x128xf32>
    %cst_16 = arith.constant 1.000000e+00 : f32
    %20 = vector.broadcast %cst_16 : f32 to vector<2x128xf32>
    %21 = arith.addf %20, %19 : vector<2x128xf32>
    %22 = arith.divf %20, %21 : vector<2x128xf32>
    %23 = vector.extract_strided_slice %16 {offsets = [0, 128], sizes = [2, 128], strides = [1, 1]} : vector<2x512xf32> to vector<2x128xf32>
    %24 = arith.negf %23 : vector<2x128xf32>
    %25 = math.exp %24 : vector<2x128xf32>
    %cst_17 = arith.constant 1.000000e+00 : f32
    %26 = vector.broadcast %cst_17 : f32 to vector<2x128xf32>
    %27 = arith.addf %26, %25 : vector<2x128xf32>
    %28 = arith.divf %26, %27 : vector<2x128xf32>
    %29 = vector.extract_strided_slice %16 {offsets = [0, 256], sizes = [2, 128], strides = [1, 1]} : vector<2x512xf32> to vector<2x128xf32>
    %30 = math.tanh %29 : vector<2x128xf32>
    %31 = vector.extract_strided_slice %16 {offsets = [0, 384], sizes = [2, 128], strides = [1, 1]} : vector<2x512xf32> to vector<2x128xf32>
    %32 = arith.negf %31 : vector<2x128xf32>
    %33 = math.exp %32 : vector<2x128xf32>
    %cst_18 = arith.constant 1.000000e+00 : f32
    %34 = vector.broadcast %cst_18 : f32 to vector<2x128xf32>
    %35 = arith.addf %34, %33 : vector<2x128xf32>
    %36 = arith.divf %34, %35 : vector<2x128xf32>
    %37 = arith.mulf %28, %11 : vector<2x128xf32>
    %38 = arith.mulf %22, %30 : vector<2x128xf32>
    %39 = arith.addf %37, %38 : vector<2x128xf32>
    %40 = math.tanh %39 : vector<2x128xf32>
    %41 = arith.mulf %36, %40 : vector<2x128xf32>
    %42 = arith.index_cast %c0_i32 : i32 to index
    %c0_19 = arith.constant 0 : index
    %c0_20 = arith.constant 0 : index
    %43 = vector.load %arg11[%42, %c0_19, %c0_20] : memref<8x2x128xf32, #tpu.memory_space<vmem>>, vector<1x2x128xf32>
    %44 = vector.shape_cast %43 : vector<1x2x128xf32> to vector<2x128xf32>
    %45 = vector.shape_cast %41 : vector<2x128xf32> to vector<1x2x128xf32>
    tpu.vector_store %arg11[%42, %c0_19, %c0_20], %45 {strides = array<i32>} : memref<8x2x128xf32, #tpu.memory_space<vmem>>, vector<1x2x128xf32>,
    %c1_i32 = arith.constant 1 : i32
    %46 = arith.index_cast %c1_i32 : i32 to index
    %c0_21 = arith.constant 0 : index
    %c0_22 = arith.constant 0 : index
    %47 = vector.load %arg10[%46, %c0_21, %c0_22] : memref<8x2x512xf32, #tpu.memory_space<vmem>>, vector<1x2x512xf32>
    %48 = vector.shape_cast %47 : vector<1x2x512xf32> to vector<2x512xf32>
    %cst_23 = arith.constant dense<0.000000e+00> : vector<2x512xf32>
    %49 = tpu.matmul %41, %1, %cst_23 {dimension_numbers = #tpu.dot_dimension_numbers<[1], [0], [0], [1], [0, 0, 1, 1], [], []>} : vector<2x128xf32>, vector<128x512xf32>, vector<2x512xf32> -> vector<2x512xf32>
    %50 = arith.addf %48, %49 : vector<2x512xf32>
    %51 = vector.extract_strided_slice %50 {offsets = [0, 0], sizes = [2, 128], strides = [1, 1]} : vector<2x512xf32> to vector<2x128xf32>
    %52 = arith.negf %51 : vector<2x128xf32>
    %53 = math.exp %52 : vector<2x128xf32>
    %cst_24 = arith.constant 1.000000e+00 : f32
    %54 = vector.broadcast %cst_24 : f32 to vector<2x128xf32>
    %55 = arith.addf %54, %53 : vector<2x128xf32>
    %56 = arith.divf %54, %55 : vector<2x128xf32>
    %57 = vector.extract_strided_slice %50 {offsets = [0, 128], sizes = [2, 128], strides = [1, 1]} : vector<2x512xf32> to vector<2x128xf32>
    %58 = arith.negf %57 : vector<2x128xf32>
    %59 = math.exp %58 : vector<2x128xf32>
    %cst_25 = arith.constant 1.000000e+00 : f32
    %60 = vector.broadcast %cst_25 : f32 to vector<2x128xf32>
    %61 = arith.addf %60, %59 : vector<2x128xf32>
    %62 = arith.divf %60, %61 : vector<2x128xf32>
    %63 = vector.extract_strided_slice %50 {offsets = [0, 256], sizes = [2, 128], strides = [1, 1]} : vector<2x512xf32> to vector<2x128xf32>
    %64 = math.tanh %63 : vector<2x128xf32>
    %65 = vector.extract_strided_slice %50 {offsets = [0, 384], sizes = [2, 128], strides = [1, 1]} : vector<2x512xf32> to vector<2x128xf32>
    %66 = arith.negf %65 : vector<2x128xf32>
    %67 = math.exp %66 : vector<2x128xf32>
    %cst_26 = arith.constant 1.000000e+00 : f32
    %68 = vector.broadcast %cst_26 : f32 to vector<2x128xf32>
    %69 = arith.addf %68, %67 : vector<2x128xf32>
    %70 = arith.divf %68, %69 : vector<2x128xf32>
    %71 = arith.mulf %62, %39 : vector<2x128xf32>
    %72 = arith.mulf %56, %64 : vector<2x128xf32>
    %73 = arith.addf %71, %72 : vector<2x128xf32>
    %74 = math.tanh %73 : vector<2x128xf32>
    %75 = arith.mulf %70, %74 : vector<2x128xf32>
    %76 = arith.index_cast %c1_i32 : i32 to index
    %c0_27 = arith.constant 0 : index
    %c0_28 = arith.constant 0 : index
    %77 = vector.load %arg11[%76, %c0_27, %c0_28] : memref<8x2x128xf32, #tpu.memory_space<vmem>>, vector<1x2x128xf32>
    %78 = vector.shape_cast %77 : vector<1x2x128xf32> to vector<2x128xf32>
    %79 = vector.shape_cast %75 : vector<2x128xf32> to vector<1x2x128xf32>
    tpu.vector_store %arg11[%76, %c0_27, %c0_28], %79 {strides = array<i32>} : memref<8x2x128xf32, #tpu.memory_space<vmem>>, vector<1x2x128xf32>,
    %c2_i32 = arith.constant 2 : i32
    %80 = arith.index_cast %c2_i32 : i32 to index
    %c0_29 = arith.constant 0 : index
    %c0_30 = arith.constant 0 : index
    %81 = vector.load %arg10[%80, %c0_29, %c0_30] : memref<8x2x512xf32, #tpu.memory_space<vmem>>, vector<1x2x512xf32>
    %82 = vector.shape_cast %81 : vector<1x2x512xf32> to vector<2x512xf32>
    %cst_31 = arith.constant dense<0.000000e+00> : vector<2x512xf32>
    %83 = tpu.matmul %75, %1, %cst_31 {dimension_numbers = #tpu.dot_dimension_numbers<[1], [0], [0], [1], [0, 0, 1, 1], [], []>} : vector<2x128xf32>, vector<128x512xf32>, vector<2x512xf32> -> vector<2x512xf32>
    %84 = arith.addf %82, %83 : vector<2x512xf32>
    %85 = vector.extract_strided_slice %84 {offsets = [0, 0], sizes = [2, 128], strides = [1, 1]} : vector<2x512xf32> to vector<2x128xf32>
    %86 = arith.negf %85 : vector<2x128xf32>
    %87 = math.exp %86 : vector<2x128xf32>
    %cst_32 = arith.constant 1.000000e+00 : f32
    %88 = vector.broadcast %cst_32 : f32 to vector<2x128xf32>
    %89 = arith.addf %88, %87 : vector<2x128xf32>
    %90 = arith.divf %88, %89 : vector<2x128xf32>
    %91 = vector.extract_strided_slice %84 {offsets = [0, 128], sizes = [2, 128], strides = [1, 1]} : vector<2x512xf32> to vector<2x128xf32>
    %92 = arith.negf %91 : vector<2x128xf32>
    %93 = math.exp %92 : vector<2x128xf32>
    %cst_33 = arith.constant 1.000000e+00 : f32
    %94 = vector.broadcast %cst_33 : f32 to vector<2x128xf32>
    %95 = arith.addf %94, %93 : vector<2x128xf32>
    %96 = arith.divf %94, %95 : vector<2x128xf32>
    %97 = vector.extract_strided_slice %84 {offsets = [0, 256], sizes = [2, 128], strides = [1, 1]} : vector<2x512xf32> to vector<2x128xf32>
    %98 = math.tanh %97 : vector<2x128xf32>
    %99 = vector.extract_strided_slice %84 {offsets = [0, 384], sizes = [2, 128], strides = [1, 1]} : vector<2x512xf32> to vector<2x128xf32>
    %100 = arith.negf %99 : vector<2x128xf32>
    %101 = math.exp %100 : vector<2x128xf32>
    %cst_34 = arith.constant 1.000000e+00 : f32
    %102 = vector.broadcast %cst_34 : f32 to vector<2x128xf32>
    %103 = arith.addf %102, %101 : vector<2x128xf32>
    %104 = arith.divf %102, %103 : vector<2x128xf32>
    %105 = arith.mulf %96, %73 : vector<2x128xf32>
    %106 = arith.mulf %90, %98 : vector<2x128xf32>
    %107 = arith.addf %105, %106 : vector<2x128xf32>
    %108 = math.tanh %107 : vector<2x128xf32>
    %109 = arith.mulf %104, %108 : vector<2x128xf32>
    %110 = arith.index_cast %c2_i32 : i32 to index
    %c0_35 = arith.constant 0 : index
    %c0_36 = arith.constant 0 : index
    %111 = vector.load %arg11[%110, %c0_35, %c0_36] : memref<8x2x128xf32, #tpu.memory_space<vmem>>, vector<1x2x128xf32>
    %112 = vector.shape_cast %111 : vector<1x2x128xf32> to vector<2x128xf32>
    %113 = vector.shape_cast %109 : vector<2x128xf32> to vector<1x2x128xf32>
    tpu.vector_store %arg11[%110, %c0_35, %c0_36], %113 {strides = array<i32>} : memref<8x2x128xf32, #tpu.memory_space<vmem>>, vector<1x2x128xf32>,
    %c3_i32 = arith.constant 3 : i32
    %114 = arith.index_cast %c3_i32 : i32 to index
    %c0_37 = arith.constant 0 : index
    %c0_38 = arith.constant 0 : index
    %115 = vector.load %arg10[%114, %c0_37, %c0_38] : memref<8x2x512xf32, #tpu.memory_space<vmem>>, vector<1x2x512xf32>
    %116 = vector.shape_cast %115 : vector<1x2x512xf32> to vector<2x512xf32>
    %cst_39 = arith.constant dense<0.000000e+00> : vector<2x512xf32>
    %117 = tpu.matmul %109, %1, %cst_39 {dimension_numbers = #tpu.dot_dimension_numbers<[1], [0], [0], [1], [0, 0, 1, 1], [], []>} : vector<2x128xf32>, vector<128x512xf32>, vector<2x512xf32> -> vector<2x512xf32>
    %118 = arith.addf %116, %117 : vector<2x512xf32>
    %119 = vector.extract_strided_slice %118 {offsets = [0, 0], sizes = [2, 128], strides = [1, 1]} : vector<2x512xf32> to vector<2x128xf32>
    %120 = arith.negf %119 : vector<2x128xf32>
    %121 = math.exp %120 : vector<2x128xf32>
    %cst_40 = arith.constant 1.000000e+00 : f32
    %122 = vector.broadcast %cst_40 : f32 to vector<2x128xf32>
    %123 = arith.addf %122, %121 : vector<2x128xf32>
    %124 = arith.divf %122, %123 : vector<2x128xf32>
    %125 = vector.extract_strided_slice %118 {offsets = [0, 128], sizes = [2, 128], strides = [1, 1]} : vector<2x512xf32> to vector<2x128xf32>
    %126 = arith.negf %125 : vector<2x128xf32>
    %127 = math.exp %126 : vector<2x128xf32>
    %cst_41 = arith.constant 1.000000e+00 : f32
    %128 = vector.broadcast %cst_41 : f32 to vector<2x128xf32>
    %129 = arith.addf %128, %127 : vector<2x128xf32>
    %130 = arith.divf %128, %129 : vector<2x128xf32>
    %131 = vector.extract_strided_slice %118 {offsets = [0, 256], sizes = [2, 128], strides = [1, 1]} : vector<2x512xf32> to vector<2x128xf32>
    %132 = math.tanh %131 : vector<2x128xf32>
    %133 = vector.extract_strided_slice %118 {offsets = [0, 384], sizes = [2, 128], strides = [1, 1]} : vector<2x512xf32> to vector<2x128xf32>
    %134 = arith.negf %133 : vector<2x128xf32>
    %135 = math.exp %134 : vector<2x128xf32>
    %cst_42 = arith.constant 1.000000e+00 : f32
    %136 = vector.broadcast %cst_42 : f32 to vector<2x128xf32>
    %137 = arith.addf %136, %135 : vector<2x128xf32>
    %138 = arith.divf %136, %137 : vector<2x128xf32>
    %139 = arith.mulf %130, %107 : vector<2x128xf32>
    %140 = arith.mulf %124, %132 : vector<2x128xf32>
    %141 = arith.addf %139, %140 : vector<2x128xf32>
    %142 = math.tanh %141 : vector<2x128xf32>
    %143 = arith.mulf %138, %142 : vector<2x128xf32>
    %144 = arith.index_cast %c3_i32 : i32 to index
    %c0_43 = arith.constant 0 : index
    %c0_44 = arith.constant 0 : index
    %145 = vector.load %arg11[%144, %c0_43, %c0_44] : memref<8x2x128xf32, #tpu.memory_space<vmem>>, vector<1x2x128xf32>
    %146 = vector.shape_cast %145 : vector<1x2x128xf32> to vector<2x128xf32>
    %147 = vector.shape_cast %143 : vector<2x128xf32> to vector<1x2x128xf32>
    tpu.vector_store %arg11[%144, %c0_43, %c0_44], %147 {strides = array<i32>} : memref<8x2x128xf32, #tpu.memory_space<vmem>>, vector<1x2x128xf32>,
    %c4_i32 = arith.constant 4 : i32
    %148 = arith.index_cast %c4_i32 : i32 to index
    %c0_45 = arith.constant 0 : index
    %c0_46 = arith.constant 0 : index
    %149 = vector.load %arg10[%148, %c0_45, %c0_46] : memref<8x2x512xf32, #tpu.memory_space<vmem>>, vector<1x2x512xf32>
    %150 = vector.shape_cast %149 : vector<1x2x512xf32> to vector<2x512xf32>
    %cst_47 = arith.constant dense<0.000000e+00> : vector<2x512xf32>
    %151 = tpu.matmul %143, %1, %cst_47 {dimension_numbers = #tpu.dot_dimension_numbers<[1], [0], [0], [1], [0, 0, 1, 1], [], []>} : vector<2x128xf32>, vector<128x512xf32>, vector<2x512xf32> -> vector<2x512xf32>
    %152 = arith.addf %150, %151 : vector<2x512xf32>
    %153 = vector.extract_strided_slice %152 {offsets = [0, 0], sizes = [2, 128], strides = [1, 1]} : vector<2x512xf32> to vector<2x128xf32>
    %154 = arith.negf %153 : vector<2x128xf32>
    %155 = math.exp %154 : vector<2x128xf32>
    %cst_48 = arith.constant 1.000000e+00 : f32
    %156 = vector.broadcast %cst_48 : f32 to vector<2x128xf32>
    %157 = arith.addf %156, %155 : vector<2x128xf32>
    %158 = arith.divf %156, %157 : vector<2x128xf32>
    %159 = vector.extract_strided_slice %152 {offsets = [0, 128], sizes = [2, 128], strides = [1, 1]} : vector<2x512xf32> to vector<2x128xf32>
    %160 = arith.negf %159 : vector<2x128xf32>
    %161 = math.exp %160 : vector<2x128xf32>
    %cst_49 = arith.constant 1.000000e+00 : f32
    %162 = vector.broadcast %cst_49 : f32 to vector<2x128xf32>
    %163 = arith.addf %162, %161 : vector<2x128xf32>
    %164 = arith.divf %162, %163 : vector<2x128xf32>
    %165 = vector.extract_strided_slice %152 {offsets = [0, 256], sizes = [2, 128], strides = [1, 1]} : vector<2x512xf32> to vector<2x128xf32>
    %166 = math.tanh %165 : vector<2x128xf32>
    %167 = vector.extract_strided_slice %152 {offsets = [0, 384], sizes = [2, 128], strides = [1, 1]} : vector<2x512xf32> to vector<2x128xf32>
    %168 = arith.negf %167 : vector<2x128xf32>
    %169 = math.exp %168 : vector<2x128xf32>
    %cst_50 = arith.constant 1.000000e+00 : f32
    %170 = vector.broadcast %cst_50 : f32 to vector<2x128xf32>
    %171 = arith.addf %170, %169 : vector<2x128xf32>
    %172 = arith.divf %170, %171 : vector<2x128xf32>
    %173 = arith.mulf %164, %141 : vector<2x128xf32>
    %174 = arith.mulf %158, %166 : vector<2x128xf32>
    %175 = arith.addf %173, %174 : vector<2x128xf32>
    %176 = math.tanh %175 : vector<2x128xf32>
    %177 = arith.mulf %172, %176 : vector<2x128xf32>
    %178 = arith.index_cast %c4_i32 : i32 to index
    %c0_51 = arith.constant 0 : index
    %c0_52 = arith.constant 0 : index
    %179 = vector.load %arg11[%178, %c0_51, %c0_52] : memref<8x2x128xf32, #tpu.memory_space<vmem>>, vector<1x2x128xf32>
    %180 = vector.shape_cast %179 : vector<1x2x128xf32> to vector<2x128xf32>
    %181 = vector.shape_cast %177 : vector<2x128xf32> to vector<1x2x128xf32>
    tpu.vector_store %arg11[%178, %c0_51, %c0_52], %181 {strides = array<i32>} : memref<8x2x128xf32, #tpu.memory_space<vmem>>, vector<1x2x128xf32>,
    %c5_i32 = arith.constant 5 : i32
    %182 = arith.index_cast %c5_i32 : i32 to index
    %c0_53 = arith.constant 0 : index
    %c0_54 = arith.constant 0 : index
    %183 = vector.load %arg10[%182, %c0_53, %c0_54] : memref<8x2x512xf32, #tpu.memory_space<vmem>>, vector<1x2x512xf32>
    %184 = vector.shape_cast %183 : vector<1x2x512xf32> to vector<2x512xf32>
    %cst_55 = arith.constant dense<0.000000e+00> : vector<2x512xf32>
    %185 = tpu.matmul %177, %1, %cst_55 {dimension_numbers = #tpu.dot_dimension_numbers<[1], [0], [0], [1], [0, 0, 1, 1], [], []>} : vector<2x128xf32>, vector<128x512xf32>, vector<2x512xf32> -> vector<2x512xf32>
    %186 = arith.addf %184, %185 : vector<2x512xf32>
    %187 = vector.extract_strided_slice %186 {offsets = [0, 0], sizes = [2, 128], strides = [1, 1]} : vector<2x512xf32> to vector<2x128xf32>
    %188 = arith.negf %187 : vector<2x128xf32>
    %189 = math.exp %188 : vector<2x128xf32>
    %cst_56 = arith.constant 1.000000e+00 : f32
    %190 = vector.broadcast %cst_56 : f32 to vector<2x128xf32>
    %191 = arith.addf %190, %189 : vector<2x128xf32>
    %192 = arith.divf %190, %191 : vector<2x128xf32>
    %193 = vector.extract_strided_slice %186 {offsets = [0, 128], sizes = [2, 128], strides = [1, 1]} : vector<2x512xf32> to vector<2x128xf32>
    %194 = arith.negf %193 : vector<2x128xf32>
    %195 = math.exp %194 : vector<2x128xf32>
    %cst_57 = arith.constant 1.000000e+00 : f32
    %196 = vector.broadcast %cst_57 : f32 to vector<2x128xf32>
    %197 = arith.addf %196, %195 : vector<2x128xf32>
    %198 = arith.divf %196, %197 : vector<2x128xf32>
    %199 = vector.extract_strided_slice %186 {offsets = [0, 256], sizes = [2, 128], strides = [1, 1]} : vector<2x512xf32> to vector<2x128xf32>
    %200 = math.tanh %199 : vector<2x128xf32>
    %201 = vector.extract_strided_slice %186 {offsets = [0, 384], sizes = [2, 128], strides = [1, 1]} : vector<2x512xf32> to vector<2x128xf32>
    %202 = arith.negf %201 : vector<2x128xf32>
    %203 = math.exp %202 : vector<2x128xf32>
    %cst_58 = arith.constant 1.000000e+00 : f32
    %204 = vector.broadcast %cst_58 : f32 to vector<2x128xf32>
    %205 = arith.addf %204, %203 : vector<2x128xf32>
    %206 = arith.divf %204, %205 : vector<2x128xf32>
    %207 = arith.mulf %198, %175 : vector<2x128xf32>
    %208 = arith.mulf %192, %200 : vector<2x128xf32>
    %209 = arith.addf %207, %208 : vector<2x128xf32>
    %210 = math.tanh %209 : vector<2x128xf32>
    %211 = arith.mulf %206, %210 : vector<2x128xf32>
    %212 = arith.index_cast %c5_i32 : i32 to index
    %c0_59 = arith.constant 0 : index
    %c0_60 = arith.constant 0 : index
    %213 = vector.load %arg11[%212, %c0_59, %c0_60] : memref<8x2x128xf32, #tpu.memory_space<vmem>>, vector<1x2x128xf32>
    %214 = vector.shape_cast %213 : vector<1x2x128xf32> to vector<2x128xf32>
    %215 = vector.shape_cast %211 : vector<2x128xf32> to vector<1x2x128xf32>
    tpu.vector_store %arg11[%212, %c0_59, %c0_60], %215 {strides = array<i32>} : memref<8x2x128xf32, #tpu.memory_space<vmem>>, vector<1x2x128xf32>,
    %c6_i32 = arith.constant 6 : i32
    %216 = arith.index_cast %c6_i32 : i32 to index
    %c0_61 = arith.constant 0 : index
    %c0_62 = arith.constant 0 : index
    %217 = vector.load %arg10[%216, %c0_61, %c0_62] : memref<8x2x512xf32, #tpu.memory_space<vmem>>, vector<1x2x512xf32>
    %218 = vector.shape_cast %217 : vector<1x2x512xf32> to vector<2x512xf32>
    %cst_63 = arith.constant dense<0.000000e+00> : vector<2x512xf32>
    %219 = tpu.matmul %211, %1, %cst_63 {dimension_numbers = #tpu.dot_dimension_numbers<[1], [0], [0], [1], [0, 0, 1, 1], [], []>} : vector<2x128xf32>, vector<128x512xf32>, vector<2x512xf32> -> vector<2x512xf32>
    %220 = arith.addf %218, %219 : vector<2x512xf32>
    %221 = vector.extract_strided_slice %220 {offsets = [0, 0], sizes = [2, 128], strides = [1, 1]} : vector<2x512xf32> to vector<2x128xf32>
    %222 = arith.negf %221 : vector<2x128xf32>
    %223 = math.exp %222 : vector<2x128xf32>
    %cst_64 = arith.constant 1.000000e+00 : f32
    %224 = vector.broadcast %cst_64 : f32 to vector<2x128xf32>
    %225 = arith.addf %224, %223 : vector<2x128xf32>
    %226 = arith.divf %224, %225 : vector<2x128xf32>
    %227 = vector.extract_strided_slice %220 {offsets = [0, 128], sizes = [2, 128], strides = [1, 1]} : vector<2x512xf32> to vector<2x128xf32>
    %228 = arith.negf %227 : vector<2x128xf32>
    %229 = math.exp %228 : vector<2x128xf32>
    %cst_65 = arith.constant 1.000000e+00 : f32
    %230 = vector.broadcast %cst_65 : f32 to vector<2x128xf32>
    %231 = arith.addf %230, %229 : vector<2x128xf32>
    %232 = arith.divf %230, %231 : vector<2x128xf32>
    %233 = vector.extract_strided_slice %220 {offsets = [0, 256], sizes = [2, 128], strides = [1, 1]} : vector<2x512xf32> to vector<2x128xf32>
    %234 = math.tanh %233 : vector<2x128xf32>
    %235 = vector.extract_strided_slice %220 {offsets = [0, 384], sizes = [2, 128], strides = [1, 1]} : vector<2x512xf32> to vector<2x128xf32>
    %236 = arith.negf %235 : vector<2x128xf32>
    %237 = math.exp %236 : vector<2x128xf32>
    %cst_66 = arith.constant 1.000000e+00 : f32
    %238 = vector.broadcast %cst_66 : f32 to vector<2x128xf32>
    %239 = arith.addf %238, %237 : vector<2x128xf32>
    %240 = arith.divf %238, %239 : vector<2x128xf32>
    %241 = arith.mulf %232, %209 : vector<2x128xf32>
    %242 = arith.mulf %226, %234 : vector<2x128xf32>
    %243 = arith.addf %241, %242 : vector<2x128xf32>
    %244 = math.tanh %243 : vector<2x128xf32>
    %245 = arith.mulf %240, %244 : vector<2x128xf32>
    %246 = arith.index_cast %c6_i32 : i32 to index
    %c0_67 = arith.constant 0 : index
    %c0_68 = arith.constant 0 : index
    %247 = vector.load %arg11[%246, %c0_67, %c0_68] : memref<8x2x128xf32, #tpu.memory_space<vmem>>, vector<1x2x128xf32>
    %248 = vector.shape_cast %247 : vector<1x2x128xf32> to vector<2x128xf32>
    %249 = vector.shape_cast %245 : vector<2x128xf32> to vector<1x2x128xf32>
    tpu.vector_store %arg11[%246, %c0_67, %c0_68], %249 {strides = array<i32>} : memref<8x2x128xf32, #tpu.memory_space<vmem>>, vector<1x2x128xf32>,
    %c7_i32 = arith.constant 7 : i32
    %250 = arith.index_cast %c7_i32 : i32 to index
    %c0_69 = arith.constant 0 : index
    %c0_70 = arith.constant 0 : index
    %251 = vector.load %arg10[%250, %c0_69, %c0_70] : memref<8x2x512xf32, #tpu.memory_space<vmem>>, vector<1x2x512xf32>
    %252 = vector.shape_cast %251 : vector<1x2x512xf32> to vector<2x512xf32>
    %cst_71 = arith.constant dense<0.000000e+00> : vector<2x512xf32>
    %253 = tpu.matmul %245, %1, %cst_71 {dimension_numbers = #tpu.dot_dimension_numbers<[1], [0], [0], [1], [0, 0, 1, 1], [], []>} : vector<2x128xf32>, vector<128x512xf32>, vector<2x512xf32> -> vector<2x512xf32>
    %254 = arith.addf %252, %253 : vector<2x512xf32>
    %255 = vector.extract_strided_slice %254 {offsets = [0, 0], sizes = [2, 128], strides = [1, 1]} : vector<2x512xf32> to vector<2x128xf32>
    %256 = arith.negf %255 : vector<2x128xf32>
    %257 = math.exp %256 : vector<2x128xf32>
    %cst_72 = arith.constant 1.000000e+00 : f32
    %258 = vector.broadcast %cst_72 : f32 to vector<2x128xf32>
    %259 = arith.addf %258, %257 : vector<2x128xf32>
    %260 = arith.divf %258, %259 : vector<2x128xf32>
    %261 = vector.extract_strided_slice %254 {offsets = [0, 128], sizes = [2, 128], strides = [1, 1]} : vector<2x512xf32> to vector<2x128xf32>
    %262 = arith.negf %261 : vector<2x128xf32>
    %263 = math.exp %262 : vector<2x128xf32>
    %cst_73 = arith.constant 1.000000e+00 : f32
    %264 = vector.broadcast %cst_73 : f32 to vector<2x128xf32>
    %265 = arith.addf %264, %263 : vector<2x128xf32>
    %266 = arith.divf %264, %265 : vector<2x128xf32>
    %267 = vector.extract_strided_slice %254 {offsets = [0, 256], sizes = [2, 128], strides = [1, 1]} : vector<2x512xf32> to vector<2x128xf32>
    %268 = math.tanh %267 : vector<2x128xf32>
    %269 = vector.extract_strided_slice %254 {offsets = [0, 384], sizes = [2, 128], strides = [1, 1]} : vector<2x512xf32> to vector<2x128xf32>
    %270 = arith.negf %269 : vector<2x128xf32>
    %271 = math.exp %270 : vector<2x128xf32>
    %cst_74 = arith.constant 1.000000e+00 : f32
    %272 = vector.broadcast %cst_74 : f32 to vector<2x128xf32>
    %273 = arith.addf %272, %271 : vector<2x128xf32>
    %274 = arith.divf %272, %273 : vector<2x128xf32>
    %275 = arith.mulf %266, %243 : vector<2x128xf32>
    %276 = arith.mulf %260, %268 : vector<2x128xf32>
    %277 = arith.addf %275, %276 : vector<2x128xf32>
    %278 = math.tanh %277 : vector<2x128xf32>
    %279 = arith.mulf %274, %278 : vector<2x128xf32>
    %280 = arith.index_cast %c7_i32 : i32 to index
    %c0_75 = arith.constant 0 : index
    %c0_76 = arith.constant 0 : index
    %281 = vector.load %arg11[%280, %c0_75, %c0_76] : memref<8x2x128xf32, #tpu.memory_space<vmem>>, vector<1x2x128xf32>
    %282 = vector.shape_cast %281 : vector<1x2x128xf32> to vector<2x128xf32>
    %283 = vector.shape_cast %279 : vector<2x128xf32> to vector<1x2x128xf32>
    tpu.vector_store %arg11[%280, %c0_75, %c0_76], %283 {strides = array<i32>} : memref<8x2x128xf32, #tpu.memory_space<vmem>>, vector<1x2x128xf32>,
    %c8_i32 = arith.constant 8 : i32
    %c0_77 = arith.constant 0 : index
    %c0_78 = arith.constant 0 : index
    %284 = vector.load %arg4[%c0_77, %c0_78] : memref<128x512xf32, #tpu.memory_space<vmem>>, vector<128x512xf32>
    %c0_79 = arith.constant 0 : index
    %c0_80 = arith.constant 0 : index
    %285 = vector.load %arg5[%c0_79, %c0_80] : memref<128x512xf32, #tpu.memory_space<vmem>>, vector<128x512xf32>
    %c0_81 = arith.constant 0 : index
    %c0_82 = arith.constant 0 : index
    %286 = vector.load %arg6[%c0_81, %c0_82] : memref<1x512xf32, #tpu.memory_space<vmem>>, vector<1x512xf32>
    %c0_83 = arith.constant 0 : index
    %c0_84 = arith.constant 0 : index
    %c0_85 = arith.constant 0 : index
    %287 = vector.load %arg11[%c0_83, %c0_84, %c0_85] : memref<8x2x128xf32, #tpu.memory_space<vmem>>, vector<8x2x128xf32>
    %288 = vector.shape_cast %287 : vector<8x2x128xf32> to vector<16x128xf32>
    %cst_86 = arith.constant dense<0.000000e+00> : vector<16x512xf32>
    %289 = tpu.matmul %288, %284, %cst_86 {dimension_numbers = #tpu.dot_dimension_numbers<[1], [0], [0], [1], [0, 0, 1, 1], [], []>} : vector<16x128xf32>, vector<128x512xf32>, vector<16x512xf32> -> vector<16x512xf32>
    %290 = vector.broadcast %286 : vector<1x512xf32> to vector<16x512xf32>
    %291 = arith.addf %289, %290 : vector<16x512xf32>
    %292 = vector.shape_cast %291 : vector<16x512xf32> to vector<8x2x512xf32>
    %c0_87 = arith.constant 0 : index
    %c0_88 = arith.constant 0 : index
    %c0_89 = arith.constant 0 : index
    %293 = vector.load %arg10[%c0_87, %c0_88, %c0_89] : memref<8x2x512xf32, #tpu.memory_space<vmem>>, vector<8x2x512xf32>
    tpu.vector_store %arg10[%c0_87, %c0_88, %c0_89], %292 {strides = array<i32>} : memref<8x2x512xf32, #tpu.memory_space<vmem>>, vector<8x2x512xf32>,
    %cst_90 = arith.constant 0.000000e+00 : f32
    %294 = vector.broadcast %cst_90 : f32 to vector<2x128xf32>
    %cst_91 = arith.constant 0.000000e+00 : f32
    %295 = vector.broadcast %cst_91 : f32 to vector<2x128xf32>
    %c0_i32_92 = arith.constant 0 : i32
    %296 = arith.index_cast %c0_i32_92 : i32 to index
    %c0_93 = arith.constant 0 : index
    %c0_94 = arith.constant 0 : index
    %297 = vector.load %arg10[%296, %c0_93, %c0_94] : memref<8x2x512xf32, #tpu.memory_space<vmem>>, vector<1x2x512xf32>
    %298 = vector.shape_cast %297 : vector<1x2x512xf32> to vector<2x512xf32>
    %cst_95 = arith.constant dense<0.000000e+00> : vector<2x512xf32>
    %299 = tpu.matmul %294, %285, %cst_95 {dimension_numbers = #tpu.dot_dimension_numbers<[1], [0], [0], [1], [0, 0, 1, 1], [], []>} : vector<2x128xf32>, vector<128x512xf32>, vector<2x512xf32> -> vector<2x512xf32>
    %300 = arith.addf %298, %299 : vector<2x512xf32>
    %301 = vector.extract_strided_slice %300 {offsets = [0, 0], sizes = [2, 128], strides = [1, 1]} : vector<2x512xf32> to vector<2x128xf32>
    %302 = arith.negf %301 : vector<2x128xf32>
    %303 = math.exp %302 : vector<2x128xf32>
    %cst_96 = arith.constant 1.000000e+00 : f32
    %304 = vector.broadcast %cst_96 : f32 to vector<2x128xf32>
    %305 = arith.addf %304, %303 : vector<2x128xf32>
    %306 = arith.divf %304, %305 : vector<2x128xf32>
    %307 = vector.extract_strided_slice %300 {offsets = [0, 128], sizes = [2, 128], strides = [1, 1]} : vector<2x512xf32> to vector<2x128xf32>
    %308 = arith.negf %307 : vector<2x128xf32>
    %309 = math.exp %308 : vector<2x128xf32>
    %cst_97 = arith.constant 1.000000e+00 : f32
    %310 = vector.broadcast %cst_97 : f32 to vector<2x128xf32>
    %311 = arith.addf %310, %309 : vector<2x128xf32>
    %312 = arith.divf %310, %311 : vector<2x128xf32>
    %313 = vector.extract_strided_slice %300 {offsets = [0, 256], sizes = [2, 128], strides = [1, 1]} : vector<2x512xf32> to vector<2x128xf32>
    %314 = math.tanh %313 : vector<2x128xf32>
    %315 = vector.extract_strided_slice %300 {offsets = [0, 384], sizes = [2, 128], strides = [1, 1]} : vector<2x512xf32> to vector<2x128xf32>
    %316 = arith.negf %315 : vector<2x128xf32>
    %317 = math.exp %316 : vector<2x128xf32>
    %cst_98 = arith.constant 1.000000e+00 : f32
    %318 = vector.broadcast %cst_98 : f32 to vector<2x128xf32>
    %319 = arith.addf %318, %317 : vector<2x128xf32>
    %320 = arith.divf %318, %319 : vector<2x128xf32>
    %321 = arith.mulf %312, %295 : vector<2x128xf32>
    %322 = arith.mulf %306, %314 : vector<2x128xf32>
    %323 = arith.addf %321, %322 : vector<2x128xf32>
    %324 = math.tanh %323 : vector<2x128xf32>
    %325 = arith.mulf %320, %324 : vector<2x128xf32>
    %c1_i32_99 = arith.constant 1 : i32
    %326 = arith.index_cast %c1_i32_99 : i32 to index
    %c0_100 = arith.constant 0 : index
    %c0_101 = arith.constant 0 : index
    %327 = vector.load %arg10[%326, %c0_100, %c0_101] : memref<8x2x512xf32, #tpu.memory_space<vmem>>, vector<1x2x512xf32>
    %328 = vector.shape_cast %327 : vector<1x2x512xf32> to vector<2x512xf32>
    %cst_102 = arith.constant dense<0.000000e+00> : vector<2x512xf32>
    %329 = tpu.matmul %325, %285, %cst_102 {dimension_numbers = #tpu.dot_dimension_numbers<[1], [0], [0], [1], [0, 0, 1, 1], [], []>} : vector<2x128xf32>, vector<128x512xf32>, vector<2x512xf32> -> vector<2x512xf32>
    %330 = arith.addf %328, %329 : vector<2x512xf32>
    %331 = vector.extract_strided_slice %330 {offsets = [0, 0], sizes = [2, 128], strides = [1, 1]} : vector<2x512xf32> to vector<2x128xf32>
    %332 = arith.negf %331 : vector<2x128xf32>
    %333 = math.exp %332 : vector<2x128xf32>
    %cst_103 = arith.constant 1.000000e+00 : f32
    %334 = vector.broadcast %cst_103 : f32 to vector<2x128xf32>
    %335 = arith.addf %334, %333 : vector<2x128xf32>
    %336 = arith.divf %334, %335 : vector<2x128xf32>
    %337 = vector.extract_strided_slice %330 {offsets = [0, 128], sizes = [2, 128], strides = [1, 1]} : vector<2x512xf32> to vector<2x128xf32>
    %338 = arith.negf %337 : vector<2x128xf32>
    %339 = math.exp %338 : vector<2x128xf32>
    %cst_104 = arith.constant 1.000000e+00 : f32
    %340 = vector.broadcast %cst_104 : f32 to vector<2x128xf32>
    %341 = arith.addf %340, %339 : vector<2x128xf32>
    %342 = arith.divf %340, %341 : vector<2x128xf32>
    %343 = vector.extract_strided_slice %330 {offsets = [0, 256], sizes = [2, 128], strides = [1, 1]} : vector<2x512xf32> to vector<2x128xf32>
    %344 = math.tanh %343 : vector<2x128xf32>
    %345 = vector.extract_strided_slice %330 {offsets = [0, 384], sizes = [2, 128], strides = [1, 1]} : vector<2x512xf32> to vector<2x128xf32>
    %346 = arith.negf %345 : vector<2x128xf32>
    %347 = math.exp %346 : vector<2x128xf32>
    %cst_105 = arith.constant 1.000000e+00 : f32
    %348 = vector.broadcast %cst_105 : f32 to vector<2x128xf32>
    %349 = arith.addf %348, %347 : vector<2x128xf32>
    %350 = arith.divf %348, %349 : vector<2x128xf32>
    %351 = arith.mulf %342, %323 : vector<2x128xf32>
    %352 = arith.mulf %336, %344 : vector<2x128xf32>
    %353 = arith.addf %351, %352 : vector<2x128xf32>
    %354 = math.tanh %353 : vector<2x128xf32>
    %355 = arith.mulf %350, %354 : vector<2x128xf32>
    %c2_i32_106 = arith.constant 2 : i32
    %356 = arith.index_cast %c2_i32_106 : i32 to index
    %c0_107 = arith.constant 0 : index
    %c0_108 = arith.constant 0 : index
    %357 = vector.load %arg10[%356, %c0_107, %c0_108] : memref<8x2x512xf32, #tpu.memory_space<vmem>>, vector<1x2x512xf32>
    %358 = vector.shape_cast %357 : vector<1x2x512xf32> to vector<2x512xf32>
    %cst_109 = arith.constant dense<0.000000e+00> : vector<2x512xf32>
    %359 = tpu.matmul %355, %285, %cst_109 {dimension_numbers = #tpu.dot_dimension_numbers<[1], [0], [0], [1], [0, 0, 1, 1], [], []>} : vector<2x128xf32>, vector<128x512xf32>, vector<2x512xf32> -> vector<2x512xf32>
    %360 = arith.addf %358, %359 : vector<2x512xf32>
    %361 = vector.extract_strided_slice %360 {offsets = [0, 0], sizes = [2, 128], strides = [1, 1]} : vector<2x512xf32> to vector<2x128xf32>
    %362 = arith.negf %361 : vector<2x128xf32>
    %363 = math.exp %362 : vector<2x128xf32>
    %cst_110 = arith.constant 1.000000e+00 : f32
    %364 = vector.broadcast %cst_110 : f32 to vector<2x128xf32>
    %365 = arith.addf %364, %363 : vector<2x128xf32>
    %366 = arith.divf %364, %365 : vector<2x128xf32>
    %367 = vector.extract_strided_slice %360 {offsets = [0, 128], sizes = [2, 128], strides = [1, 1]} : vector<2x512xf32> to vector<2x128xf32>
    %368 = arith.negf %367 : vector<2x128xf32>
    %369 = math.exp %368 : vector<2x128xf32>
    %cst_111 = arith.constant 1.000000e+00 : f32
    %370 = vector.broadcast %cst_111 : f32 to vector<2x128xf32>
    %371 = arith.addf %370, %369 : vector<2x128xf32>
    %372 = arith.divf %370, %371 : vector<2x128xf32>
    %373 = vector.extract_strided_slice %360 {offsets = [0, 256], sizes = [2, 128], strides = [1, 1]} : vector<2x512xf32> to vector<2x128xf32>
    %374 = math.tanh %373 : vector<2x128xf32>
    %375 = vector.extract_strided_slice %360 {offsets = [0, 384], sizes = [2, 128], strides = [1, 1]} : vector<2x512xf32> to vector<2x128xf32>
    %376 = arith.negf %375 : vector<2x128xf32>
    %377 = math.exp %376 : vector<2x128xf32>
    %cst_112 = arith.constant 1.000000e+00 : f32
    %378 = vector.broadcast %cst_112 : f32 to vector<2x128xf32>
    %379 = arith.addf %378, %377 : vector<2x128xf32>
    %380 = arith.divf %378, %379 : vector<2x128xf32>
    %381 = arith.mulf %372, %353 : vector<2x128xf32>
    %382 = arith.mulf %366, %374 : vector<2x128xf32>
    %383 = arith.addf %381, %382 : vector<2x128xf32>
    %384 = math.tanh %383 : vector<2x128xf32>
    %385 = arith.mulf %380, %384 : vector<2x128xf32>
    %c3_i32_113 = arith.constant 3 : i32
    %386 = arith.index_cast %c3_i32_113 : i32 to index
    %c0_114 = arith.constant 0 : index
    %c0_115 = arith.constant 0 : index
    %387 = vector.load %arg10[%386, %c0_114, %c0_115] : memref<8x2x512xf32, #tpu.memory_space<vmem>>, vector<1x2x512xf32>
    %388 = vector.shape_cast %387 : vector<1x2x512xf32> to vector<2x512xf32>
    %cst_116 = arith.constant dense<0.000000e+00> : vector<2x512xf32>
    %389 = tpu.matmul %385, %285, %cst_116 {dimension_numbers = #tpu.dot_dimension_numbers<[1], [0], [0], [1], [0, 0, 1, 1], [], []>} : vector<2x128xf32>, vector<128x512xf32>, vector<2x512xf32> -> vector<2x512xf32>
    %390 = arith.addf %388, %389 : vector<2x512xf32>
    %391 = vector.extract_strided_slice %390 {offsets = [0, 0], sizes = [2, 128], strides = [1, 1]} : vector<2x512xf32> to vector<2x128xf32>
    %392 = arith.negf %391 : vector<2x128xf32>
    %393 = math.exp %392 : vector<2x128xf32>
    %cst_117 = arith.constant 1.000000e+00 : f32
    %394 = vector.broadcast %cst_117 : f32 to vector<2x128xf32>
    %395 = arith.addf %394, %393 : vector<2x128xf32>
    %396 = arith.divf %394, %395 : vector<2x128xf32>
    %397 = vector.extract_strided_slice %390 {offsets = [0, 128], sizes = [2, 128], strides = [1, 1]} : vector<2x512xf32> to vector<2x128xf32>
    %398 = arith.negf %397 : vector<2x128xf32>
    %399 = math.exp %398 : vector<2x128xf32>
    %cst_118 = arith.constant 1.000000e+00 : f32
    %400 = vector.broadcast %cst_118 : f32 to vector<2x128xf32>
    %401 = arith.addf %400, %399 : vector<2x128xf32>
    %402 = arith.divf %400, %401 : vector<2x128xf32>
    %403 = vector.extract_strided_slice %390 {offsets = [0, 256], sizes = [2, 128], strides = [1, 1]} : vector<2x512xf32> to vector<2x128xf32>
    %404 = math.tanh %403 : vector<2x128xf32>
    %405 = vector.extract_strided_slice %390 {offsets = [0, 384], sizes = [2, 128], strides = [1, 1]} : vector<2x512xf32> to vector<2x128xf32>
    %406 = arith.negf %405 : vector<2x128xf32>
    %407 = math.exp %406 : vector<2x128xf32>
    %cst_119 = arith.constant 1.000000e+00 : f32
    %408 = vector.broadcast %cst_119 : f32 to vector<2x128xf32>
    %409 = arith.addf %408, %407 : vector<2x128xf32>
    %410 = arith.divf %408, %409 : vector<2x128xf32>
    %411 = arith.mulf %402, %383 : vector<2x128xf32>
    %412 = arith.mulf %396, %404 : vector<2x128xf32>
    %413 = arith.addf %411, %412 : vector<2x128xf32>
    %414 = math.tanh %413 : vector<2x128xf32>
    %415 = arith.mulf %410, %414 : vector<2x128xf32>
    %c4_i32_120 = arith.constant 4 : i32
    %416 = arith.index_cast %c4_i32_120 : i32 to index
    %c0_121 = arith.constant 0 : index
    %c0_122 = arith.constant 0 : index
    %417 = vector.load %arg10[%416, %c0_121, %c0_122] : memref<8x2x512xf32, #tpu.memory_space<vmem>>, vector<1x2x512xf32>
    %418 = vector.shape_cast %417 : vector<1x2x512xf32> to vector<2x512xf32>
    %cst_123 = arith.constant dense<0.000000e+00> : vector<2x512xf32>
    %419 = tpu.matmul %415, %285, %cst_123 {dimension_numbers = #tpu.dot_dimension_numbers<[1], [0], [0], [1], [0, 0, 1, 1], [], []>} : vector<2x128xf32>, vector<128x512xf32>, vector<2x512xf32> -> vector<2x512xf32>
    %420 = arith.addf %418, %419 : vector<2x512xf32>
    %421 = vector.extract_strided_slice %420 {offsets = [0, 0], sizes = [2, 128], strides = [1, 1]} : vector<2x512xf32> to vector<2x128xf32>
    %422 = arith.negf %421 : vector<2x128xf32>
    %423 = math.exp %422 : vector<2x128xf32>
    %cst_124 = arith.constant 1.000000e+00 : f32
    %424 = vector.broadcast %cst_124 : f32 to vector<2x128xf32>
    %425 = arith.addf %424, %423 : vector<2x128xf32>
    %426 = arith.divf %424, %425 : vector<2x128xf32>
    %427 = vector.extract_strided_slice %420 {offsets = [0, 128], sizes = [2, 128], strides = [1, 1]} : vector<2x512xf32> to vector<2x128xf32>
    %428 = arith.negf %427 : vector<2x128xf32>
    %429 = math.exp %428 : vector<2x128xf32>
    %cst_125 = arith.constant 1.000000e+00 : f32
    %430 = vector.broadcast %cst_125 : f32 to vector<2x128xf32>
    %431 = arith.addf %430, %429 : vector<2x128xf32>
    %432 = arith.divf %430, %431 : vector<2x128xf32>
    %433 = vector.extract_strided_slice %420 {offsets = [0, 256], sizes = [2, 128], strides = [1, 1]} : vector<2x512xf32> to vector<2x128xf32>
    %434 = math.tanh %433 : vector<2x128xf32>
    %435 = vector.extract_strided_slice %420 {offsets = [0, 384], sizes = [2, 128], strides = [1, 1]} : vector<2x512xf32> to vector<2x128xf32>
    %436 = arith.negf %435 : vector<2x128xf32>
    %437 = math.exp %436 : vector<2x128xf32>
    %cst_126 = arith.constant 1.000000e+00 : f32
    %438 = vector.broadcast %cst_126 : f32 to vector<2x128xf32>
    %439 = arith.addf %438, %437 : vector<2x128xf32>
    %440 = arith.divf %438, %439 : vector<2x128xf32>
    %441 = arith.mulf %432, %413 : vector<2x128xf32>
    %442 = arith.mulf %426, %434 : vector<2x128xf32>
    %443 = arith.addf %441, %442 : vector<2x128xf32>
    %444 = math.tanh %443 : vector<2x128xf32>
    %445 = arith.mulf %440, %444 : vector<2x128xf32>
    %c5_i32_127 = arith.constant 5 : i32
    %446 = arith.index_cast %c5_i32_127 : i32 to index
    %c0_128 = arith.constant 0 : index
    %c0_129 = arith.constant 0 : index
    %447 = vector.load %arg10[%446, %c0_128, %c0_129] : memref<8x2x512xf32, #tpu.memory_space<vmem>>, vector<1x2x512xf32>
    %448 = vector.shape_cast %447 : vector<1x2x512xf32> to vector<2x512xf32>
    %cst_130 = arith.constant dense<0.000000e+00> : vector<2x512xf32>
    %449 = tpu.matmul %445, %285, %cst_130 {dimension_numbers = #tpu.dot_dimension_numbers<[1], [0], [0], [1], [0, 0, 1, 1], [], []>} : vector<2x128xf32>, vector<128x512xf32>, vector<2x512xf32> -> vector<2x512xf32>
    %450 = arith.addf %448, %449 : vector<2x512xf32>
    %451 = vector.extract_strided_slice %450 {offsets = [0, 0], sizes = [2, 128], strides = [1, 1]} : vector<2x512xf32> to vector<2x128xf32>
    %452 = arith.negf %451 : vector<2x128xf32>
    %453 = math.exp %452 : vector<2x128xf32>
    %cst_131 = arith.constant 1.000000e+00 : f32
    %454 = vector.broadcast %cst_131 : f32 to vector<2x128xf32>
    %455 = arith.addf %454, %453 : vector<2x128xf32>
    %456 = arith.divf %454, %455 : vector<2x128xf32>
    %457 = vector.extract_strided_slice %450 {offsets = [0, 128], sizes = [2, 128], strides = [1, 1]} : vector<2x512xf32> to vector<2x128xf32>
    %458 = arith.negf %457 : vector<2x128xf32>
    %459 = math.exp %458 : vector<2x128xf32>
    %cst_132 = arith.constant 1.000000e+00 : f32
    %460 = vector.broadcast %cst_132 : f32 to vector<2x128xf32>
    %461 = arith.addf %460, %459 : vector<2x128xf32>
    %462 = arith.divf %460, %461 : vector<2x128xf32>
    %463 = vector.extract_strided_slice %450 {offsets = [0, 256], sizes = [2, 128], strides = [1, 1]} : vector<2x512xf32> to vector<2x128xf32>
    %464 = math.tanh %463 : vector<2x128xf32>
    %465 = vector.extract_strided_slice %450 {offsets = [0, 384], sizes = [2, 128], strides = [1, 1]} : vector<2x512xf32> to vector<2x128xf32>
    %466 = arith.negf %465 : vector<2x128xf32>
    %467 = math.exp %466 : vector<2x128xf32>
    %cst_133 = arith.constant 1.000000e+00 : f32
    %468 = vector.broadcast %cst_133 : f32 to vector<2x128xf32>
    %469 = arith.addf %468, %467 : vector<2x128xf32>
    %470 = arith.divf %468, %469 : vector<2x128xf32>
    %471 = arith.mulf %462, %443 : vector<2x128xf32>
    %472 = arith.mulf %456, %464 : vector<2x128xf32>
    %473 = arith.addf %471, %472 : vector<2x128xf32>
    %474 = math.tanh %473 : vector<2x128xf32>
    %475 = arith.mulf %470, %474 : vector<2x128xf32>
    %c6_i32_134 = arith.constant 6 : i32
    %476 = arith.index_cast %c6_i32_134 : i32 to index
    %c0_135 = arith.constant 0 : index
    %c0_136 = arith.constant 0 : index
    %477 = vector.load %arg10[%476, %c0_135, %c0_136] : memref<8x2x512xf32, #tpu.memory_space<vmem>>, vector<1x2x512xf32>
    %478 = vector.shape_cast %477 : vector<1x2x512xf32> to vector<2x512xf32>
    %cst_137 = arith.constant dense<0.000000e+00> : vector<2x512xf32>
    %479 = tpu.matmul %475, %285, %cst_137 {dimension_numbers = #tpu.dot_dimension_numbers<[1], [0], [0], [1], [0, 0, 1, 1], [], []>} : vector<2x128xf32>, vector<128x512xf32>, vector<2x512xf32> -> vector<2x512xf32>
    %480 = arith.addf %478, %479 : vector<2x512xf32>
    %481 = vector.extract_strided_slice %480 {offsets = [0, 0], sizes = [2, 128], strides = [1, 1]} : vector<2x512xf32> to vector<2x128xf32>
    %482 = arith.negf %481 : vector<2x128xf32>
    %483 = math.exp %482 : vector<2x128xf32>
    %cst_138 = arith.constant 1.000000e+00 : f32
    %484 = vector.broadcast %cst_138 : f32 to vector<2x128xf32>
    %485 = arith.addf %484, %483 : vector<2x128xf32>
    %486 = arith.divf %484, %485 : vector<2x128xf32>
    %487 = vector.extract_strided_slice %480 {offsets = [0, 128], sizes = [2, 128], strides = [1, 1]} : vector<2x512xf32> to vector<2x128xf32>
    %488 = arith.negf %487 : vector<2x128xf32>
    %489 = math.exp %488 : vector<2x128xf32>
    %cst_139 = arith.constant 1.000000e+00 : f32
    %490 = vector.broadcast %cst_139 : f32 to vector<2x128xf32>
    %491 = arith.addf %490, %489 : vector<2x128xf32>
    %492 = arith.divf %490, %491 : vector<2x128xf32>
    %493 = vector.extract_strided_slice %480 {offsets = [0, 256], sizes = [2, 128], strides = [1, 1]} : vector<2x512xf32> to vector<2x128xf32>
    %494 = math.tanh %493 : vector<2x128xf32>
    %495 = vector.extract_strided_slice %480 {offsets = [0, 384], sizes = [2, 128], strides = [1, 1]} : vector<2x512xf32> to vector<2x128xf32>
    %496 = arith.negf %495 : vector<2x128xf32>
    %497 = math.exp %496 : vector<2x128xf32>
    %cst_140 = arith.constant 1.000000e+00 : f32
    %498 = vector.broadcast %cst_140 : f32 to vector<2x128xf32>
    %499 = arith.addf %498, %497 : vector<2x128xf32>
    %500 = arith.divf %498, %499 : vector<2x128xf32>
    %501 = arith.mulf %492, %473 : vector<2x128xf32>
    %502 = arith.mulf %486, %494 : vector<2x128xf32>
    %503 = arith.addf %501, %502 : vector<2x128xf32>
    %504 = math.tanh %503 : vector<2x128xf32>
    %505 = arith.mulf %500, %504 : vector<2x128xf32>
    %c7_i32_141 = arith.constant 7 : i32
    %506 = arith.index_cast %c7_i32_141 : i32 to index
    %c0_142 = arith.constant 0 : index
    %c0_143 = arith.constant 0 : index
    %507 = vector.load %arg10[%506, %c0_142, %c0_143] : memref<8x2x512xf32, #tpu.memory_space<vmem>>, vector<1x2x512xf32>
    %508 = vector.shape_cast %507 : vector<1x2x512xf32> to vector<2x512xf32>
    %cst_144 = arith.constant dense<0.000000e+00> : vector<2x512xf32>
    %509 = tpu.matmul %505, %285, %cst_144 {dimension_numbers = #tpu.dot_dimension_numbers<[1], [0], [0], [1], [0, 0, 1, 1], [], []>} : vector<2x128xf32>, vector<128x512xf32>, vector<2x512xf32> -> vector<2x512xf32>
    %510 = arith.addf %508, %509 : vector<2x512xf32>
    %511 = vector.extract_strided_slice %510 {offsets = [0, 0], sizes = [2, 128], strides = [1, 1]} : vector<2x512xf32> to vector<2x128xf32>
    %512 = arith.negf %511 : vector<2x128xf32>
    %513 = math.exp %512 : vector<2x128xf32>
    %cst_145 = arith.constant 1.000000e+00 : f32
    %514 = vector.broadcast %cst_145 : f32 to vector<2x128xf32>
    %515 = arith.addf %514, %513 : vector<2x128xf32>
    %516 = arith.divf %514, %515 : vector<2x128xf32>
    %517 = vector.extract_strided_slice %510 {offsets = [0, 128], sizes = [2, 128], strides = [1, 1]} : vector<2x512xf32> to vector<2x128xf32>
    %518 = arith.negf %517 : vector<2x128xf32>
    %519 = math.exp %518 : vector<2x128xf32>
    %cst_146 = arith.constant 1.000000e+00 : f32
    %520 = vector.broadcast %cst_146 : f32 to vector<2x128xf32>
    %521 = arith.addf %520, %519 : vector<2x128xf32>
    %522 = arith.divf %520, %521 : vector<2x128xf32>
    %523 = vector.extract_strided_slice %510 {offsets = [0, 256], sizes = [2, 128], strides = [1, 1]} : vector<2x512xf32> to vector<2x128xf32>
    %524 = math.tanh %523 : vector<2x128xf32>
    %525 = vector.extract_strided_slice %510 {offsets = [0, 384], sizes = [2, 128], strides = [1, 1]} : vector<2x512xf32> to vector<2x128xf32>
    %526 = arith.negf %525 : vector<2x128xf32>
    %527 = math.exp %526 : vector<2x128xf32>
    %cst_147 = arith.constant 1.000000e+00 : f32
    %528 = vector.broadcast %cst_147 : f32 to vector<2x128xf32>
    %529 = arith.addf %528, %527 : vector<2x128xf32>
    %530 = arith.divf %528, %529 : vector<2x128xf32>
    %531 = arith.mulf %522, %503 : vector<2x128xf32>
    %532 = arith.mulf %516, %524 : vector<2x128xf32>
    %533 = arith.addf %531, %532 : vector<2x128xf32>
    %534 = math.tanh %533 : vector<2x128xf32>
    %535 = arith.mulf %530, %534 : vector<2x128xf32>
    %c8_i32_148 = arith.constant 8 : i32
    %c0_149 = arith.constant 0 : index
    %c0_150 = arith.constant 0 : index
    %536 = vector.load %arg7[%c0_149, %c0_150] : memref<128x4xf32, #tpu.memory_space<vmem>>, vector<128x4xf32>
    %cst_151 = arith.constant dense<0.000000e+00> : vector<2x4xf32>
    %537 = tpu.matmul %535, %536, %cst_151 {dimension_numbers = #tpu.dot_dimension_numbers<[1], [0], [0], [1], [0, 0, 1, 1], [], []>} : vector<2x128xf32>, vector<128x4xf32>, vector<2x4xf32> -> vector<2x4xf32>
    %c0_152 = arith.constant 0 : index
    %c0_153 = arith.constant 0 : index
    %538 = vector.load %arg8[%c0_152, %c0_153] : memref<1x4xf32, #tpu.memory_space<vmem>>, vector<1x4xf32>
    %539 = vector.broadcast %538 : vector<1x4xf32> to vector<2x4xf32>
    %540 = arith.addf %537, %539 : vector<2x4xf32>
    %c0_154 = arith.constant 0 : index
    %c0_155 = arith.constant 0 : index
    %541 = vector.load %arg9[%c0_154, %c0_155] : memref<2x4xf32, #tpu.memory_space<vmem>>, vector<2x4xf32>
    tpu.vector_store %arg9[%c0_154, %c0_155], %540 {strides = array<i32>} : memref<2x4xf32, #tpu.memory_space<vmem>>, vector<2x4xf32>,
    return
  }
}

</mosaic_0001>

<llo_original>
// kernel: tpu_custom_call.1
$region0: #{tpu_custom_call.1}
  #allocation0 [shape = 'u32[]', space=smem, size = 0x4, offset = 0x4, fixed_abs, tag = 'smem constant byte address 0x4 - core index']
  #allocation1 [shape = 'u32[144,128]{1,0:T(1,128)}', space=vmem, size = 0x12000, scoped, tag = 'internal scratch']
  #allocation2 [shape = 'f32[8,2,512]{2,1,0:T(2,128)}', space=vmem, size = 0x8000, scoped, tag = 'scratch operand']
  #allocation3 [shape = 'f32[8,2,128]{2,1,0:T(2,128)}', space=vmem, size = 0x2000, scoped, tag = 'scratch operand']
  %s0 = inlined_call_operand.vmem [shape: f32[8,2,16], index: 0, kind: input, shape index: {}]
  %s1 = inlined_call_operand.vmem [shape: f32[16,512], index: 1, kind: input, shape index: {}]
  %s2 = inlined_call_operand.hbm [shape: f32[128,512], index: 2, kind: input, shape index: {}]
  %s3 = inlined_call_operand.vmem [shape: f32[1,512], index: 3, kind: input, shape index: {}]
  %s4 = inlined_call_operand.hbm [shape: f32[128,512], index: 4, kind: input, shape index: {}]
  %s5 = inlined_call_operand.hbm [shape: f32[128,512], index: 5, kind: input, shape index: {}]
  %s6 = inlined_call_operand.vmem [shape: f32[1,512], index: 6, kind: input, shape index: {}]
  %s7 = inlined_call_operand.vmem [shape: f32[128,4], index: 7, kind: input, shape index: {}]
  %s8 = inlined_call_operand.vmem [shape: f32[1,4], index: 8, kind: input, shape index: {}]
  %s9 = inlined_call_operand.hbm [shape: f32[2,4], index: 9, kind: output, shape index: {}]
  %s10 = sld [smem:[#allocation0]]
  $region58: #{tpu_custom_call.1} parent=0
    _
  %s12 = ssub.s32 1, %s10
  %s13 = scalar_select 0, %s12, %s10
  $region1: #{tpu_custom_call.1} parent=0
    #allocation4 [shape = 'u8[262144]{0}', space=vmem, size = 0x40000, scoped, tag = 'input window, operand 2, single buffered']
    #allocation5 [shape = 's32[1]{0}', space=sflag, size = 0x4, scoped, tag = 'scoped memory for tpu_custom_call.1']
    #allocation6 [shape = 's32[1]{0}', space=sflag, size = 0x4, scoped, tag = 'scoped memory for tpu_custom_call.1']
    #allocation7 [shape = 'u8[262144]{0}', space=vmem, size = 0x40000, scoped, tag = 'input window, operand 4, single buffered']
    #allocation8 [shape = 's32[1]{0}', space=sflag, size = 0x4, scoped, tag = 'scoped memory for tpu_custom_call.1']
    #allocation9 [shape = 'u8[262144]{0}', space=vmem, size = 0x40000, scoped, tag = 'input window, operand 5, single buffered']
    #allocation10 [shape = 'u8[1024]{0}', space=vmem, size = 0x400, scoped, tag = 'output window, operand 0, single buffered']
    %14 = vsyncpa [#allocation5], 0
    %15 = vsyncpa [#allocation8], 0
    %16 = vsyncpa [#allocation6], 0
    // Predicated region
    $region2: #{tpu_custom_call.1} parent=1 // pred_check
      _
    $region3: #{tpu_custom_call.1} parent=1 // pred_check_branch
      %18 = sbr.rel (0) target = $region5
    $region4: #{tpu_custom_call.1} parent=1 // pred_region
      _
    $region5: #{tpu_custom_call.1} parent=1 // pred_fallthru
      _
    // Predicated region
    $region6: #{tpu_custom_call.1} parent=1 // pred_check
      _
    $region7: #{tpu_custom_call.1} parent=1 // pred_check_branch
      %20 = sbr.rel (0) target = $region9
    $region8: #{tpu_custom_call.1} parent=1 // pred_region
      _
    $region9: #{tpu_custom_call.1} parent=1 // pred_fallthru
      _
    // Predicated region
    $region10: #{tpu_custom_call.1} parent=1 // pred_check
      _
    $region11: #{tpu_custom_call.1} parent=1 // pred_check_branch
      %22 = sbr.rel (0) target = $region13
    $region12: #{tpu_custom_call.1} parent=1 // pred_region
      %s24 = ssub.s32 8192, 8192
      %25 = vsyncadd [#allocation5], %s24
      %s26 = sshll.u32 [#allocation4], 4
      %s27 = int_to_ptr.vmem [resolvable:$true] %s26
      %32 = dma.hbm_to_vmem [thread:$0]  %s2, 8192, %s27, [#allocation5], 512, 512, 32
    $region13: #{tpu_custom_call.1} parent=1 // pred_fallthru
      _
    // Predicated region
    $region14: #{tpu_custom_call.1} parent=1 // pred_check
      _
    $region15: #{tpu_custom_call.1} parent=1 // pred_check_branch
      %34 = sbr.rel (0) target = $region17
    $region16: #{tpu_custom_call.1} parent=1 // pred_region
      _
    $region17: #{tpu_custom_call.1} parent=1 // pred_fallthru
      _
    // Predicated region
    $region18: #{tpu_custom_call.1} parent=1 // pred_check
      _
    $region19: #{tpu_custom_call.1} parent=1 // pred_check_branch
      %36 = sbr.rel (0) target = $region21
    $region20: #{tpu_custom_call.1} parent=1 // pred_region
      %s38 = ssub.s32 8192, 8192
      %39 = vsyncadd [#allocation8], %s38
      %s40 = sshll.u32 [#allocation7], 4
      %s41 = int_to_ptr.vmem [resolvable:$true] %s40
      %46 = dma.hbm_to_vmem [thread:$0]  %s4, 8192, %s41, [#allocation8], 512, 512, 32
    $region21: #{tpu_custom_call.1} parent=1 // pred_fallthru
      _
    // Predicated region
    $region22: #{tpu_custom_call.1} parent=1 // pred_check
      _
    $region23: #{tpu_custom_call.1} parent=1 // pred_check_branch
      %48 = sbr.rel (0) target = $region25
    $region24: #{tpu_custom_call.1} parent=1 // pred_region
      %s50 = ssub.s32 8192, 8192
      %51 = vsyncadd [#allocation8], %s50
      %s52 = sshll.u32 [#allocation9], 4
      %s53 = int_to_ptr.vmem [resolvable:$true] %s52
      %58 = dma.hbm_to_vmem [thread:$0]  %s5, 8192, %s53, [#allocation8], 512, 512, 32
    $region25: #{tpu_custom_call.1} parent=1 // pred_fallthru
      _
    // Predicated region
    $region26: #{tpu_custom_call.1} parent=1 // pred_check
      _
    $region27: #{tpu_custom_call.1} parent=1 // pred_check_branch
      %60 = sbr.rel (0) target = $region29
    $region28: #{tpu_custom_call.1} parent=1 // pred_region
      _
    $region29: #{tpu_custom_call.1} parent=1 // pred_fallthru
      _
    // Predicated region
    $region30: #{tpu_custom_call.1} parent=1 // pred_check
      _
    $region31: #{tpu_custom_call.1} parent=1 // pred_check_branch
      %62 = sbr.rel (0) target = $region33
    $region32: #{tpu_custom_call.1} parent=1 // pred_region
      _
    $region33: #{tpu_custom_call.1} parent=1 // pred_fallthru
      _
    // Predicated region
    $region34: #{tpu_custom_call.1} parent=1 // pred_check
      _
    $region35: #{tpu_custom_call.1} parent=1 // pred_check_branch
      %64 = sbr.rel (0) target = $region37
    $region36: #{tpu_custom_call.1} parent=1 // pred_region
      _
    $region37: #{tpu_custom_call.1} parent=1 // pred_fallthru
      _
    // Predicated region
    $region38: #{tpu_custom_call.1} parent=1 // pred_check
      _
    $region39: #{tpu_custom_call.1} parent=1 // pred_check_branch
      %66 = sbr.rel (0) target = $region41
    $region40: #{tpu_custom_call.1} parent=1 // pred_region
      %67 = dma.done [#allocation5], 8192
    $region41: #{tpu_custom_call.1} parent=1 // pred_fallthru
      _
    // Predicated region
    $region42: #{tpu_custom_call.1} parent=1 // pred_check
      _
    $region43: #{tpu_custom_call.1} parent=1 // pred_check_branch
      %69 = sbr.rel (0) target = $region45
    $region44: #{tpu_custom_call.1} parent=1 // pred_region
      %70 = dma.done [#allocation8], 8192
    $region45: #{tpu_custom_call.1} parent=1 // pred_fallthru
      _
    // Predicated region
    $region46: #{tpu_custom_call.1} parent=1 // pred_check
      _
    $region47: #{tpu_custom_call.1} parent=1 // pred_check_branch
      %72 = sbr.rel (0) target = $region49
    $region48: #{tpu_custom_call.1} parent=1 // pred_region
      %73 = dma.done [#allocation8], 8192
    $region49: #{tpu_custom_call.1} parent=1 // pred_fallthru
      _
    %v74 = vld [vmem:[%s1] sm:$0xff]
    %v75 = vld [vmem:[%s1 + $0x8] sm:$0xff]
    %v76 = vld [vmem:[%s1 + $0x10] sm:$0xff]
    %v77 = vld [vmem:[%s1 + $0x18] sm:$0xff]
    %v78 = vld [vmem:[%s1 + $0x20] sm:$0xff]
    %v79 = vld [vmem:[%s1 + $0x28] sm:$0xff]
    %v80 = vld [vmem:[%s1 + $0x30] sm:$0xff]
    %v81 = vld [vmem:[%s1 + $0x38] sm:$0xff]
    %v82 = vld [vmem:[#allocation4] sm:$0xff]
    %v83 = vld [vmem:[#allocation4 + $0x8] sm:$0xff]
    %v84 = vld [vmem:[#allocation4 + $0x10] sm:$0xff]
    %v85 = vld [vmem:[#allocation4 + $0x18] sm:$0xff]
    %v86 = vld [vmem:[#allocation4 + $0x20] sm:$0xff]
    %v87 = vld [vmem:[#allocation4 + $0x28] sm:$0xff]
    %v88 = vld [vmem:[#allocation4 + $0x30] sm:$0xff]
    %v89 = vld [vmem:[#allocation4 + $0x38] sm:$0xff]
    %v90 = vld [vmem:[#allocation4 + $0x40] sm:$0xff]
    %v91 = vld [vmem:[#allocation4 + $0x48] sm:$0xff]
    %v92 = vld [vmem:[#allocation4 + $0x50] sm:$0xff]
    %v93 = vld [vmem:[#allocation4 + $0x58] sm:$0xff]
    %v94 = vld [vmem:[#allocation4 + $0x60] sm:$0xff]
    %v95 = vld [vmem:[#allocation4 + $0x68] sm:$0xff]
    %v96 = vld [vmem:[#allocation4 + $0x70] sm:$0xff]
    %v97 = vld [vmem:[#allocation4 + $0x78] sm:$0xff]
    %v98 = vld [vmem:[#allocation4 + $0x80] sm:$0xff]
    %v99 = vld [vmem:[#allocation4 + $0x88] sm:$0xff]
    %v100 = vld [vmem:[#allocation4 + $0x90] sm:$0xff]
    %v101 = vld [vmem:[#allocation4 + $0x98] sm:$0xff]
    %v102 = vld [vmem:[#allocation4 + $0xa0] sm:$0xff]
    %v103 = vld [vmem:[#allocation4 + $0xa8] sm:$0xff]
    %v104 = vld [vmem:[#allocation4 + $0xb0] sm:$0xff]
    %v105 = vld [vmem:[#allocation4 + $0xb8] sm:$0xff]
    %v106 = vld [vmem:[#allocation4 + $0xc0] sm:$0xff]
    %v107 = vld [vmem:[#allocation4 + $0xc8] sm:$0xff]
    %v108 = vld [vmem:[#allocation4 + $0xd0] sm:$0xff]
    %v109 = vld [vmem:[#allocation4 + $0xd8] sm:$0xff]
    %v110 = vld [vmem:[#allocation4 + $0xe0] sm:$0xff]
    %v111 = vld [vmem:[#allocation4 + $0xe8] sm:$0xff]
    %v112 = vld [vmem:[#allocation4 + $0xf0] sm:$0xff]
    %v113 = vld [vmem:[#allocation4 + $0xf8] sm:$0xff]
    %v114 = vld [vmem:[#allocation4 + $0x100] sm:$0xff]
    %v115 = vld [vmem:[#allocation4 + $0x108] sm:$0xff]
    %v116 = vld [vmem:[#allocation4 + $0x110] sm:$0xff]
    %v117 = vld [vmem:[#allocation4 + $0x118] sm:$0xff]
    %v118 = vld [vmem:[#allocation4 + $0x120] sm:$0xff]
    %v119 = vld [vmem:[#allocation4 + $0x128] sm:$0xff]
    %v120 = vld [vmem:[#allocation4 + $0x130] sm:$0xff]
    %v121 = vld [vmem:[#allocation4 + $0x138] sm:$0xff]
    %v122 = vld [vmem:[#allocation4 + $0x140] sm:$0xff]
    %v123 = vld [vmem:[#allocation4 + $0x148] sm:$0xff]
    %v124 = vld [vmem:[#allocation4 + $0x150] sm:$0xff]
    %v125 = vld [vmem:[#allocation4 + $0x158] sm:$0xff]
    %v126 = vld [vmem:[#allocation4 + $0x160] sm:$0xff]
    %v127 = vld [vmem:[#allocation4 + $0x168] sm:$0xff]
    %v128 = vld [vmem:[#allocation4 + $0x170] sm:$0xff]
    %v129 = vld [vmem:[#allocation4 + $0x178] sm:$0xff]
    %v130 = vld [vmem:[#allocation4 + $0x180] sm:$0xff]
    %v131 = vld [vmem:[#allocation4 + $0x188] sm:$0xff]
    %v132 = vld [vmem:[#allocation4 + $0x190] sm:$0xff]
    %v133 = vld [vmem:[#allocation4 + $0x198] sm:$0xff]
    %v134 = vld [vmem:[#allocation4 + $0x1a0] sm:$0xff]
    %v135 = vld [vmem:[#allocation4 + $0x1a8] sm:$0xff]
    %v136 = vld [vmem:[#allocation4 + $0x1b0] sm:$0xff]
    %v137 = vld [vmem:[#allocation4 + $0x1b8] sm:$0xff]
    %v138 = vld [vmem:[#allocation4 + $0x1c0] sm:$0xff]
    %v139 = vld [vmem:[#allocation4 + $0x1c8] sm:$0xff]
    %v140 = vld [vmem:[#allocation4 + $0x1d0] sm:$0xff]
    %v141 = vld [vmem:[#allocation4 + $0x1d8] sm:$0xff]
    %v142 = vld [vmem:[#allocation4 + $0x1e0] sm:$0xff]
    %v143 = vld [vmem:[#allocation4 + $0x1e8] sm:$0xff]
    %v144 = vld [vmem:[#allocation4 + $0x1f0] sm:$0xff]
    %v145 = vld [vmem:[#allocation4 + $0x1f8] sm:$0xff]
    %v146 = vld [vmem:[%s3] sm:$0xf]
    %v147 = vld [vmem:[%s0] sm:$0x3]
    %v148 = vld [vmem:[%s0 + $0x2] sm:$0x3]
    %v149 = vld [vmem:[%s0 + $0x4] sm:$0x3]
    %v150 = vld [vmem:[%s0 + $0x6] sm:$0x3]
    %v151 = vld [vmem:[%s0 + $0x8] sm:$0x3]
    %v152 = vld [vmem:[%s0 + $0xa] sm:$0x3]
    %v153 = vld [vmem:[%s0 + $0xc] sm:$0x3]
    %v154 = vld [vmem:[%s0 + $0xe] sm:$0x3]
    %v156 = vlaneseq
    %v157 = vshrl.u32 %v156, 7
    %v158 = vsub.s32 0, %v157
    %v159 = vrot.slane %v146, %v158
    %v160 = vlaneseq
    %v161 = vshrl.u32 %v160, 7
    %v162 = vsub.s32 1, %v161
    %v163 = vrot.slane %v146, %v162
    %v164 = vlaneseq
    %v165 = vshrl.u32 %v164, 7
    %v166 = vsub.s32 2, %v165
    %v167 = vrot.slane %v146, %v166
    %v168 = vlaneseq
    %v169 = vshrl.u32 %v168, 7
    %v170 = vsub.s32 3, %v169
    %v171 = vrot.slane %v146, %v170
    %v184 = vcombine.low %v147, %v148
    %v185 = vcombine.low %v149, %v150
    %v187 = vunpack.c.l.s4 1983009808
    %v188 = vunpack.c.0.s8 %v187
    %v189 = vlaneseq
    %v190 = vshrl.u32 %v189, 7
    %v191 = vsub.s32 %v188, %v190
    %v192 = vrot.slane %v184, %v191
    %v194 = vunpack.c.l.s4 1983009808
    %v195 = vunpack.c.0.s8 %v194
    %v196 = vlaneseq
    %v197 = vshrl.u32 %v196, 7
    %v198 = vsub.s32 %v195, %v197
    %v199 = vrot.slane %v185, %v198
    %v200 = vcombine.low %v192, %v199
    %v201 = vcombine.low %v151, %v152
    %v202 = vcombine.low %v153, %v154
    %v204 = vunpack.c.l.s4 1983009808
    %v205 = vunpack.c.0.s8 %v204
    %v206 = vlaneseq
    %v207 = vshrl.u32 %v206, 7
    %v208 = vsub.s32 %v205, %v207
    %v209 = vrot.slane %v201, %v208
    %v211 = vunpack.c.l.s4 1983009808
    %v212 = vunpack.c.0.s8 %v211
    %v213 = vlaneseq
    %v214 = vshrl.u32 %v213, 7
    %v215 = vsub.s32 %v212, %v214
    %v216 = vrot.slane %v202, %v215
    %v217 = vcombine.low %v209, %v216
    %vm218 = vcmask 130048
    %v219 = vsel %vm218, %v200, 0
    %v221 = vsel %vm218, %v217, 0
    %223 = vmatprep.subr.mxu0 %v75
    %224 = vmatpush1.msra.mxu0 %v74
    %225 = vmatprep.subr.mxu0 %v79
    %226 = vmatpush1.msra.mxu0 %v78
    %227 = vmatprep.subr.mxu0 0.0
    %228 = vmatpush1.msra.mxu0 0.0
    %229 = vmatprep.subr.mxu0 0.0
    %230 = vmatpush1.msra.mxu0 0.0
    %231 = vmatprep.subr.mxu0 0.0
    %232 = vmatpush1.msra.mxu0 0.0
    %233 = vmatprep.subr.mxu0 0.0
    %234 = vmatpush1.msra.mxu0 0.0
    %235 = vmatprep.subr.mxu0 0.0
    %236 = vmatpush1.msra.mxu0 0.0
    %237 = vmatprep.subr.mxu0 0.0
    %238 = vmatpush1.msra.mxu0 0.0
    %239 = vmatprep.subr.mxu0 0.0
    %240 = vmatpush1.msra.mxu0 0.0
    %241 = vmatprep.subr.mxu0 0.0
    %242 = vmatpush1.msra.mxu0 0.0
    %243 = vmatprep.subr.mxu0 0.0
    %244 = vmatpush1.msra.mxu0 0.0
    %245 = vmatprep.subr.mxu0 0.0
    %246 = vmatpush1.msra.mxu0 0.0
    %247 = vmatprep.subr.mxu0 0.0
    %248 = vmatpush1.msra.mxu0 0.0
    %249 = vmatprep.subr.mxu0 0.0
    %250 = vmatpush1.msra.mxu0 0.0
    %251 = vmatprep.subr.mxu0 0.0
    %252 = vmatpush1.msra.mxu0 0.0
    %253 = vmatprep.subr.mxu0 0.0
    %254 = vmatpush1.msra.mxu0 0.0
    %255 = vmatprep.subr.mxu0 0.0
    %256 = vmatpush1.msra.mxu0 0.0
    %257 = vmatprep.subr.mxu0 0.0
    %258 = vmatpush1.msra.mxu0 0.0
    %259 = vmatprep.subr.mxu0 0.0
    %260 = vmatpush1.msra.mxu0 0.0
    %261 = vmatprep.subr.mxu0 0.0
    %262 = vmatpush1.msra.mxu0 0.0
    %263 = vmatprep.subr.mxu0 0.0
    %264 = vmatpush1.msra.mxu0 0.0
    %265 = vmatprep.subr.mxu0 0.0
    %266 = vmatpush1.msra.mxu0 0.0
    %267 = vmatprep.subr.mxu0 0.0
    %268 = vmatpush1.msra.mxu0 0.0
    %269 = vmatprep.subr.mxu0 0.0
    %270 = vmatpush1.msra.mxu0 0.0
    %271 = vmatprep.subr.mxu0 0.0
    %272 = vmatpush1.msra.mxu0 0.0
    %273 = vmatprep.subr.mxu0 0.0
    %274 = vmatpush1.msra.mxu0 0.0
    %275 = vmatprep.subr.mxu0 0.0
    %276 = vmatpush1.msra.mxu0 0.0
    %277 = vmatprep.subr.mxu0 0.0
    %278 = vmatpush1.msra.mxu0 0.0
    %279 = vmatprep.subr.mxu0 0.0
    %280 = vmatpush1.msra.mxu0 0.0
    %281 = vmatprep.subr.mxu0 0.0
    %282 = vmatpush1.msra.mxu0 0.0
    %283 = vmatprep.subr.mxu0 0.0
    %284 = vmatpush1.msra.mxu0 0.0
    %285 = vmatprep.subr.mxu0 0.0
    %286 = vmatpush1.msra.mxu0 0.0
    %287 = vmatprep.mubr.f32.mxu0 0.0
    %288 = vmatmul.mubr.f32.gmra.mrb[0].mxu0 %v219
    %v289 = vpop.f32.mrb[0].mxu0
    %v290 = vadd.f32 %v159, %v289
    %v291 = vpop.f32.mrb[0].mxu0
    %v292 = vadd.f32 %v163, %v291
    %293 = vmatprep.mubr.f32.mxu0 0.0
    %294 = vmatmul.mubr.f32.gmra.mrb[0].mxu0 %v221
    %v295 = vpop.f32.mrb[0].mxu0
    %v296 = vadd.f32 %v159, %v295
    %v297 = vpop.f32.mrb[0].mxu0
    %v298 = vadd.f32 %v163, %v297
    %299 = vdwg.mxu0
    %300 = vmatprep.subr.mxu0 %v77
    %301 = vmatpush1.msra.mxu0 %v76
    %302 = vmatprep.subr.mxu0 %v81
    %303 = vmatpush1.msra.mxu0 %v80
    %304 = vmatprep.subr.mxu0 0.0
    %305 = vmatpush1.msra.mxu0 0.0
    %306 = vmatprep.subr.mxu0 0.0
    %307 = vmatpush1.msra.mxu0 0.0
    %308 = vmatprep.subr.mxu0 0.0
    %309 = vmatpush1.msra.mxu0 0.0
    %310 = vmatprep.subr.mxu0 0.0
    %311 = vmatpush1.msra.mxu0 0.0
    %312 = vmatprep.subr.mxu0 0.0
    %313 = vmatpush1.msra.mxu0 0.0
    %314 = vmatprep.subr.mxu0 0.0
    %315 = vmatpush1.msra.mxu0 0.0
    %316 = vmatprep.subr.mxu0 0.0
    %317 = vmatpush1.msra.mxu0 0.0
    %318 = vmatprep.subr.mxu0 0.0
    %319 = vmatpush1.msra.mxu0 0.0
    %320 = vmatprep.subr.mxu0 0.0
    %321 = vmatpush1.msra.mxu0 0.0
    %322 = vmatprep.subr.mxu0 0.0
    %323 = vmatpush1.msra.mxu0 0.0
    %324 = vmatprep.subr.mxu0 0.0
    %325 = vmatpush1.msra.mxu0 0.0
    %326 = vmatprep.subr.mxu0 0.0
    %327 = vmatpush1.msra.mxu0 0.0
    %328 = vmatprep.subr.mxu0 0.0
    %329 = vmatpush1.msra.mxu0 0.0
    %330 = vmatprep.subr.mxu0 0.0
    %331 = vmatpush1.msra.mxu0 0.0
    %332 = vmatprep.subr.mxu0 0.0
    %333 = vmatpush1.msra.mxu0 0.0
    %334 = vmatprep.subr.mxu0 0.0
    %335 = vmatpush1.msra.mxu0 0.0
    %336 = vmatprep.subr.mxu0 0.0
    %337 = vmatpush1.msra.mxu0 0.0
    %338 = vmatprep.subr.mxu0 0.0
    %339 = vmatpush1.msra.mxu0 0.0
    %340 = vmatprep.subr.mxu0 0.0
    %341 = vmatpush1.msra.mxu0 0.0
    %342 = vmatprep.subr.mxu0 0.0
    %343 = vmatpush1.msra.mxu0 0.0
    %344 = vmatprep.subr.mxu0 0.0
    %345 = vmatpush1.msra.mxu0 0.0
    %346 = vmatprep.subr.mxu0 0.0
    %347 = vmatpush1.msra.mxu0 0.0
    %348 = vmatprep.subr.mxu0 0.0
    %349 = vmatpush1.msra.mxu0 0.0
    %350 = vmatprep.subr.mxu0 0.0
    %351 = vmatpush1.msra.mxu0 0.0
    %352 = vmatprep.subr.mxu0 0.0
    %353 = vmatpush1.msra.mxu0 0.0
    %354 = vmatprep.subr.mxu0 0.0
    %355 = vmatpush1.msra.mxu0 0.0
    %356 = vmatprep.subr.mxu0 0.0
    %357 = vmatpush1.msra.mxu0 0.0
    %358 = vmatprep.subr.mxu0 0.0
    %359 = vmatpush1.msra.mxu0 0.0
    %360 = vmatprep.subr.mxu0 0.0
    %361 = vmatpush1.msra.mxu0 0.0
    %362 = vmatprep.subr.mxu0 0.0
    %363 = vmatpush1.msra.mxu0 0.0
    %364 = vmatprep.mubr.f32.mxu0 0.0
    %365 = vmatmul.mubr.f32.gmra.mrb[0].mxu0 %v219
    %v366 = vpop.f32.mrb[0].mxu0
    %v367 = vadd.f32 %v167, %v366
    %v368 = vpop.f32.mrb[0].mxu0
    %v369 = vadd.f32 %v171, %v368
    %370 = vmatprep.mubr.f32.mxu0 0.0
    %371 = vmatmul.mubr.f32.gmra.mrb[0].mxu0 %v221
    %v372 = vpop.f32.mrb[0].mxu0
    %v373 = vadd.f32 %v167, %v372
    %v374 = vpop.f32.mrb[0].mxu0
    %v375 = vadd.f32 %v171, %v374
    %376 = vdwg.mxu0
    %v385 = vcombine.low %v290, %v292
    %v386 = vcombine.high %v290, %v292
    %v387 = vcombine.low %v367, %v369
    %v388 = vcombine.high %v367, %v369
    %v390 = vunpack.c.l.s4 1983009808
    %v391 = vunpack.c.0.s8 %v390
    %v392 = vlaneseq
    %v393 = vshrl.u32 %v392, 7
    %v394 = vsub.s32 %v391, %v393
    %v395 = vrot.slane %v385, %v394
    %v397 = vunpack.c.l.s4 1983009808
    %v398 = vunpack.c.0.s8 %v397
    %v399 = vlaneseq
    %v400 = vshrl.u32 %v399, 7
    %v401 = vsub.s32 %v398, %v400
    %v402 = vrot.slane %v386, %v401
    %v404 = vunpack.c.l.s4 1983009808
    %v405 = vunpack.c.0.s8 %v404
    %v406 = vlaneseq
    %v407 = vshrl.u32 %v406, 7
    %v408 = vsub.s32 %v405, %v407
    %v409 = vrot.slane %v387, %v408
    %v411 = vunpack.c.l.s4 1983009808
    %v412 = vunpack.c.0.s8 %v411
    %v413 = vlaneseq
    %v414 = vshrl.u32 %v413, 7
    %v415 = vsub.s32 %v412, %v414
    %v416 = vrot.slane %v388, %v415
    %v417 = vcombine.low %v395, %v409
    %v418 = vcombine.high %v395, %v409
    %v419 = vcombine.low %v402, %v416
    %v420 = vcombine.high %v402, %v416
    %v421 = vcombine.low %v296, %v298
    %v422 = vcombine.high %v296, %v298
    %v423 = vcombine.low %v373, %v375
    %v424 = vcombine.high %v373, %v375
    %v426 = vunpack.c.l.s4 1983009808
    %v427 = vunpack.c.0.s8 %v426
    %v428 = vlaneseq
    %v429 = vshrl.u32 %v428, 7
    %v430 = vsub.s32 %v427, %v429
    %v431 = vrot.slane %v421, %v430
    %v433 = vunpack.c.l.s4 1983009808
    %v434 = vunpack.c.0.s8 %v433
    %v435 = vlaneseq
    %v436 = vshrl.u32 %v435, 7
    %v437 = vsub.s32 %v434, %v436
    %v438 = vrot.slane %v422, %v437
    %v440 = vunpack.c.l.s4 1983009808
    %v441 = vunpack.c.0.s8 %v440
    %v442 = vlaneseq
    %v443 = vshrl.u32 %v442, 7
    %v444 = vsub.s32 %v441, %v443
    %v445 = vrot.slane %v423, %v444
    %v447 = vunpack.c.l.s4 1983009808
    %v448 = vunpack.c.0.s8 %v447
    %v449 = vlaneseq
    %v450 = vshrl.u32 %v449, 7
    %v451 = vsub.s32 %v448, %v450
    %v452 = vrot.slane %v424, %v451
    %v453 = vcombine.low %v431, %v445
    %v454 = vcombine.high %v431, %v445
    %v455 = vcombine.low %v438, %v452
    %v456 = vcombine.high %v438, %v452
    %465 = vst [vmem:[#allocation2] sm:$0xff] %v417
    %466 = vst [vmem:[#allocation2 + $0x8] sm:$0xff] %v418
    %467 = vst [vmem:[#allocation2 + $0x10] sm:$0xff] %v419
    %468 = vst [vmem:[#allocation2 + $0x18] sm:$0xff] %v420
    %469 = vst [vmem:[#allocation2 + $0x20] sm:$0xff] %v453
    %470 = vst [vmem:[#allocation2 + $0x28] sm:$0xff] %v454
    %471 = vst [vmem:[#allocation2 + $0x30] sm:$0xff] %v455
    %472 = vst [vmem:[#allocation2 + $0x38] sm:$0xff] %v456
    %v473 = vld [vmem:[#allocation2] sm:$0xff]
    %474 = vmatprep.subr.mxu0 %v83
    %475 = vmatpush1.msra.mxu0 %v82
    %476 = vmatprep.subr.mxu0 %v87
    %477 = vmatpush1.msra.mxu0 %v86
    %478 = vmatprep.subr.mxu0 %v91
    %479 = vmatpush1.msra.mxu0 %v90
    %480 = vmatprep.subr.mxu0 %v95
    %481 = vmatpush1.msra.mxu0 %v94
    %482 = vmatprep.subr.mxu0 %v99
    %483 = vmatpush1.msra.mxu0 %v98
    %484 = vmatprep.subr.mxu0 %v103
    %485 = vmatpush1.msra.mxu0 %v102
    %486 = vmatprep.subr.mxu0 %v107
    %487 = vmatpush1.msra.mxu0 %v106
    %488 = vmatprep.subr.mxu0 %v111
    %489 = vmatpush1.msra.mxu0 %v110
    %490 = vmatprep.subr.mxu0 %v115
    %491 = vmatpush1.msra.mxu0 %v114
    %492 = vmatprep.subr.mxu0 %v119
    %493 = vmatpush1.msra.mxu0 %v118
    %494 = vmatprep.subr.mxu0 %v123
    %495 = vmatpush1.msra.mxu0 %v122
    %496 = vmatprep.subr.mxu0 %v127
    %497 = vmatpush1.msra.mxu0 %v126
    %498 = vmatprep.subr.mxu0 %v131
    %499 = vmatpush1.msra.mxu0 %v130
    %500 = vmatprep.subr.mxu0 %v135
    %501 = vmatpush1.msra.mxu0 %v134
    %502 = vmatprep.subr.mxu0 %v139
    %503 = vmatpush1.msra.mxu0 %v138
    %504 = vmatprep.subr.mxu0 %v143
    %505 = vmatpush1.msra.mxu0 %v142
    %506 = vmatprep.subr.mxu0 0.0
    %507 = vmatpush1.msra.mxu0 0.0
    %508 = vmatprep.subr.mxu0 0.0
    %509 = vmatpush1.msra.mxu0 0.0
    %510 = vmatprep.subr.mxu0 0.0
    %511 = vmatpush1.msra.mxu0 0.0
    %512 = vmatprep.subr.mxu0 0.0
    %513 = vmatpush1.msra.mxu0 0.0
    %514 = vmatprep.subr.mxu0 0.0
    %515 = vmatpush1.msra.mxu0 0.0
    %516 = vmatprep.subr.mxu0 0.0
    %517 = vmatpush1.msra.mxu0 0.0
    %518 = vmatprep.subr.mxu0 0.0
    %519 = vmatpush1.msra.mxu0 0.0
    %520 = vmatprep.subr.mxu0 0.0
    %521 = vmatpush1.msra.mxu0 0.0
    %522 = vmatprep.subr.mxu0 0.0
    %523 = vmatpush1.msra.mxu0 0.0
    %524 = vmatprep.subr.mxu0 0.0
    %525 = vmatpush1.msra.mxu0 0.0
    %526 = vmatprep.subr.mxu0 0.0
    %527 = vmatpush1.msra.mxu0 0.0
    %528 = vmatprep.subr.mxu0 0.0
    %529 = vmatpush1.msra.mxu0 0.0
    %530 = vmatprep.subr.mxu0 0.0
    %531 = vmatpush1.msra.mxu0 0.0
    %532 = vmatprep.subr.mxu0 0.0
    %533 = vmatpush1.msra.mxu0 0.0
    %534 = vmatprep.subr.mxu0 0.0
    %535 = vmatpush1.msra.mxu0 0.0
    %536 = vmatprep.subr.mxu0 0.0
    %537 = vmatpush1.msra.mxu0 0.0
    %538 = vmatprep.mubr.f32.mxu0 0.0
    %539 = vmatmul.mubr.f32.gmra.mrb[0].mxu0 0.0
    %v540 = vpop.f32.mrb[0].mxu0
    %v541 = vadd.f32 0.0, %v540
    %v542 = vpop.f32.mrb[0].mxu0
    %v543 = vadd.f32 0.0, %v542
    %544 = vdwg.mxu0
    %545 = vmatprep.subr.mxu0 %v85
    %546 = vmatpush1.msra.mxu0 %v84
    %547 = vmatprep.subr.mxu0 %v89
    %548 = vmatpush1.msra.mxu0 %v88
    %549 = vmatprep.subr.mxu0 %v93
    %550 = vmatpush1.msra.mxu0 %v92
    %551 = vmatprep.subr.mxu0 %v97
    %552 = vmatpush1.msra.mxu0 %v96
    %553 = vmatprep.subr.mxu0 %v101
    %554 = vmatpush1.msra.mxu0 %v100
    %555 = vmatprep.subr.mxu0 %v105
    %556 = vmatpush1.msra.mxu0 %v104
    %557 = vmatprep.subr.mxu0 %v109
    %558 = vmatpush1.msra.mxu0 %v108
    %559 = vmatprep.subr.mxu0 %v113
    %560 = vmatpush1.msra.mxu0 %v112
    %561 = vmatprep.subr.mxu0 %v117
    %562 = vmatpush1.msra.mxu0 %v116
    %563 = vmatprep.subr.mxu0 %v121
    %564 = vmatpush1.msra.mxu0 %v120
    %565 = vmatprep.subr.mxu0 %v125
    %566 = vmatpush1.msra.mxu0 %v124
    %567 = vmatprep.subr.mxu0 %v129
    %568 = vmatpush1.msra.mxu0 %v128
    %569 = vmatprep.subr.mxu0 %v133
    %570 = vmatpush1.msra.mxu0 %v132
    %571 = vmatprep.subr.mxu0 %v137
    %572 = vmatpush1.msra.mxu0 %v136
    %573 = vmatprep.subr.mxu0 %v141
    %574 = vmatpush1.msra.mxu0 %v140
    %575 = vmatprep.subr.mxu0 %v145
    %576 = vmatpush1.msra.mxu0 %v144
    %577 = vmatprep.subr.mxu0 0.0
    %578 = vmatpush1.msra.mxu0 0.0
    %579 = vmatprep.subr.mxu0 0.0
    %580 = vmatpush1.msra.mxu0 0.0
    %581 = vmatprep.subr.mxu0 0.0
    %582 = vmatpush1.msra.mxu0 0.0
    %583 = vmatprep.subr.mxu0 0.0
    %584 = vmatpush1.msra.mxu0 0.0
    %585 = vmatprep.subr.mxu0 0.0
    %586 = vmatpush1.msra.mxu0 0.0
    %587 = vmatprep.subr.mxu0 0.0
    %588 = vmatpush1.msra.mxu0 0.0
    %589 = vmatprep.subr.mxu0 0.0
    %590 = vmatpush1.msra.mxu0 0.0
    %591 = vmatprep.subr.mxu0 0.0
    %592 = vmatpush1.msra.mxu0 0.0
    %593 = vmatprep.subr.mxu0 0.0
    %594 = vmatpush1.msra.mxu0 0.0
    %595 = vmatprep.subr.mxu0 0.0
    %596 = vmatpush1.msra.mxu0 0.0
    %597 = vmatprep.subr.mxu0 0.0
    %598 = vmatpush1.msra.mxu0 0.0
    %599 = vmatprep.subr.mxu0 0.0
    %600 = vmatpush1.msra.mxu0 0.0
    %601 = vmatprep.subr.mxu0 0.0
    %602 = vmatpush1.msra.mxu0 0.0
    %603 = vmatprep.subr.mxu0 0.0
    %604 = vmatpush1.msra.mxu0 0.0
    %605 = vmatprep.subr.mxu0 0.0
    %606 = vmatpush1.msra.mxu0 0.0
    %607 = vmatprep.subr.mxu0 0.0
    %608 = vmatpush1.msra.mxu0 0.0
    %609 = vmatprep.mubr.f32.mxu0 0.0
    %610 = vmatmul.mubr.f32.gmra.mrb[0].mxu0 0.0
    %v611 = vpop.f32.mrb[0].mxu0
    %v612 = vadd.f32 0.0, %v611
    %v613 = vpop.f32.mrb[0].mxu0
    %v614 = vadd.f32 0.0, %v613
    %615 = vdwg.mxu0
    %v620 = vcombine.low %v541, %v543
    %v621 = vcombine.low %v612, %v614
    %v623 = vunpack.c.l.s4 1983009808
    %v624 = vunpack.c.0.s8 %v623
    %v625 = vlaneseq
    %v626 = vshrl.u32 %v625, 7
    %v627 = vsub.s32 %v624, %v626
    %v628 = vrot.slane %v620, %v627
    %v630 = vunpack.c.l.s4 1983009808
    %v631 = vunpack.c.0.s8 %v630
    %v632 = vlaneseq
    %v633 = vshrl.u32 %v632, 7
    %v634 = vsub.s32 %v631, %v633
    %v635 = vrot.slane %v621, %v634
    %v636 = vcombine.low %v628, %v635
    %v638 = vadd.f32 %v473, %v636
    %v639 = vxor.u32 %v638, 2147483648
    %v640 = vmul.f32 %v639, 1.442695
    %v641 = vpow.pop %v640
    %v642 = vadd.f32 %v641, 1.0
    %v643 = vrcp.pop %v642
    %v644 = vmul.f32 1.0, %v643
    %v646 = vrot.slane %v638, 2
    %v648 = vxor.u32 %v646, 2147483648
    %v649 = vmul.f32 %v648, 1.442695
    %v650 = vpow.pop %v649
    %v651 = vadd.f32 %v650, 1.0
    %v652 = vrcp.pop %v651
    %v653 = vmul.f32 1.0, %v652
    %v654 = vrot.slane %v638, 4
    %v656 = vtanh.pop %v654
    %v657 = vrot.slane %v638, 6
    %v659 = vxor.u32 %v657, 2147483648
    %v660 = vmul.f32 %v659, 1.442695
    %v661 = vpow.pop %v660
    %v662 = vadd.f32 %v661, 1.0
    %v663 = vrcp.pop %v662
    %v664 = vmul.f32 1.0, %v663
    %v665 = vmul.f32 %v653, 0.0
    %v666 = vmul.f32 %v644, %v656
    %v667 = vadd.f32 %v665, %v666
    %v668 = vtanh.pop %v667
    %v669 = vmul.f32 %v664, %v668
    %670 = vst [vmem:[#allocation3] sm:$0x3] %v669
    %s671 = scalar_lea.vmem [#allocation2], 8
    %v672 = vld [vmem:[%s671] sm:$0xff]
    %673 = vmatprep.subr.mxu0 %v83
    %674 = vmatpush1.msra.mxu0 %v82
    %675 = vmatprep.subr.mxu0 %v87
    %676 = vmatpush1.msra.mxu0 %v86
    %677 = vmatprep.subr.mxu0 %v91
    %678 = vmatpush1.msra.mxu0 %v90
    %679 = vmatprep.subr.mxu0 %v95
    %680 = vmatpush1.msra.mxu0 %v94
    %681 = vmatprep.subr.mxu0 %v99
    %682 = vmatpush1.msra.mxu0 %v98
    %683 = vmatprep.subr.mxu0 %v103
    %684 = vmatpush1.msra.mxu0 %v102
    %685 = vmatprep.subr.mxu0 %v107
    %686 = vmatpush1.msra.mxu0 %v106
    %687 = vmatprep.subr.mxu0 %v111
    %688 = vmatpush1.msra.mxu0 %v110
    %689 = vmatprep.subr.mxu0 %v115
    %690 = vmatpush1.msra.mxu0 %v114
    %691 = vmatprep.subr.mxu0 %v119
    %692 = vmatpush1.msra.mxu0 %v118
    %693 = vmatprep.subr.mxu0 %v123
    %694 = vmatpush1.msra.mxu0 %v122
    %695 = vmatprep.subr.mxu0 %v127
    %696 = vmatpush1.msra.mxu0 %v126
    %697 = vmatprep.subr.mxu0 %v131
    %698 = vmatpush1.msra.mxu0 %v130
    %699 = vmatprep.subr.mxu0 %v135
    %700 = vmatpush1.msra.mxu0 %v134
    %701 = vmatprep.subr.mxu0 %v139
    %702 = vmatpush1.msra.mxu0 %v138
    %703 = vmatprep.subr.mxu0 %v143
    %704 = vmatpush1.msra.mxu0 %v142
    %705 = vmatprep.subr.mxu0 0.0
    %706 = vmatpush1.msra.mxu0 0.0
    %707 = vmatprep.subr.mxu0 0.0
    %708 = vmatpush1.msra.mxu0 0.0
    %709 = vmatprep.subr.mxu0 0.0
    %710 = vmatpush1.msra.mxu0 0.0
    %711 = vmatprep.subr.mxu0 0.0
    %712 = vmatpush1.msra.mxu0 0.0
    %713 = vmatprep.subr.mxu0 0.0
    %714 = vmatpush1.msra.mxu0 0.0
    %715 = vmatprep.subr.mxu0 0.0
    %716 = vmatpush1.msra.mxu0 0.0
    %717 = vmatprep.subr.mxu0 0.0
    %718 = vmatpush1.msra.mxu0 0.0
    %719 = vmatprep.subr.mxu0 0.0
    %720 = vmatpush1.msra.mxu0 0.0
    %721 = vmatprep.subr.mxu0 0.0
    %722 = vmatpush1.msra.mxu0 0.0
    %723 = vmatprep.subr.mxu0 0.0
    %724 = vmatpush1.msra.mxu0 0.0
    %725 = vmatprep.subr.mxu0 0.0
    %726 = vmatpush1.msra.mxu0 0.0
    %727 = vmatprep.subr.mxu0 0.0
    %728 = vmatpush1.msra.mxu0 0.0
    %729 = vmatprep.subr.mxu0 0.0
    %730 = vmatpush1.msra.mxu0 0.0
    %731 = vmatprep.subr.mxu0 0.0
    %732 = vmatpush1.msra.mxu0 0.0
    %733 = vmatprep.subr.mxu0 0.0
    %734 = vmatpush1.msra.mxu0 0.0
    %735 = vmatprep.subr.mxu0 0.0
    %736 = vmatpush1.msra.mxu0 0.0
    %737 = vmatprep.mubr.f32.mxu0 0.0
    %738 = vmatmul.mubr.f32.gmra.mrb[0].mxu0 %v669
    %v739 = vpop.f32.mrb[0].mxu0
    %v740 = vadd.f32 0.0, %v739
    %v741 = vpop.f32.mrb[0].mxu0
    %v742 = vadd.f32 0.0, %v741
    %743 = vdwg.mxu0
    %744 = vmatprep.subr.mxu0 %v85
    %745 = vmatpush1.msra.mxu0 %v84
    %746 = vmatprep.subr.mxu0 %v89
    %747 = vmatpush1.msra.mxu0 %v88
    %748 = vmatprep.subr.mxu0 %v93
    %749 = vmatpush1.msra.mxu0 %v92
    %750 = vmatprep.subr.mxu0 %v97
    %751 = vmatpush1.msra.mxu0 %v96
    %752 = vmatprep.subr.mxu0 %v101
    %753 = vmatpush1.msra.mxu0 %v100
    %754 = vmatprep.subr.mxu0 %v105
    %755 = vmatpush1.msra.mxu0 %v104
    %756 = vmatprep.subr.mxu0 %v109
    %757 = vmatpush1.msra.mxu0 %v108
    %758 = vmatprep.subr.mxu0 %v113
    %759 = vmatpush1.msra.mxu0 %v112
    %760 = vmatprep.subr.mxu0 %v117
    %761 = vmatpush1.msra.mxu0 %v116
    %762 = vmatprep.subr.mxu0 %v121
    %763 = vmatpush1.msra.mxu0 %v120
    %764 = vmatprep.subr.mxu0 %v125
    %765 = vmatpush1.msra.mxu0 %v124
    %766 = vmatprep.subr.mxu0 %v129
    %767 = vmatpush1.msra.mxu0 %v128
    %768 = vmatprep.subr.mxu0 %v133
    %769 = vmatpush1.msra.mxu0 %v132
    %770 = vmatprep.subr.mxu0 %v137
    %771 = vmatpush1.msra.mxu0 %v136
    %772 = vmatprep.subr.mxu0 %v141
    %773 = vmatpush1.msra.mxu0 %v140
    %774 = vmatprep.subr.mxu0 %v145
    %775 = vmatpush1.msra.mxu0 %v144
    %776 = vmatprep.subr.mxu0 0.0
    %777 = vmatpush1.msra.mxu0 0.0
    %778 = vmatprep.subr.mxu0 0.0
    %779 = vmatpush1.msra.mxu0 0.0
    %780 = vmatprep.subr.mxu0 0.0
    %781 = vmatpush1.msra.mxu0 0.0
    %782 = vmatprep.subr.mxu0 0.0
    %783 = vmatpush1.msra.mxu0 0.0
    %784 = vmatprep.subr.mxu0 0.0
    %785 = vmatpush1.msra.mxu0 0.0
    %786 = vmatprep.subr.mxu0 0.0
    %787 = vmatpush1.msra.mxu0 0.0
    %788 = vmatprep.subr.mxu0 0.0
    %789 = vmatpush1.msra.mxu0 0.0
    %790 = vmatprep.subr.mxu0 0.0
    %791 = vmatpush1.msra.mxu0 0.0
    %792 = vmatprep.subr.mxu0 0.0
    %793 = vmatpush1.msra.mxu0 0.0
    %794 = vmatprep.subr.mxu0 0.0
    %795 = vmatpush1.msra.mxu0 0.0
    %796 = vmatprep.subr.mxu0 0.0
    %797 = vmatpush1.msra.mxu0 0.0
    %798 = vmatprep.subr.mxu0 0.0
    %799 = vmatpush1.msra.mxu0 0.0
    %800 = vmatprep.subr.mxu0 0.0
    %801 = vmatpush1.msra.mxu0 0.0
    %802 = vmatprep.subr.mxu0 0.0
    %803 = vmatpush1.msra.mxu0 0.0
    %804 = vmatprep.subr.mxu0 0.0
    %805 = vmatpush1.msra.mxu0 0.0
    %806 = vmatprep.subr.mxu0 0.0
    %807 = vmatpush1.msra.mxu0 0.0
    %808 = vmatprep.mubr.f32.mxu0 0.0
    %809 = vmatmul.mubr.f32.gmra.mrb[0].mxu0 %v669
    %v810 = vpop.f32.mrb[0].mxu0
    %v811 = vadd.f32 0.0, %v810
    %v812 = vpop.f32.mrb[0].mxu0
    %v813 = vadd.f32 0.0, %v812
    %814 = vdwg.mxu0
    %v819 = vcombine.low %v740, %v742
    %v820 = vcombine.low %v811, %v813
    %v822 = vunpack.c.l.s4 1983009808
    %v823 = vunpack.c.0.s8 %v822
    %v824 = vlaneseq
    %v825 = vshrl.u32 %v824, 7
    %v826 = vsub.s32 %v823, %v825
    %v827 = vrot.slane %v819, %v826
    %v829 = vunpack.c.l.s4 1983009808
    %v830 = vunpack.c.0.s8 %v829
    %v831 = vlaneseq
    %v832 = vshrl.u32 %v831, 7
    %v833 = vsub.s32 %v830, %v832
    %v834 = vrot.slane %v820, %v833
    %v835 = vcombine.low %v827, %v834
    %v837 = vadd.f32 %v672, %v835
    %v838 = vxor.u32 %v837, 2147483648
    %v839 = vmul.f32 %v838, 1.442695
    %v840 = vpow.pop %v839
    %v841 = vadd.f32 %v840, 1.0
    %v842 = vrcp.pop %v841
    %v843 = vmul.f32 1.0, %v842
    %v845 = vrot.slane %v837, 2
    %v847 = vxor.u32 %v845, 2147483648
    %v848 = vmul.f32 %v847, 1.442695
    %v849 = vpow.pop %v848
    %v850 = vadd.f32 %v849, 1.0
    %v851 = vrcp.pop %v850
    %v852 = vmul.f32 1.0, %v851
    %v853 = vrot.slane %v837, 4
    %v855 = vtanh.pop %v853
    %v856 = vrot.slane %v837, 6
    %v858 = vxor.u32 %v856, 2147483648
    %v859 = vmul.f32 %v858, 1.442695
    %v860 = vpow.pop %v859
    %v861 = vadd.f32 %v860, 1.0
    %v862 = vrcp.pop %v861
    %v863 = vmul.f32 1.0, %v862
    %v864 = vmul.f32 %v852, %v667
    %v865 = vmul.f32 %v843, %v855
    %v866 = vadd.f32 %v864, %v865
    %v867 = vtanh.pop %v866
    %v868 = vmul.f32 %v863, %v867
    %s869 = scalar_lea.vmem [#allocation3], 2
    %870 = vst [vmem:[%s869] sm:$0x3] %v868
    %s871 = scalar_lea.vmem [#allocation2], 16
    %v872 = vld [vmem:[%s871] sm:$0xff]
    %873 = vmatprep.subr.mxu0 %v83
    %874 = vmatpush1.msra.mxu0 %v82
    %875 = vmatprep.subr.mxu0 %v87
    %876 = vmatpush1.msra.mxu0 %v86
    %877 = vmatprep.subr.mxu0 %v91
    %878 = vmatpush1.msra.mxu0 %v90
    %879 = vmatprep.subr.mxu0 %v95
    %880 = vmatpush1.msra.mxu0 %v94
    %881 = vmatprep.subr.mxu0 %v99
    %882 = vmatpush1.msra.mxu0 %v98
    %883 = vmatprep.subr.mxu0 %v103
    %884 = vmatpush1.msra.mxu0 %v102
    %885 = vmatprep.subr.mxu0 %v107
    %886 = vmatpush1.msra.mxu0 %v106
    %887 = vmatprep.subr.mxu0 %v111
    %888 = vmatpush1.msra.mxu0 %v110
    %889 = vmatprep.subr.mxu0 %v115
    %890 = vmatpush1.msra.mxu0 %v114
    %891 = vmatprep.subr.mxu0 %v119
    %892 = vmatpush1.msra.mxu0 %v118
    %893 = vmatprep.subr.mxu0 %v123
    %894 = vmatpush1.msra.mxu0 %v122
    %895 = vmatprep.subr.mxu0 %v127
    %896 = vmatpush1.msra.mxu0 %v126
    %897 = vmatprep.subr.mxu0 %v131
    %898 = vmatpush1.msra.mxu0 %v130
    %899 = vmatprep.subr.mxu0 %v135
    %900 = vmatpush1.msra.mxu0 %v134
    %901 = vmatprep.subr.mxu0 %v139
    %902 = vmatpush1.msra.mxu0 %v138
    %903 = vmatprep.subr.mxu0 %v143
    %904 = vmatpush1.msra.mxu0 %v142
    %905 = vmatprep.subr.mxu0 0.0
    %906 = vmatpush1.msra.mxu0 0.0
    %907 = vmatprep.subr.mxu0 0.0
    %908 = vmatpush1.msra.mxu0 0.0
    %909 = vmatprep.subr.mxu0 0.0
    %910 = vmatpush1.msra.mxu0 0.0
    %911 = vmatprep.subr.mxu0 0.0
    %912 = vmatpush1.msra.mxu0 0.0
    %913 = vmatprep.subr.mxu0 0.0
    %914 = vmatpush1.msra.mxu0 0.0
    %915 = vmatprep.subr.mxu0 0.0
    %916 = vmatpush1.msra.mxu0 0.0
    %917 = vmatprep.subr.mxu0 0.0
    %918 = vmatpush1.msra.mxu0 0.0
    %919 = vmatprep.subr.mxu0 0.0
    %920 = vmatpush1.msra.mxu0 0.0
    %921 = vmatprep.subr.mxu0 0.0
    %922 = vmatpush1.msra.mxu0 0.0
    %923 = vmatprep.subr.mxu0 0.0
    %924 = vmatpush1.msra.mxu0 0.0
    %925 = vmatprep.subr.mxu0 0.0
    %926 = vmatpush1.msra.mxu0 0.0
    %927 = vmatprep.subr.mxu0 0.0
    %928 = vmatpush1.msra.mxu0 0.0
    %929 = vmatprep.subr.mxu0 0.0
    %930 = vmatpush1.msra.mxu0 0.0
    %931 = vmatprep.subr.mxu0 0.0
    %932 = vmatpush1.msra.mxu0 0.0
    %933 = vmatprep.subr.mxu0 0.0
    %934 = vmatpush1.msra.mxu0 0.0
    %935 = vmatprep.subr.mxu0 0.0
    %936 = vmatpush1.msra.mxu0 0.0
    %937 = vmatprep.mubr.f32.mxu0 0.0
    %938 = vmatmul.mubr.f32.gmra.mrb[0].mxu0 %v868
    %v939 = vpop.f32.mrb[0].mxu0
    %v940 = vadd.f32 0.0, %v939
    %v941 = vpop.f32.mrb[0].mxu0
    %v942 = vadd.f32 0.0, %v941
    %943 = vdwg.mxu0
    %944 = vmatprep.subr.mxu0 %v85
    %945 = vmatpush1.msra.mxu0 %v84
    %946 = vmatprep.subr.mxu0 %v89
    %947 = vmatpush1.msra.mxu0 %v88
    %948 = vmatprep.subr.mxu0 %v93
    %949 = vmatpush1.msra.mxu0 %v92
    %950 = vmatprep.subr.mxu0 %v97
    %951 = vmatpush1.msra.mxu0 %v96
    %952 = vmatprep.subr.mxu0 %v101
    %953 = vmatpush1.msra.mxu0 %v100
    %954 = vmatprep.subr.mxu0 %v105
    %955 = vmatpush1.msra.mxu0 %v104
    %956 = vmatprep.subr.mxu0 %v109
    %957 = vmatpush1.msra.mxu0 %v108
    %958 = vmatprep.subr.mxu0 %v113
    %959 = vmatpush1.msra.mxu0 %v112
    %960 = vmatprep.subr.mxu0 %v117
    %961 = vmatpush1.msra.mxu0 %v116
    %962 = vmatprep.subr.mxu0 %v121
    %963 = vmatpush1.msra.mxu0 %v120
    %964 = vmatprep.subr.mxu0 %v125
    %965 = vmatpush1.msra.mxu0 %v124
    %966 = vmatprep.subr.mxu0 %v129
    %967 = vmatpush1.msra.mxu0 %v128
    %968 = vmatprep.subr.mxu0 %v133
    %969 = vmatpush1.msra.mxu0 %v132
    %970 = vmatprep.subr.mxu0 %v137
    %971 = vmatpush1.msra.mxu0 %v136
    %972 = vmatprep.subr.mxu0 %v141
    %973 = vmatpush1.msra.mxu0 %v140
    %974 = vmatprep.subr.mxu0 %v145
    %975 = vmatpush1.msra.mxu0 %v144
    %976 = vmatprep.subr.mxu0 0.0
    %977 = vmatpush1.msra.mxu0 0.0
    %978 = vmatprep.subr.mxu0 0.0
    %979 = vmatpush1.msra.mxu0 0.0
    %980 = vmatprep.subr.mxu0 0.0
    %981 = vmatpush1.msra.mxu0 0.0
    %982 = vmatprep.subr.mxu0 0.0
    %983 = vmatpush1.msra.mxu0 0.0
    %984 = vmatprep.subr.mxu0 0.0
    %985 = vmatpush1.msra.mxu0 0.0
    %986 = vmatprep.subr.mxu0 0.0
    %987 = vmatpush1.msra.mxu0 0.0
    %988 = vmatprep.subr.mxu0 0.0
    %989 = vmatpush1.msra.mxu0 0.0
    %990 = vmatprep.subr.mxu0 0.0
    %991 = vmatpush1.msra.mxu0 0.0
    %992 = vmatprep.subr.mxu0 0.0
    %993 = vmatpush1.msra.mxu0 0.0
    %994 = vmatprep.subr.mxu0 0.0
    %995 = vmatpush1.msra.mxu0 0.0
    %996 = vmatprep.subr.mxu0 0.0
    %997 = vmatpush1.msra.mxu0 0.0
    %998 = vmatprep.subr.mxu0 0.0
    %999 = vmatpush1.msra.mxu0 0.0
    %1000 = vmatprep.subr.mxu0 0.0
    %1001 = vmatpush1.msra.mxu0 0.0
    %1002 = vmatprep.subr.mxu0 0.0
    %1003 = vmatpush1.msra.mxu0 0.0
    %1004 = vmatprep.subr.mxu0 0.0
    %1005 = vmatpush1.msra.mxu0 0.0
    %1006 = vmatprep.subr.mxu0 0.0
    %1007 = vmatpush1.msra.mxu0 0.0
    %1008 = vmatprep.mubr.f32.mxu0 0.0
    %1009 = vmatmul.mubr.f32.gmra.mrb[0].mxu0 %v868
    %v1010 = vpop.f32.mrb[0].mxu0
    %v1011 = vadd.f32 0.0, %v1010
    %v1012 = vpop.f32.mrb[0].mxu0
    %v1013 = vadd.f32 0.0, %v1012
    %1014 = vdwg.mxu0
    %v1019 = vcombine.low %v940, %v942
    %v1020 = vcombine.low %v1011, %v1013
    %v1022 = vunpack.c.l.s4 1983009808
    %v1023 = vunpack.c.0.s8 %v1022
    %v1024 = vlaneseq
    %v1025 = vshrl.u32 %v1024, 7
    %v1026 = vsub.s32 %v1023, %v1025
    %v1027 = vrot.slane %v1019, %v1026
    %v1029 = vunpack.c.l.s4 1983009808
    %v1030 = vunpack.c.0.s8 %v1029
    %v1031 = vlaneseq
    %v1032 = vshrl.u32 %v1031, 7
    %v1033 = vsub.s32 %v1030, %v1032
    %v1034 = vrot.slane %v1020, %v1033
    %v1035 = vcombine.low %v1027, %v1034
    %v1037 = vadd.f32 %v872, %v1035
    %v1038 = vxor.u32 %v1037, 2147483648
    %v1039 = vmul.f32 %v1038, 1.442695
    %v1040 = vpow.pop %v1039
    %v1041 = vadd.f32 %v1040, 1.0
    %v1042 = vrcp.pop %v1041
    %v1043 = vmul.f32 1.0, %v1042
    %v1045 = vrot.slane %v1037, 2
    %v1047 = vxor.u32 %v1045, 2147483648
    %v1048 = vmul.f32 %v1047, 1.442695
    %v1049 = vpow.pop %v1048
    %v1050 = vadd.f32 %v1049, 1.0
    %v1051 = vrcp.pop %v1050
    %v1052 = vmul.f32 1.0, %v1051
    %v1053 = vrot.slane %v1037, 4
    %v1055 = vtanh.pop %v1053
    %v1056 = vrot.slane %v1037, 6
    %v1058 = vxor.u32 %v1056, 2147483648
    %v1059 = vmul.f32 %v1058, 1.442695
    %v1060 = vpow.pop %v1059
    %v1061 = vadd.f32 %v1060, 1.0
    %v1062 = vrcp.pop %v1061
    %v1063 = vmul.f32 1.0, %v1062
    %v1064 = vmul.f32 %v1052, %v866
    %v1065 = vmul.f32 %v1043, %v1055
    %v1066 = vadd.f32 %v1064, %v1065
    %v1067 = vtanh.pop %v1066
    %v1068 = vmul.f32 %v1063, %v1067
    %s1069 = scalar_lea.vmem [#allocation3], 4
    %1070 = vst [vmem:[%s1069] sm:$0x3] %v1068
    %s1071 = scalar_lea.vmem [#allocation2], 24
    %v1072 = vld [vmem:[%s1071] sm:$0xff]
    %1073 = vmatprep.subr.mxu0 %v83
    %1074 = vmatpush1.msra.mxu0 %v82
    %1075 = vmatprep.subr.mxu0 %v87
    %1076 = vmatpush1.msra.mxu0 %v86
    %1077 = vmatprep.subr.mxu0 %v91
    %1078 = vmatpush1.msra.mxu0 %v90
    %1079 = vmatprep.subr.mxu0 %v95
    %1080 = vmatpush1.msra.mxu0 %v94
    %1081 = vmatprep.subr.mxu0 %v99
    %1082 = vmatpush1.msra.mxu0 %v98
    %1083 = vmatprep.subr.mxu0 %v103
    %1084 = vmatpush1.msra.mxu0 %v102
    %1085 = vmatprep.subr.mxu0 %v107
    %1086 = vmatpush1.msra.mxu0 %v106
    %1087 = vmatprep.subr.mxu0 %v111
    %1088 = vmatpush1.msra.mxu0 %v110
    %1089 = vmatprep.subr.mxu0 %v115
    %1090 = vmatpush1.msra.mxu0 %v114
    %1091 = vmatprep.subr.mxu0 %v119
    %1092 = vmatpush1.msra.mxu0 %v118
    %1093 = vmatprep.subr.mxu0 %v123
    %1094 = vmatpush1.msra.mxu0 %v122
    %1095 = vmatprep.subr.mxu0 %v127
    %1096 = vmatpush1.msra.mxu0 %v126
    %1097 = vmatprep.subr.mxu0 %v131
    %1098 = vmatpush1.msra.mxu0 %v130
    %1099 = vmatprep.subr.mxu0 %v135
    %1100 = vmatpush1.msra.mxu0 %v134
    %1101 = vmatprep.subr.mxu0 %v139
    %1102 = vmatpush1.msra.mxu0 %v138
    %1103 = vmatprep.subr.mxu0 %v143
    %1104 = vmatpush1.msra.mxu0 %v142
    %1105 = vmatprep.subr.mxu0 0.0
    %1106 = vmatpush1.msra.mxu0 0.0
    %1107 = vmatprep.subr.mxu0 0.0
    %1108 = vmatpush1.msra.mxu0 0.0
    %1109 = vmatprep.subr.mxu0 0.0
    %1110 = vmatpush1.msra.mxu0 0.0
    %1111 = vmatprep.subr.mxu0 0.0
    %1112 = vmatpush1.msra.mxu0 0.0
    %1113 = vmatprep.subr.mxu0 0.0
    %1114 = vmatpush1.msra.mxu0 0.0
    %1115 = vmatprep.subr.mxu0 0.0
    %1116 = vmatpush1.msra.mxu0 0.0
    %1117 = vmatprep.subr.mxu0 0.0
    %1118 = vmatpush1.msra.mxu0 0.0
    %1119 = vmatprep.subr.mxu0 0.0
    %1120 = vmatpush1.msra.mxu0 0.0
    %1121 = vmatprep.subr.mxu0 0.0
    %1122 = vmatpush1.msra.mxu0 0.0
    %1123 = vmatprep.subr.mxu0 0.0
    %1124 = vmatpush1.msra.mxu0 0.0
    %1125 = vmatprep.subr.mxu0 0.0
    %1126 = vmatpush1.msra.mxu0 0.0
    %1127 = vmatprep.subr.mxu0 0.0
    %1128 = vmatpush1.msra.mxu0 0.0
    %1129 = vmatprep.subr.mxu0 0.0
    %1130 = vmatpush1.msra.mxu0 0.0
    %1131 = vmatprep.subr.mxu0 0.0
    %1132 = vmatpush1.msra.mxu0 0.0
    %1133 = vmatprep.subr.mxu0 0.0
    %1134 = vmatpush1.msra.mxu0 0.0
    %1135 = vmatprep.subr.mxu0 0.0
    %1136 = vmatpush1.msra.mxu0 0.0
    %1137 = vmatprep.mubr.f32.mxu0 0.0
    %1138 = vmatmul.mubr.f32.gmra.mrb[0].mxu0 %v1068
    %v1139 = vpop.f32.mrb[0].mxu0
    %v1140 = vadd.f32 0.0, %v1139
    %v1141 = vpop.f32.mrb[0].mxu0
    %v1142 = vadd.f32 0.0, %v1141
    %1143 = vdwg.mxu0
    %1144 = vmatprep.subr.mxu0 %v85
    %1145 = vmatpush1.msra.mxu0 %v84
    %1146 = vmatprep.subr.mxu0 %v89
    %1147 = vmatpush1.msra.mxu0 %v88
    %1148 = vmatprep.subr.mxu0 %v93
    %1149 = vmatpush1.msra.mxu0 %v92
    %1150 = vmatprep.subr.mxu0 %v97
    %1151 = vmatpush1.msra.mxu0 %v96
    %1152 = vmatprep.subr.mxu0 %v101
    %1153 = vmatpush1.msra.mxu0 %v100
    %1154 = vmatprep.subr.mxu0 %v105
    %1155 = vmatpush1.msra.mxu0 %v104
    %1156 = vmatprep.subr.mxu0 %v109
    %1157 = vmatpush1.msra.mxu0 %v108
    %1158 = vmatprep.subr.mxu0 %v113
    %1159 = vmatpush1.msra.mxu0 %v112
    %1160 = vmatprep.subr.mxu0 %v117
    %1161 = vmatpush1.msra.mxu0 %v116
    %1162 = vmatprep.subr.mxu0 %v121
    %1163 = vmatpush1.msra.mxu0 %v120
    %1164 = vmatprep.subr.mxu0 %v125
    %1165 = vmatpush1.msra.mxu0 %v124
    %1166 = vmatprep.subr.mxu0 %v129
    %1167 = vmatpush1.msra.mxu0 %v128
    %1168 = vmatprep.subr.mxu0 %v133
    %1169 = vmatpush1.msra.mxu0 %v132
    %1170 = vmatprep.subr.mxu0 %v137
    %1171 = vmatpush1.msra.mxu0 %v136
    %1172 = vmatprep.subr.mxu0 %v141
    %1173 = vmatpush1.msra.mxu0 %v140
    %1174 = vmatprep.subr.mxu0 %v145
    %1175 = vmatpush1.msra.mxu0 %v144
    %1176 = vmatprep.subr.mxu0 0.0
    %1177 = vmatpush1.msra.mxu0 0.0
    %1178 = vmatprep.subr.mxu0 0.0
    %1179 = vmatpush1.msra.mxu0 0.0
    %1180 = vmatprep.subr.mxu0 0.0
    %1181 = vmatpush1.msra.mxu0 0.0
    %1182 = vmatprep.subr.mxu0 0.0
    %1183 = vmatpush1.msra.mxu0 0.0
    %1184 = vmatprep.subr.mxu0 0.0
    %1185 = vmatpush1.msra.mxu0 0.0
    %1186 = vmatprep.subr.mxu0 0.0
    %1187 = vmatpush1.msra.mxu0 0.0
    %1188 = vmatprep.subr.mxu0 0.0
    %1189 = vmatpush1.msra.mxu0 0.0
    %1190 = vmatprep.subr.mxu0 0.0
    %1191 = vmatpush1.msra.mxu0 0.0
    %1192 = vmatprep.subr.mxu0 0.0
    %1193 = vmatpush1.msra.mxu0 0.0
    %1194 = vmatprep.subr.mxu0 0.0
    %1195 = vmatpush1.msra.mxu0 0.0
    %1196 = vmatprep.subr.mxu0 0.0
    %1197 = vmatpush1.msra.mxu0 0.0
    %1198 = vmatprep.subr.mxu0 0.0
    %1199 = vmatpush1.msra.mxu0 0.0
    %1200 = vmatprep.subr.mxu0 0.0
    %1201 = vmatpush1.msra.mxu0 0.0
    %1202 = vmatprep.subr.mxu0 0.0
    %1203 = vmatpush1.msra.mxu0 0.0
    %1204 = vmatprep.subr.mxu0 0.0
    %1205 = vmatpush1.msra.mxu0 0.0
    %1206 = vmatprep.subr.mxu0 0.0
    %1207 = vmatpush1.msra.mxu0 0.0
    %1208 = vmatprep.mubr.f32.mxu0 0.0
    %1209 = vmatmul.mubr.f32.gmra.mrb[0].mxu0 %v1068
    %v1210 = vpop.f32.mrb[0].mxu0
    %v1211 = vadd.f32 0.0, %v1210
    %v1212 = vpop.f32.mrb[0].mxu0
    %v1213 = vadd.f32 0.0, %v1212
    %1214 = vdwg.mxu0
    %v1219 = vcombine.low %v1140, %v1142
    %v1220 = vcombine.low %v1211, %v1213
    %v1222 = vunpack.c.l.s4 1983009808
    %v1223 = vunpack.c.0.s8 %v1222
    %v1224 = vlaneseq
    %v1225 = vshrl.u32 %v1224, 7
    %v1226 = vsub.s32 %v1223, %v1225
    %v1227 = vrot.slane %v1219, %v1226
    %v1229 = vunpack.c.l.s4 1983009808
    %v1230 = vunpack.c.0.s8 %v1229
    %v1231 = vlaneseq
    %v1232 = vshrl.u32 %v1231, 7
    %v1233 = vsub.s32 %v1230, %v1232
    %v1234 = vrot.slane %v1220, %v1233
    %v1235 = vcombine.low %v1227, %v1234
    %v1237 = vadd.f32 %v1072, %v1235
    %v1238 = vxor.u32 %v1237, 2147483648
    %v1239 = vmul.f32 %v1238, 1.442695
    %v1240 = vpow.pop %v1239
    %v1241 = vadd.f32 %v1240, 1.0
    %v1242 = vrcp.pop %v1241
    %v1243 = vmul.f32 1.0, %v1242
    %v1245 = vrot.slane %v1237, 2
    %v1247 = vxor.u32 %v1245, 2147483648
    %v1248 = vmul.f32 %v1247, 1.442695
    %v1249 = vpow.pop %v1248
    %v1250 = vadd.f32 %v1249, 1.0
    %v1251 = vrcp.pop %v1250
    %v1252 = vmul.f32 1.0, %v1251
    %v1253 = vrot.slane %v1237, 4
    %v1255 = vtanh.pop %v1253
    %v1256 = vrot.slane %v1237, 6
    %v1258 = vxor.u32 %v1256, 2147483648
    %v1259 = vmul.f32 %v1258, 1.442695
    %v1260 = vpow.pop %v1259
    %v1261 = vadd.f32 %v1260, 1.0
    %v1262 = vrcp.pop %v1261
    %v1263 = vmul.f32 1.0, %v1262
    %v1264 = vmul.f32 %v1252, %v1066
    %v1265 = vmul.f32 %v1243, %v1255
    %v1266 = vadd.f32 %v1264, %v1265
    %v1267 = vtanh.pop %v1266
    %v1268 = vmul.f32 %v1263, %v1267
    %s1269 = scalar_lea.vmem [#allocation3], 6
    %1270 = vst [vmem:[%s1269] sm:$0x3] %v1268
    %s1271 = scalar_lea.vmem [#allocation2], 32
    %v1272 = vld [vmem:[%s1271] sm:$0xff]
    %1273 = vmatprep.subr.mxu0 %v83
    %1274 = vmatpush1.msra.mxu0 %v82
    %1275 = vmatprep.subr.mxu0 %v87
    %1276 = vmatpush1.msra.mxu0 %v86
    %1277 = vmatprep.subr.mxu0 %v91
    %1278 = vmatpush1.msra.mxu0 %v90
    %1279 = vmatprep.subr.mxu0 %v95
    %1280 = vmatpush1.msra.mxu0 %v94
    %1281 = vmatprep.subr.mxu0 %v99
    %1282 = vmatpush1.msra.mxu0 %v98
    %1283 = vmatprep.subr.mxu0 %v103
    %1284 = vmatpush1.msra.mxu0 %v102
    %1285 = vmatprep.subr.mxu0 %v107
    %1286 = vmatpush1.msra.mxu0 %v106
    %1287 = vmatprep.subr.mxu0 %v111
    %1288 = vmatpush1.msra.mxu0 %v110
    %1289 = vmatprep.subr.mxu0 %v115
    %1290 = vmatpush1.msra.mxu0 %v114
    %1291 = vmatprep.subr.mxu0 %v119
    %1292 = vmatpush1.msra.mxu0 %v118
    %1293 = vmatprep.subr.mxu0 %v123
    %1294 = vmatpush1.msra.mxu0 %v122
    %1295 = vmatprep.subr.mxu0 %v127
    %1296 = vmatpush1.msra.mxu0 %v126
    %1297 = vmatprep.subr.mxu0 %v131
    %1298 = vmatpush1.msra.mxu0 %v130
    %1299 = vmatprep.subr.mxu0 %v135
    %1300 = vmatpush1.msra.mxu0 %v134
    %1301 = vmatprep.subr.mxu0 %v139
    %1302 = vmatpush1.msra.mxu0 %v138
    %1303 = vmatprep.subr.mxu0 %v143
    %1304 = vmatpush1.msra.mxu0 %v142
    %1305 = vmatprep.subr.mxu0 0.0
    %1306 = vmatpush1.msra.mxu0 0.0
    %1307 = vmatprep.subr.mxu0 0.0
    %1308 = vmatpush1.msra.mxu0 0.0
    %1309 = vmatprep.subr.mxu0 0.0
    %1310 = vmatpush1.msra.mxu0 0.0
    %1311 = vmatprep.subr.mxu0 0.0
    %1312 = vmatpush1.msra.mxu0 0.0
    %1313 = vmatprep.subr.mxu0 0.0
    %1314 = vmatpush1.msra.mxu0 0.0
    %1315 = vmatprep.subr.mxu0 0.0
    %1316 = vmatpush1.msra.mxu0 0.0
    %1317 = vmatprep.subr.mxu0 0.0
    %1318 = vmatpush1.msra.mxu0 0.0
    %1319 = vmatprep.subr.mxu0 0.0
    %1320 = vmatpush1.msra.mxu0 0.0
    %1321 = vmatprep.subr.mxu0 0.0
    %1322 = vmatpush1.msra.mxu0 0.0
    %1323 = vmatprep.subr.mxu0 0.0
    %1324 = vmatpush1.msra.mxu0 0.0
    %1325 = vmatprep.subr.mxu0 0.0
    %1326 = vmatpush1.msra.mxu0 0.0
    %1327 = vmatprep.subr.mxu0 0.0
    %1328 = vmatpush1.msra.mxu0 0.0
    %1329 = vmatprep.subr.mxu0 0.0
    %1330 = vmatpush1.msra.mxu0 0.0
    %1331 = vmatprep.subr.mxu0 0.0
    %1332 = vmatpush1.msra.mxu0 0.0
    %1333 = vmatprep.subr.mxu0 0.0
    %1334 = vmatpush1.msra.mxu0 0.0
    %1335 = vmatprep.subr.mxu0 0.0
    %1336 = vmatpush1.msra.mxu0 0.0
    %1337 = vmatprep.mubr.f32.mxu0 0.0
    %1338 = vmatmul.mubr.f32.gmra.mrb[0].mxu0 %v1268
    %v1339 = vpop.f32.mrb[0].mxu0
    %v1340 = vadd.f32 0.0, %v1339
    %v1341 = vpop.f32.mrb[0].mxu0
    %v1342 = vadd.f32 0.0, %v1341
    %1343 = vdwg.mxu0
    %1344 = vmatprep.subr.mxu0 %v85
    %1345 = vmatpush1.msra.mxu0 %v84
    %1346 = vmatprep.subr.mxu0 %v89
    %1347 = vmatpush1.msra.mxu0 %v88
    %1348 = vmatprep.subr.mxu0 %v93
    %1349 = vmatpush1.msra.mxu0 %v92
    %1350 = vmatprep.subr.mxu0 %v97
    %1351 = vmatpush1.msra.mxu0 %v96
    %1352 = vmatprep.subr.mxu0 %v101
    %1353 = vmatpush1.msra.mxu0 %v100
    %1354 = vmatprep.subr.mxu0 %v105
    %1355 = vmatpush1.msra.mxu0 %v104
    %1356 = vmatprep.subr.mxu0 %v109
    %1357 = vmatpush1.msra.mxu0 %v108
    %1358 = vmatprep.subr.mxu0 %v113
    %1359 = vmatpush1.msra.mxu0 %v112
    %1360 = vmatprep.subr.mxu0 %v117
    %1361 = vmatpush1.msra.mxu0 %v116
    %1362 = vmatprep.subr.mxu0 %v121
    %1363 = vmatpush1.msra.mxu0 %v120
    %1364 = vmatprep.subr.mxu0 %v125
    %1365 = vmatpush1.msra.mxu0 %v124
    %1366 = vmatprep.subr.mxu0 %v129
    %1367 = vmatpush1.msra.mxu0 %v128
    %1368 = vmatprep.subr.mxu0 %v133
    %1369 = vmatpush1.msra.mxu0 %v132
    %1370 = vmatprep.subr.mxu0 %v137
    %1371 = vmatpush1.msra.mxu0 %v136
    %1372 = vmatprep.subr.mxu0 %v141
    %1373 = vmatpush1.msra.mxu0 %v140
    %1374 = vmatprep.subr.mxu0 %v145
    %1375 = vmatpush1.msra.mxu0 %v144
    %1376 = vmatprep.subr.mxu0 0.0
    %1377 = vmatpush1.msra.mxu0 0.0
    %1378 = vmatprep.subr.mxu0 0.0
    %1379 = vmatpush1.msra.mxu0 0.0
    %1380 = vmatprep.subr.mxu0 0.0
    %1381 = vmatpush1.msra.mxu0 0.0
    %1382 = vmatprep.subr.mxu0 0.0
    %1383 = vmatpush1.msra.mxu0 0.0
    %1384 = vmatprep.subr.mxu0 0.0
    %1385 = vmatpush1.msra.mxu0 0.0
    %1386 = vmatprep.subr.mxu0 0.0
    %1387 = vmatpush1.msra.mxu0 0.0
    %1388 = vmatprep.subr.mxu0 0.0
    %1389 = vmatpush1.msra.mxu0 0.0
    %1390 = vmatprep.subr.mxu0 0.0
    %1391 = vmatpush1.msra.mxu0 0.0
    %1392 = vmatprep.subr.mxu0 0.0
    %1393 = vmatpush1.msra.mxu0 0.0
    %1394 = vmatprep.subr.mxu0 0.0
    %1395 = vmatpush1.msra.mxu0 0.0
    %1396 = vmatprep.subr.mxu0 0.0
    %1397 = vmatpush1.msra.mxu0 0.0
    %1398 = vmatprep.subr.mxu0 0.0
    %1399 = vmatpush1.msra.mxu0 0.0
    %1400 = vmatprep.subr.mxu0 0.0
    %1401 = vmatpush1.msra.mxu0 0.0
    %1402 = vmatprep.subr.mxu0 0.0
    %1403 = vmatpush1.msra.mxu0 0.0
    %1404 = vmatprep.subr.mxu0 0.0
    %1405 = vmatpush1.msra.mxu0 0.0
    %1406 = vmatprep.subr.mxu0 0.0
    %1407 = vmatpush1.msra.mxu0 0.0
    %1408 = vmatprep.mubr.f32.mxu0 0.0
    %1409 = vmatmul.mubr.f32.gmra.mrb[0].mxu0 %v1268
    %v1410 = vpop.f32.mrb[0].mxu0
    %v1411 = vadd.f32 0.0, %v1410
    %v1412 = vpop.f32.mrb[0].mxu0
    %v1413 = vadd.f32 0.0, %v1412
    %1414 = vdwg.mxu0
    %v1419 = vcombine.low %v1340, %v1342
    %v1420 = vcombine.low %v1411, %v1413
    %v1422 = vunpack.c.l.s4 1983009808
    %v1423 = vunpack.c.0.s8 %v1422
    %v1424 = vlaneseq
    %v1425 = vshrl.u32 %v1424, 7
    %v1426 = vsub.s32 %v1423, %v1425
    %v1427 = vrot.slane %v1419, %v1426
    %v1429 = vunpack.c.l.s4 1983009808
    %v1430 = vunpack.c.0.s8 %v1429
    %v1431 = vlaneseq
    %v1432 = vshrl.u32 %v1431, 7
    %v1433 = vsub.s32 %v1430, %v1432
    %v1434 = vrot.slane %v1420, %v1433
    %v1435 = vcombine.low %v1427, %v1434
    %v1437 = vadd.f32 %v1272, %v1435
    %v1438 = vxor.u32 %v1437, 2147483648
    %v1439 = vmul.f32 %v1438, 1.442695
    %v1440 = vpow.pop %v1439
    %v1441 = vadd.f32 %v1440, 1.0
    %v1442 = vrcp.pop %v1441
    %v1443 = vmul.f32 1.0, %v1442
    %v1445 = vrot.slane %v1437, 2
    %v1447 = vxor.u32 %v1445, 2147483648
    %v1448 = vmul.f32 %v1447, 1.442695
    %v1449 = vpow.pop %v1448
    %v1450 = vadd.f32 %v1449, 1.0
    %v1451 = vrcp.pop %v1450
    %v1452 = vmul.f32 1.0, %v1451
    %v1453 = vrot.slane %v1437, 4
    %v1455 = vtanh.pop %v1453
    %v1456 = vrot.slane %v1437, 6
    %v1458 = vxor.u32 %v1456, 2147483648
    %v1459 = vmul.f32 %v1458, 1.442695
    %v1460 = vpow.pop %v1459
    %v1461 = vadd.f32 %v1460, 1.0
    %v1462 = vrcp.pop %v1461
    %v1463 = vmul.f32 1.0, %v1462
    %v1464 = vmul.f32 %v1452, %v1266
    %v1465 = vmul.f32 %v1443, %v1455
    %v1466 = vadd.f32 %v1464, %v1465
    %v1467 = vtanh.pop %v1466
    %v1468 = vmul.f32 %v1463, %v1467
    %s1469 = scalar_lea.vmem [#allocation3], 8
    %1470 = vst [vmem:[%s1469] sm:$0x3] %v1468
    %s1471 = scalar_lea.vmem [#allocation2], 40
    %v1472 = vld [vmem:[%s1471] sm:$0xff]
    %1473 = vmatprep.subr.mxu0 %v83
    %1474 = vmatpush1.msra.mxu0 %v82
    %1475 = vmatprep.subr.mxu0 %v87
    %1476 = vmatpush1.msra.mxu0 %v86
    %1477 = vmatprep.subr.mxu0 %v91
    %1478 = vmatpush1.msra.mxu0 %v90
    %1479 = vmatprep.subr.mxu0 %v95
    %1480 = vmatpush1.msra.mxu0 %v94
    %1481 = vmatprep.subr.mxu0 %v99
    %1482 = vmatpush1.msra.mxu0 %v98
    %1483 = vmatprep.subr.mxu0 %v103
    %1484 = vmatpush1.msra.mxu0 %v102
    %1485 = vmatprep.subr.mxu0 %v107
    %1486 = vmatpush1.msra.mxu0 %v106
    %1487 = vmatprep.subr.mxu0 %v111
    %1488 = vmatpush1.msra.mxu0 %v110
    %1489 = vmatprep.subr.mxu0 %v115
    %1490 = vmatpush1.msra.mxu0 %v114
    %1491 = vmatprep.subr.mxu0 %v119
    %1492 = vmatpush1.msra.mxu0 %v118
    %1493 = vmatprep.subr.mxu0 %v123
    %1494 = vmatpush1.msra.mxu0 %v122
    %1495 = vmatprep.subr.mxu0 %v127
    %1496 = vmatpush1.msra.mxu0 %v126
    %1497 = vmatprep.subr.mxu0 %v131
    %1498 = vmatpush1.msra.mxu0 %v130
    %1499 = vmatprep.subr.mxu0 %v135
    %1500 = vmatpush1.msra.mxu0 %v134
    %1501 = vmatprep.subr.mxu0 %v139
    %1502 = vmatpush1.msra.mxu0 %v138
    %1503 = vmatprep.subr.mxu0 %v143
    %1504 = vmatpush1.msra.mxu0 %v142
    %1505 = vmatprep.subr.mxu0 0.0
    %1506 = vmatpush1.msra.mxu0 0.0
    %1507 = vmatprep.subr.mxu0 0.0
    %1508 = vmatpush1.msra.mxu0 0.0
    %1509 = vmatprep.subr.mxu0 0.0
    %1510 = vmatpush1.msra.mxu0 0.0
    %1511 = vmatprep.subr.mxu0 0.0
    %1512 = vmatpush1.msra.mxu0 0.0
    %1513 = vmatprep.subr.mxu0 0.0
    %1514 = vmatpush1.msra.mxu0 0.0
    %1515 = vmatprep.subr.mxu0 0.0
    %1516 = vmatpush1.msra.mxu0 0.0
    %1517 = vmatprep.subr.mxu0 0.0
    %1518 = vmatpush1.msra.mxu0 0.0
    %1519 = vmatprep.subr.mxu0 0.0
    %1520 = vmatpush1.msra.mxu0 0.0
    %1521 = vmatprep.subr.mxu0 0.0
    %1522 = vmatpush1.msra.mxu0 0.0
    %1523 = vmatprep.subr.mxu0 0.0
    %1524 = vmatpush1.msra.mxu0 0.0
    %1525 = vmatprep.subr.mxu0 0.0
    %1526 = vmatpush1.msra.mxu0 0.0
    %1527 = vmatprep.subr.mxu0 0.0
    %1528 = vmatpush1.msra.mxu0 0.0
    %1529 = vmatprep.subr.mxu0 0.0
    %1530 = vmatpush1.msra.mxu0 0.0
    %1531 = vmatprep.subr.mxu0 0.0
    %1532 = vmatpush1.msra.mxu0 0.0
    %1533 = vmatprep.subr.mxu0 0.0
    %1534 = vmatpush1.msra.mxu0 0.0
    %1535 = vmatprep.subr.mxu0 0.0
    %1536 = vmatpush1.msra.mxu0 0.0
    %1537 = vmatprep.mubr.f32.mxu0 0.0
    %1538 = vmatmul.mubr.f32.gmra.mrb[0].mxu0 %v1468
    %v1539 = vpop.f32.mrb[0].mxu0
    %v1540 = vadd.f32 0.0, %v1539
    %v1541 = vpop.f32.mrb[0].mxu0
    %v1542 = vadd.f32 0.0, %v1541
    %1543 = vdwg.mxu0
    %1544 = vmatprep.subr.mxu0 %v85
    %1545 = vmatpush1.msra.mxu0 %v84
    %1546 = vmatprep.subr.mxu0 %v89
    %1547 = vmatpush1.msra.mxu0 %v88
    %1548 = vmatprep.subr.mxu0 %v93
    %1549 = vmatpush1.msra.mxu0 %v92
    %1550 = vmatprep.subr.mxu0 %v97
    %1551 = vmatpush1.msra.mxu0 %v96
    %1552 = vmatprep.subr.mxu0 %v101
    %1553 = vmatpush1.msra.mxu0 %v100
    %1554 = vmatprep.subr.mxu0 %v105
    %1555 = vmatpush1.msra.mxu0 %v104
    %1556 = vmatprep.subr.mxu0 %v109
    %1557 = vmatpush1.msra.mxu0 %v108
    %1558 = vmatprep.subr.mxu0 %v113
    %1559 = vmatpush1.msra.mxu0 %v112
    %1560 = vmatprep.subr.mxu0 %v117
    %1561 = vmatpush1.msra.mxu0 %v116
    %1562 = vmatprep.subr.mxu0 %v121
    %1563 = vmatpush1.msra.mxu0 %v120
    %1564 = vmatprep.subr.mxu0 %v125
    %1565 = vmatpush1.msra.mxu0 %v124
    %1566 = vmatprep.subr.mxu0 %v129
    %1567 = vmatpush1.msra.mxu0 %v128
    %1568 = vmatprep.subr.mxu0 %v133
    %1569 = vmatpush1.msra.mxu0 %v132
    %1570 = vmatprep.subr.mxu0 %v137
    %1571 = vmatpush1.msra.mxu0 %v136
    %1572 = vmatprep.subr.mxu0 %v141
    %1573 = vmatpush1.msra.mxu0 %v140
    %1574 = vmatprep.subr.mxu0 %v145
    %1575 = vmatpush1.msra.mxu0 %v144
    %1576 = vmatprep.subr.mxu0 0.0
    %1577 = vmatpush1.msra.mxu0 0.0
    %1578 = vmatprep.subr.mxu0 0.0
    %1579 = vmatpush1.msra.mxu0 0.0
    %1580 = vmatprep.subr.mxu0 0.0
    %1581 = vmatpush1.msra.mxu0 0.0
    %1582 = vmatprep.subr.mxu0 0.0
    %1583 = vmatpush1.msra.mxu0 0.0
    %1584 = vmatprep.subr.mxu0 0.0
    %1585 = vmatpush1.msra.mxu0 0.0
    %1586 = vmatprep.subr.mxu0 0.0
    %1587 = vmatpush1.msra.mxu0 0.0
    %1588 = vmatprep.subr.mxu0 0.0
    %1589 = vmatpush1.msra.mxu0 0.0
    %1590 = vmatprep.subr.mxu0 0.0
    %1591 = vmatpush1.msra.mxu0 0.0
    %1592 = vmatprep.subr.mxu0 0.0
    %1593 = vmatpush1.msra.mxu0 0.0
    %1594 = vmatprep.subr.mxu0 0.0
    %1595 = vmatpush1.msra.mxu0 0.0
    %1596 = vmatprep.subr.mxu0 0.0
    %1597 = vmatpush1.msra.mxu0 0.0
    %1598 = vmatprep.subr.mxu0 0.0
    %1599 = vmatpush1.msra.mxu0 0.0
    %1600 = vmatprep.subr.mxu0 0.0
    %1601 = vmatpush1.msra.mxu0 0.0
    %1602 = vmatprep.subr.mxu0 0.0
    %1603 = vmatpush1.msra.mxu0 0.0
    %1604 = vmatprep.subr.mxu0 0.0
    %1605 = vmatpush1.msra.mxu0 0.0
    %1606 = vmatprep.subr.mxu0 0.0
    %1607 = vmatpush1.msra.mxu0 0.0
    %1608 = vmatprep.mubr.f32.mxu0 0.0
    %1609 = vmatmul.mubr.f32.gmra.mrb[0].mxu0 %v1468
    %v1610 = vpop.f32.mrb[0].mxu0
    %v1611 = vadd.f32 0.0, %v1610
    %v1612 = vpop.f32.mrb[0].mxu0
    %v1613 = vadd.f32 0.0, %v1612
    %1614 = vdwg.mxu0
    %v1619 = vcombine.low %v1540, %v1542
    %v1620 = vcombine.low %v1611, %v1613
    %v1622 = vunpack.c.l.s4 1983009808
    %v1623 = vunpack.c.0.s8 %v1622
    %v1624 = vlaneseq
    %v1625 = vshrl.u32 %v1624, 7
    %v1626 = vsub.s32 %v1623, %v1625
    %v1627 = vrot.slane %v1619, %v1626
    %v1629 = vunpack.c.l.s4 1983009808
    %v1630 = vunpack.c.0.s8 %v1629
    %v1631 = vlaneseq
    %v1632 = vshrl.u32 %v1631, 7
    %v1633 = vsub.s32 %v1630, %v1632
    %v1634 = vrot.slane %v1620, %v1633
    %v1635 = vcombine.low %v1627, %v1634
    %v1637 = vadd.f32 %v1472, %v1635
    %v1638 = vxor.u32 %v1637, 2147483648
    %v1639 = vmul.f32 %v1638, 1.442695
    %v1640 = vpow.pop %v1639
    %v1641 = vadd.f32 %v1640, 1.0
    %v1642 = vrcp.pop %v1641
    %v1643 = vmul.f32 1.0, %v1642
    %v1645 = vrot.slane %v1637, 2
    %v1647 = vxor.u32 %v1645, 2147483648
    %v1648 = vmul.f32 %v1647, 1.442695
    %v1649 = vpow.pop %v1648
    %v1650 = vadd.f32 %v1649, 1.0
    %v1651 = vrcp.pop %v1650
    %v1652 = vmul.f32 1.0, %v1651
    %v1653 = vrot.slane %v1637, 4
    %v1655 = vtanh.pop %v1653
    %v1656 = vrot.slane %v1637, 6
    %v1658 = vxor.u32 %v1656, 2147483648
    %v1659 = vmul.f32 %v1658, 1.442695
    %v1660 = vpow.pop %v1659
    %v1661 = vadd.f32 %v1660, 1.0
    %v1662 = vrcp.pop %v1661
    %v1663 = vmul.f32 1.0, %v1662
    %v1664 = vmul.f32 %v1652, %v1466
    %v1665 = vmul.f32 %v1643, %v1655
    %v1666 = vadd.f32 %v1664, %v1665
    %v1667 = vtanh.pop %v1666
    %v1668 = vmul.f32 %v1663, %v1667
    %s1669 = scalar_lea.vmem [#allocation3], 10
    %1670 = vst [vmem:[%s1669] sm:$0x3] %v1668
    %s1671 = scalar_lea.vmem [#allocation2], 48
    %v1672 = vld [vmem:[%s1671] sm:$0xff]
    %1673 = vmatprep.subr.mxu0 %v83
    %1674 = vmatpush1.msra.mxu0 %v82
    %1675 = vmatprep.subr.mxu0 %v87
    %1676 = vmatpush1.msra.mxu0 %v86
    %1677 = vmatprep.subr.mxu0 %v91
    %1678 = vmatpush1.msra.mxu0 %v90
    %1679 = vmatprep.subr.mxu0 %v95
    %1680 = vmatpush1.msra.mxu0 %v94
    %1681 = vmatprep.subr.mxu0 %v99
    %1682 = vmatpush1.msra.mxu0 %v98
    %1683 = vmatprep.subr.mxu0 %v103
    %1684 = vmatpush1.msra.mxu0 %v102
    %1685 = vmatprep.subr.mxu0 %v107
    %1686 = vmatpush1.msra.mxu0 %v106
    %1687 = vmatprep.subr.mxu0 %v111
    %1688 = vmatpush1.msra.mxu0 %v110
    %1689 = vmatprep.subr.mxu0 %v115
    %1690 = vmatpush1.msra.mxu0 %v114
    %1691 = vmatprep.subr.mxu0 %v119
    %1692 = vmatpush1.msra.mxu0 %v118
    %1693 = vmatprep.subr.mxu0 %v123
    %1694 = vmatpush1.msra.mxu0 %v122
    %1695 = vmatprep.subr.mxu0 %v127
    %1696 = vmatpush1.msra.mxu0 %v126
    %1697 = vmatprep.subr.mxu0 %v131
    %1698 = vmatpush1.msra.mxu0 %v130
    %1699 = vmatprep.subr.mxu0 %v135
    %1700 = vmatpush1.msra.mxu0 %v134
    %1701 = vmatprep.subr.mxu0 %v139
    %1702 = vmatpush1.msra.mxu0 %v138
    %1703 = vmatprep.subr.mxu0 %v143
    %1704 = vmatpush1.msra.mxu0 %v142
    %1705 = vmatprep.subr.mxu0 0.0
    %1706 = vmatpush1.msra.mxu0 0.0
    %1707 = vmatprep.subr.mxu0 0.0
    %1708 = vmatpush1.msra.mxu0 0.0
    %1709 = vmatprep.subr.mxu0 0.0
    %1710 = vmatpush1.msra.mxu0 0.0
    %1711 = vmatprep.subr.mxu0 0.0
    %1712 = vmatpush1.msra.mxu0 0.0
    %1713 = vmatprep.subr.mxu0 0.0
    %1714 = vmatpush1.msra.mxu0 0.0
    %1715 = vmatprep.subr.mxu0 0.0
    %1716 = vmatpush1.msra.mxu0 0.0
    %1717 = vmatprep.subr.mxu0 0.0
    %1718 = vmatpush1.msra.mxu0 0.0
    %1719 = vmatprep.subr.mxu0 0.0
    %1720 = vmatpush1.msra.mxu0 0.0
    %1721 = vmatprep.subr.mxu0 0.0
    %1722 = vmatpush1.msra.mxu0 0.0
    %1723 = vmatprep.subr.mxu0 0.0
    %1724 = vmatpush1.msra.mxu0 0.0
    %1725 = vmatprep.subr.mxu0 0.0
    %1726 = vmatpush1.msra.mxu0 0.0
    %1727 = vmatprep.subr.mxu0 0.0
    %1728 = vmatpush1.msra.mxu0 0.0
    %1729 = vmatprep.subr.mxu0 0.0
    %1730 = vmatpush1.msra.mxu0 0.0
    %1731 = vmatprep.subr.mxu0 0.0
    %1732 = vmatpush1.msra.mxu0 0.0
    %1733 = vmatprep.subr.mxu0 0.0
    %1734 = vmatpush1.msra.mxu0 0.0
    %1735 = vmatprep.subr.mxu0 0.0
    %1736 = vmatpush1.msra.mxu0 0.0
    %1737 = vmatprep.mubr.f32.mxu0 0.0
    %1738 = vmatmul.mubr.f32.gmra.mrb[0].mxu0 %v1668
    %v1739 = vpop.f32.mrb[0].mxu0
    %v1740 = vadd.f32 0.0, %v1739
    %v1741 = vpop.f32.mrb[0].mxu0
    %v1742 = vadd.f32 0.0, %v1741
    %1743 = vdwg.mxu0
    %1744 = vmatprep.subr.mxu0 %v85
    %1745 = vmatpush1.msra.mxu0 %v84
    %1746 = vmatprep.subr.mxu0 %v89
    %1747 = vmatpush1.msra.mxu0 %v88
    %1748 = vmatprep.subr.mxu0 %v93
    %1749 = vmatpush1.msra.mxu0 %v92
    %1750 = vmatprep.subr.mxu0 %v97
    %1751 = vmatpush1.msra.mxu0 %v96
    %1752 = vmatprep.subr.mxu0 %v101
    %1753 = vmatpush1.msra.mxu0 %v100
    %1754 = vmatprep.subr.mxu0 %v105
    %1755 = vmatpush1.msra.mxu0 %v104
    %1756 = vmatprep.subr.mxu0 %v109
    %1757 = vmatpush1.msra.mxu0 %v108
    %1758 = vmatprep.subr.mxu0 %v113
    %1759 = vmatpush1.msra.mxu0 %v112
    %1760 = vmatprep.subr.mxu0 %v117
    %1761 = vmatpush1.msra.mxu0 %v116
    %1762 = vmatprep.subr.mxu0 %v121
    %1763 = vmatpush1.msra.mxu0 %v120
    %1764 = vmatprep.subr.mxu0 %v125
    %1765 = vmatpush1.msra.mxu0 %v124
    %1766 = vmatprep.subr.mxu0 %v129
    %1767 = vmatpush1.msra.mxu0 %v128
    %1768 = vmatprep.subr.mxu0 %v133
    %1769 = vmatpush1.msra.mxu0 %v132
    %1770 = vmatprep.subr.mxu0 %v137
    %1771 = vmatpush1.msra.mxu0 %v136
    %1772 = vmatprep.subr.mxu0 %v141
    %1773 = vmatpush1.msra.mxu0 %v140
    %1774 = vmatprep.subr.mxu0 %v145
    %1775 = vmatpush1.msra.mxu0 %v144
    %1776 = vmatprep.subr.mxu0 0.0
    %1777 = vmatpush1.msra.mxu0 0.0
    %1778 = vmatprep.subr.mxu0 0.0
    %1779 = vmatpush1.msra.mxu0 0.0
    %1780 = vmatprep.subr.mxu0 0.0
    %1781 = vmatpush1.msra.mxu0 0.0
    %1782 = vmatprep.subr.mxu0 0.0
    %1783 = vmatpush1.msra.mxu0 0.0
    %1784 = vmatprep.subr.mxu0 0.0
    %1785 = vmatpush1.msra.mxu0 0.0
    %1786 = vmatprep.subr.mxu0 0.0
    %1787 = vmatpush1.msra.mxu0 0.0
    %1788 = vmatprep.subr.mxu0 0.0
    %1789 = vmatpush1.msra.mxu0 0.0
    %1790 = vmatprep.subr.mxu0 0.0
    %1791 = vmatpush1.msra.mxu0 0.0
    %1792 = vmatprep.subr.mxu0 0.0
    %1793 = vmatpush1.msra.mxu0 0.0
    %1794 = vmatprep.subr.mxu0 0.0
    %1795 = vmatpush1.msra.mxu0 0.0
    %1796 = vmatprep.subr.mxu0 0.0
    %1797 = vmatpush1.msra.mxu0 0.0
    %1798 = vmatprep.subr.mxu0 0.0
    %1799 = vmatpush1.msra.mxu0 0.0
    %1800 = vmatprep.subr.mxu0 0.0
    %1801 = vmatpush1.msra.mxu0 0.0
    %1802 = vmatprep.subr.mxu0 0.0
    %1803 = vmatpush1.msra.mxu0 0.0
    %1804 = vmatprep.subr.mxu0 0.0
    %1805 = vmatpush1.msra.mxu0 0.0
    %1806 = vmatprep.subr.mxu0 0.0
    %1807 = vmatpush1.msra.mxu0 0.0
    %1808 = vmatprep.mubr.f32.mxu0 0.0
    %1809 = vmatmul.mubr.f32.gmra.mrb[0].mxu0 %v1668
    %v1810 = vpop.f32.mrb[0].mxu0
    %v1811 = vadd.f32 0.0, %v1810
    %v1812 = vpop.f32.mrb[0].mxu0
    %v1813 = vadd.f32 0.0, %v1812
    %1814 = vdwg.mxu0
    %v1819 = vcombine.low %v1740, %v1742
    %v1820 = vcombine.low %v1811, %v1813
    %v1822 = vunpack.c.l.s4 1983009808
    %v1823 = vunpack.c.0.s8 %v1822
    %v1824 = vlaneseq
    %v1825 = vshrl.u32 %v1824, 7
    %v1826 = vsub.s32 %v1823, %v1825
    %v1827 = vrot.slane %v1819, %v1826
    %v1829 = vunpack.c.l.s4 1983009808
    %v1830 = vunpack.c.0.s8 %v1829
    %v1831 = vlaneseq
    %v1832 = vshrl.u32 %v1831, 7
    %v1833 = vsub.s32 %v1830, %v1832
    %v1834 = vrot.slane %v1820, %v1833
    %v1835 = vcombine.low %v1827, %v1834
    %v1837 = vadd.f32 %v1672, %v1835
    %v1838 = vxor.u32 %v1837, 2147483648
    %v1839 = vmul.f32 %v1838, 1.442695
    %v1840 = vpow.pop %v1839
    %v1841 = vadd.f32 %v1840, 1.0
    %v1842 = vrcp.pop %v1841
    %v1843 = vmul.f32 1.0, %v1842
    %v1845 = vrot.slane %v1837, 2
    %v1847 = vxor.u32 %v1845, 2147483648
    %v1848 = vmul.f32 %v1847, 1.442695
    %v1849 = vpow.pop %v1848
    %v1850 = vadd.f32 %v1849, 1.0
    %v1851 = vrcp.pop %v1850
    %v1852 = vmul.f32 1.0, %v1851
    %v1853 = vrot.slane %v1837, 4
    %v1855 = vtanh.pop %v1853
    %v1856 = vrot.slane %v1837, 6
    %v1858 = vxor.u32 %v1856, 2147483648
    %v1859 = vmul.f32 %v1858, 1.442695
    %v1860 = vpow.pop %v1859
    %v1861 = vadd.f32 %v1860, 1.0
    %v1862 = vrcp.pop %v1861
    %v1863 = vmul.f32 1.0, %v1862
    %v1864 = vmul.f32 %v1852, %v1666
    %v1865 = vmul.f32 %v1843, %v1855
    %v1866 = vadd.f32 %v1864, %v1865
    %v1867 = vtanh.pop %v1866
    %v1868 = vmul.f32 %v1863, %v1867
    %s1869 = scalar_lea.vmem [#allocation3], 12
    %1870 = vst [vmem:[%s1869] sm:$0x3] %v1868
    %s1871 = scalar_lea.vmem [#allocation2], 56
    %v1872 = vld [vmem:[%s1871] sm:$0xff]
    %1873 = vmatprep.subr.mxu0 %v83
    %1874 = vmatpush1.msra.mxu0 %v82
    %1875 = vmatprep.subr.mxu0 %v87
    %1876 = vmatpush1.msra.mxu0 %v86
    %1877 = vmatprep.subr.mxu0 %v91
    %1878 = vmatpush1.msra.mxu0 %v90
    %1879 = vmatprep.subr.mxu0 %v95
    %1880 = vmatpush1.msra.mxu0 %v94
    %1881 = vmatprep.subr.mxu0 %v99
    %1882 = vmatpush1.msra.mxu0 %v98
    %1883 = vmatprep.subr.mxu0 %v103
    %1884 = vmatpush1.msra.mxu0 %v102
    %1885 = vmatprep.subr.mxu0 %v107
    %1886 = vmatpush1.msra.mxu0 %v106
    %1887 = vmatprep.subr.mxu0 %v111
    %1888 = vmatpush1.msra.mxu0 %v110
    %1889 = vmatprep.subr.mxu0 %v115
    %1890 = vmatpush1.msra.mxu0 %v114
    %1891 = vmatprep.subr.mxu0 %v119
    %1892 = vmatpush1.msra.mxu0 %v118
    %1893 = vmatprep.subr.mxu0 %v123
    %1894 = vmatpush1.msra.mxu0 %v122
    %1895 = vmatprep.subr.mxu0 %v127
    %1896 = vmatpush1.msra.mxu0 %v126
    %1897 = vmatprep.subr.mxu0 %v131
    %1898 = vmatpush1.msra.mxu0 %v130
    %1899 = vmatprep.subr.mxu0 %v135
    %1900 = vmatpush1.msra.mxu0 %v134
    %1901 = vmatprep.subr.mxu0 %v139
    %1902 = vmatpush1.msra.mxu0 %v138
    %1903 = vmatprep.subr.mxu0 %v143
    %1904 = vmatpush1.msra.mxu0 %v142
    %1905 = vmatprep.subr.mxu0 0.0
    %1906 = vmatpush1.msra.mxu0 0.0
    %1907 = vmatprep.subr.mxu0 0.0
    %1908 = vmatpush1.msra.mxu0 0.0
    %1909 = vmatprep.subr.mxu0 0.0
    %1910 = vmatpush1.msra.mxu0 0.0
    %1911 = vmatprep.subr.mxu0 0.0
    %1912 = vmatpush1.msra.mxu0 0.0
    %1913 = vmatprep.subr.mxu0 0.0
    %1914 = vmatpush1.msra.mxu0 0.0
    %1915 = vmatprep.subr.mxu0 0.0
    %1916 = vmatpush1.msra.mxu0 0.0
    %1917 = vmatprep.subr.mxu0 0.0
    %1918 = vmatpush1.msra.mxu0 0.0
    %1919 = vmatprep.subr.mxu0 0.0
    %1920 = vmatpush1.msra.mxu0 0.0
    %1921 = vmatprep.subr.mxu0 0.0
    %1922 = vmatpush1.msra.mxu0 0.0
    %1923 = vmatprep.subr.mxu0 0.0
    %1924 = vmatpush1.msra.mxu0 0.0
    %1925 = vmatprep.subr.mxu0 0.0
    %1926 = vmatpush1.msra.mxu0 0.0
    %1927 = vmatprep.subr.mxu0 0.0
    %1928 = vmatpush1.msra.mxu0 0.0
    %1929 = vmatprep.subr.mxu0 0.0
    %1930 = vmatpush1.msra.mxu0 0.0
    %1931 = vmatprep.subr.mxu0 0.0
    %1932 = vmatpush1.msra.mxu0 0.0
    %1933 = vmatprep.subr.mxu0 0.0
    %1934 = vmatpush1.msra.mxu0 0.0
    %1935 = vmatprep.subr.mxu0 0.0
    %1936 = vmatpush1.msra.mxu0 0.0
    %1937 = vmatprep.mubr.f32.mxu0 0.0
    %1938 = vmatmul.mubr.f32.gmra.mrb[0].mxu0 %v1868
    %v1939 = vpop.f32.mrb[0].mxu0
    %v1940 = vadd.f32 0.0, %v1939
    %v1941 = vpop.f32.mrb[0].mxu0
    %v1942 = vadd.f32 0.0, %v1941
    %1943 = vdwg.mxu0
    %1944 = vmatprep.subr.mxu0 %v85
    %1945 = vmatpush1.msra.mxu0 %v84
    %1946 = vmatprep.subr.mxu0 %v89
    %1947 = vmatpush1.msra.mxu0 %v88
    %1948 = vmatprep.subr.mxu0 %v93
    %1949 = vmatpush1.msra.mxu0 %v92
    %1950 = vmatprep.subr.mxu0 %v97
    %1951 = vmatpush1.msra.mxu0 %v96
    %1952 = vmatprep.subr.mxu0 %v101
    %1953 = vmatpush1.msra.mxu0 %v100
    %1954 = vmatprep.subr.mxu0 %v105
    %1955 = vmatpush1.msra.mxu0 %v104
    %1956 = vmatprep.subr.mxu0 %v109
    %1957 = vmatpush1.msra.mxu0 %v108
    %1958 = vmatprep.subr.mxu0 %v113
    %1959 = vmatpush1.msra.mxu0 %v112
    %1960 = vmatprep.subr.mxu0 %v117
    %1961 = vmatpush1.msra.mxu0 %v116
    %1962 = vmatprep.subr.mxu0 %v121
    %1963 = vmatpush1.msra.mxu0 %v120
    %1964 = vmatprep.subr.mxu0 %v125
    %1965 = vmatpush1.msra.mxu0 %v124
    %1966 = vmatprep.subr.mxu0 %v129
    %1967 = vmatpush1.msra.mxu0 %v128
    %1968 = vmatprep.subr.mxu0 %v133
    %1969 = vmatpush1.msra.mxu0 %v132
    %1970 = vmatprep.subr.mxu0 %v137
    %1971 = vmatpush1.msra.mxu0 %v136
    %1972 = vmatprep.subr.mxu0 %v141
    %1973 = vmatpush1.msra.mxu0 %v140
    %1974 = vmatprep.subr.mxu0 %v145
    %1975 = vmatpush1.msra.mxu0 %v144
    %1976 = vmatprep.subr.mxu0 0.0
    %1977 = vmatpush1.msra.mxu0 0.0
    %1978 = vmatprep.subr.mxu0 0.0
    %1979 = vmatpush1.msra.mxu0 0.0
    %1980 = vmatprep.subr.mxu0 0.0
    %1981 = vmatpush1.msra.mxu0 0.0
    %1982 = vmatprep.subr.mxu0 0.0
    %1983 = vmatpush1.msra.mxu0 0.0
    %1984 = vmatprep.subr.mxu0 0.0
    %1985 = vmatpush1.msra.mxu0 0.0
    %1986 = vmatprep.subr.mxu0 0.0
    %1987 = vmatpush1.msra.mxu0 0.0
    %1988 = vmatprep.subr.mxu0 0.0
    %1989 = vmatpush1.msra.mxu0 0.0
    %1990 = vmatprep.subr.mxu0 0.0
    %1991 = vmatpush1.msra.mxu0 0.0
    %1992 = vmatprep.subr.mxu0 0.0
    %1993 = vmatpush1.msra.mxu0 0.0
    %1994 = vmatprep.subr.mxu0 0.0
    %1995 = vmatpush1.msra.mxu0 0.0
    %1996 = vmatprep.subr.mxu0 0.0
    %1997 = vmatpush1.msra.mxu0 0.0
    %1998 = vmatprep.subr.mxu0 0.0
    %1999 = vmatpush1.msra.mxu0 0.0
    %2000 = vmatprep.subr.mxu0 0.0
    %2001 = vmatpush1.msra.mxu0 0.0
    %2002 = vmatprep.subr.mxu0 0.0
    %2003 = vmatpush1.msra.mxu0 0.0
    %2004 = vmatprep.subr.mxu0 0.0
    %2005 = vmatpush1.msra.mxu0 0.0
    %2006 = vmatprep.subr.mxu0 0.0
    %2007 = vmatpush1.msra.mxu0 0.0
    %2008 = vmatprep.mubr.f32.mxu0 0.0
    %2009 = vmatmul.mubr.f32.gmra.mrb[0].mxu0 %v1868
    %v2010 = vpop.f32.mrb[0].mxu0
    %v2011 = vadd.f32 0.0, %v2010
    %v2012 = vpop.f32.mrb[0].mxu0
    %v2013 = vadd.f32 0.0, %v2012
    %2014 = vdwg.mxu0
    %v2019 = vcombine.low %v1940, %v1942
    %v2020 = vcombine.low %v2011, %v2013
    %v2022 = vunpack.c.l.s4 1983009808
    %v2023 = vunpack.c.0.s8 %v2022
    %v2024 = vlaneseq
    %v2025 = vshrl.u32 %v2024, 7
    %v2026 = vsub.s32 %v2023, %v2025
    %v2027 = vrot.slane %v2019, %v2026
    %v2029 = vunpack.c.l.s4 1983009808
    %v2030 = vunpack.c.0.s8 %v2029
    %v2031 = vlaneseq
    %v2032 = vshrl.u32 %v2031, 7
    %v2033 = vsub.s32 %v2030, %v2032
    %v2034 = vrot.slane %v2020, %v2033
    %v2035 = vcombine.low %v2027, %v2034
    %v2037 = vadd.f32 %v1872, %v2035
    %v2038 = vxor.u32 %v2037, 2147483648
    %v2039 = vmul.f32 %v2038, 1.442695
    %v2040 = vpow.pop %v2039
    %v2041 = vadd.f32 %v2040, 1.0
    %v2042 = vrcp.pop %v2041
    %v2043 = vmul.f32 1.0, %v2042
    %v2045 = vrot.slane %v2037, 2
    %v2047 = vxor.u32 %v2045, 2147483648
    %v2048 = vmul.f32 %v2047, 1.442695
    %v2049 = vpow.pop %v2048
    %v2050 = vadd.f32 %v2049, 1.0
    %v2051 = vrcp.pop %v2050
    %v2052 = vmul.f32 1.0, %v2051
    %v2053 = vrot.slane %v2037, 4
    %v2055 = vtanh.pop %v2053
    %v2056 = vrot.slane %v2037, 6
    %v2058 = vxor.u32 %v2056, 2147483648
    %v2059 = vmul.f32 %v2058, 1.442695
    %v2060 = vpow.pop %v2059
    %v2061 = vadd.f32 %v2060, 1.0
    %v2062 = vrcp.pop %v2061
    %v2063 = vmul.f32 1.0, %v2062
    %v2064 = vmul.f32 %v2052, %v1866
    %v2065 = vmul.f32 %v2043, %v2055
    %v2066 = vadd.f32 %v2064, %v2065
    %v2067 = vtanh.pop %v2066
    %v2068 = vmul.f32 %v2063, %v2067
    %s2069 = scalar_lea.vmem [#allocation3], 14
    %2070 = vst [vmem:[%s2069] sm:$0x3] %v2068
    %v2071 = vld [vmem:[#allocation7] sm:$0xff]
    %v2072 = vld [vmem:[#allocation7 + $0x8] sm:$0xff]
    %v2073 = vld [vmem:[#allocation7 + $0x10] sm:$0xff]
    %v2074 = vld [vmem:[#allocation7 + $0x18] sm:$0xff]
    %v2075 = vld [vmem:[#allocation7 + $0x20] sm:$0xff]
    %v2076 = vld [vmem:[#allocation7 + $0x28] sm:$0xff]
    %v2077 = vld [vmem:[#allocation7 + $0x30] sm:$0xff]
    %v2078 = vld [vmem:[#allocation7 + $0x38] sm:$0xff]
    %v2079 = vld [vmem:[#allocation7 + $0x40] sm:$0xff]
    %v2080 = vld [vmem:[#allocation7 + $0x48] sm:$0xff]
    %v2081 = vld [vmem:[#allocation7 + $0x50] sm:$0xff]
    %v2082 = vld [vmem:[#allocation7 + $0x58] sm:$0xff]
    %v2083 = vld [vmem:[#allocation7 + $0x60] sm:$0xff]
    %v2084 = vld [vmem:[#allocation7 + $0x68] sm:$0xff]
    %v2085 = vld [vmem:[#allocation7 + $0x70] sm:$0xff]
    %v2086 = vld [vmem:[#allocation7 + $0x78] sm:$0xff]
    %v2087 = vld [vmem:[#allocation7 + $0x80] sm:$0xff]
    %v2088 = vld [vmem:[#allocation7 + $0x88] sm:$0xff]
    %v2089 = vld [vmem:[#allocation7 + $0x90] sm:$0xff]
    %v2090 = vld [vmem:[#allocation7 + $0x98] sm:$0xff]
    %v2091 = vld [vmem:[#allocation7 + $0xa0] sm:$0xff]
    %v2092 = vld [vmem:[#allocation7 + $0xa8] sm:$0xff]
    %v2093 = vld [vmem:[#allocation7 + $0xb0] sm:$0xff]
    %v2094 = vld [vmem:[#allocation7 + $0xb8] sm:$0xff]
    %v2095 = vld [vmem:[#allocation7 + $0xc0] sm:$0xff]
    %v2096 = vld [vmem:[#allocation7 + $0xc8] sm:$0xff]
    %v2097 = vld [vmem:[#allocation7 + $0xd0] sm:$0xff]
    %v2098 = vld [vmem:[#allocation7 + $0xd8] sm:$0xff]
    %v2099 = vld [vmem:[#allocation7 + $0xe0] sm:$0xff]
    %v2100 = vld [vmem:[#allocation7 + $0xe8] sm:$0xff]
    %v2101 = vld [vmem:[#allocation7 + $0xf0] sm:$0xff]
    %v2102 = vld [vmem:[#allocation7 + $0xf8] sm:$0xff]
    %v2103 = vld [vmem:[#allocation7 + $0x100] sm:$0xff]
    %v2104 = vld [vmem:[#allocation7 + $0x108] sm:$0xff]
    %v2105 = vld [vmem:[#allocation7 + $0x110] sm:$0xff]
    %v2106 = vld [vmem:[#allocation7 + $0x118] sm:$0xff]
    %v2107 = vld [vmem:[#allocation7 + $0x120] sm:$0xff]
    %v2108 = vld [vmem:[#allocation7 + $0x128] sm:$0xff]
    %v2109 = vld [vmem:[#allocation7 + $0x130] sm:$0xff]
    %v2110 = vld [vmem:[#allocation7 + $0x138] sm:$0xff]
    %v2111 = vld [vmem:[#allocation7 + $0x140] sm:$0xff]
    %v2112 = vld [vmem:[#allocation7 + $0x148] sm:$0xff]
    %v2113 = vld [vmem:[#allocation7 + $0x150] sm:$0xff]
    %v2114 = vld [vmem:[#allocation7 + $0x158] sm:$0xff]
    %v2115 = vld [vmem:[#allocation7 + $0x160] sm:$0xff]
    %v2116 = vld [vmem:[#allocation7 + $0x168] sm:$0xff]
    %v2117 = vld [vmem:[#allocation7 + $0x170] sm:$0xff]
    %v2118 = vld [vmem:[#allocation7 + $0x178] sm:$0xff]
    %v2119 = vld [vmem:[#allocation7 + $0x180] sm:$0xff]
    %v2120 = vld [vmem:[#allocation7 + $0x188] sm:$0xff]
    %v2121 = vld [vmem:[#allocation7 + $0x190] sm:$0xff]
    %v2122 = vld [vmem:[#allocation7 + $0x198] sm:$0xff]
    %v2123 = vld [vmem:[#allocation7 + $0x1a0] sm:$0xff]
    %v2124 = vld [vmem:[#allocation7 + $0x1a8] sm:$0xff]
    %v2125 = vld [vmem:[#allocation7 + $0x1b0] sm:$0xff]
    %v2126 = vld [vmem:[#allocation7 + $0x1b8] sm:$0xff]
    %v2127 = vld [vmem:[#allocation7 + $0x1c0] sm:$0xff]
    %v2128 = vld [vmem:[#allocation7 + $0x1c8] sm:$0xff]
    %v2129 = vld [vmem:[#allocation7 + $0x1d0] sm:$0xff]
    %v2130 = vld [vmem:[#allocation7 + $0x1d8] sm:$0xff]
    %v2131 = vld [vmem:[#allocation7 + $0x1e0] sm:$0xff]
    %v2132 = vld [vmem:[#allocation7 + $0x1e8] sm:$0xff]
    %v2133 = vld [vmem:[#allocation7 + $0x1f0] sm:$0xff]
    %v2134 = vld [vmem:[#allocation7 + $0x1f8] sm:$0xff]
    %v2135 = vld [vmem:[#allocation9] sm:$0xff]
    %v2136 = vld [vmem:[#allocation9 + $0x8] sm:$0xff]
    %v2137 = vld [vmem:[#allocation9 + $0x10] sm:$0xff]
    %v2138 = vld [vmem:[#allocation9 + $0x18] sm:$0xff]
    %v2139 = vld [vmem:[#allocation9 + $0x20] sm:$0xff]
    %v2140 = vld [vmem:[#allocation9 + $0x28] sm:$0xff]
    %v2141 = vld [vmem:[#allocation9 + $0x30] sm:$0xff]
    %v2142 = vld [vmem:[#allocation9 + $0x38] sm:$0xff]
    %v2143 = vld [vmem:[#allocation9 + $0x40] sm:$0xff]
    %v2144 = vld [vmem:[#allocation9 + $0x48] sm:$0xff]
    %v2145 = vld [vmem:[#allocation9 + $0x50] sm:$0xff]
    %v2146 = vld [vmem:[#allocation9 + $0x58] sm:$0xff]
    %v2147 = vld [vmem:[#allocation9 + $0x60] sm:$0xff]
    %v2148 = vld [vmem:[#allocation9 + $0x68] sm:$0xff]
    %v2149 = vld [vmem:[#allocation9 + $0x70] sm:$0xff]
    %v2150 = vld [vmem:[#allocation9 + $0x78] sm:$0xff]
    %v2151 = vld [vmem:[#allocation9 + $0x80] sm:$0xff]
    %v2152 = vld [vmem:[#allocation9 + $0x88] sm:$0xff]
    %v2153 = vld [vmem:[#allocation9 + $0x90] sm:$0xff]
    %v2154 = vld [vmem:[#allocation9 + $0x98] sm:$0xff]
    %v2155 = vld [vmem:[#allocation9 + $0xa0] sm:$0xff]
    %v2156 = vld [vmem:[#allocation9 + $0xa8] sm:$0xff]
    %v2157 = vld [vmem:[#allocation9 + $0xb0] sm:$0xff]
    %v2158 = vld [vmem:[#allocation9 + $0xb8] sm:$0xff]
    %v2159 = vld [vmem:[#allocation9 + $0xc0] sm:$0xff]
    %v2160 = vld [vmem:[#allocation9 + $0xc8] sm:$0xff]
    %v2161 = vld [vmem:[#allocation9 + $0xd0] sm:$0xff]
    %v2162 = vld [vmem:[#allocation9 + $0xd8] sm:$0xff]
    %v2163 = vld [vmem:[#allocation9 + $0xe0] sm:$0xff]
    %v2164 = vld [vmem:[#allocation9 + $0xe8] sm:$0xff]
    %v2165 = vld [vmem:[#allocation9 + $0xf0] sm:$0xff]
    %v2166 = vld [vmem:[#allocation9 + $0xf8] sm:$0xff]
    %v2167 = vld [vmem:[#allocation9 + $0x100] sm:$0xff]
    %v2168 = vld [vmem:[#allocation9 + $0x108] sm:$0xff]
    %v2169 = vld [vmem:[#allocation9 + $0x110] sm:$0xff]
    %v2170 = vld [vmem:[#allocation9 + $0x118] sm:$0xff]
    %v2171 = vld [vmem:[#allocation9 + $0x120] sm:$0xff]
    %v2172 = vld [vmem:[#allocation9 + $0x128] sm:$0xff]
    %v2173 = vld [vmem:[#allocation9 + $0x130] sm:$0xff]
    %v2174 = vld [vmem:[#allocation9 + $0x138] sm:$0xff]
    %v2175 = vld [vmem:[#allocation9 + $0x140] sm:$0xff]
    %v2176 = vld [vmem:[#allocation9 + $0x148] sm:$0xff]
    %v2177 = vld [vmem:[#allocation9 + $0x150] sm:$0xff]
    %v2178 = vld [vmem:[#allocation9 + $0x158] sm:$0xff]
    %v2179 = vld [vmem:[#allocation9 + $0x160] sm:$0xff]
    %v2180 = vld [vmem:[#allocation9 + $0x168] sm:$0xff]
    %v2181 = vld [vmem:[#allocation9 + $0x170] sm:$0xff]
    %v2182 = vld [vmem:[#allocation9 + $0x178] sm:$0xff]
    %v2183 = vld [vmem:[#allocation9 + $0x180] sm:$0xff]
    %v2184 = vld [vmem:[#allocation9 + $0x188] sm:$0xff]
    %v2185 = vld [vmem:[#allocation9 + $0x190] sm:$0xff]
    %v2186 = vld [vmem:[#allocation9 + $0x198] sm:$0xff]
    %v2187 = vld [vmem:[#allocation9 + $0x1a0] sm:$0xff]
    %v2188 = vld [vmem:[#allocation9 + $0x1a8] sm:$0xff]
    %v2189 = vld [vmem:[#allocation9 + $0x1b0] sm:$0xff]
    %v2190 = vld [vmem:[#allocation9 + $0x1b8] sm:$0xff]
    %v2191 = vld [vmem:[#allocation9 + $0x1c0] sm:$0xff]
    %v2192 = vld [vmem:[#allocation9 + $0x1c8] sm:$0xff]
    %v2193 = vld [vmem:[#allocation9 + $0x1d0] sm:$0xff]
    %v2194 = vld [vmem:[#allocation9 + $0x1d8] sm:$0xff]
    %v2195 = vld [vmem:[#allocation9 + $0x1e0] sm:$0xff]
    %v2196 = vld [vmem:[#allocation9 + $0x1e8] sm:$0xff]
    %v2197 = vld [vmem:[#allocation9 + $0x1f0] sm:$0xff]
    %v2198 = vld [vmem:[#allocation9 + $0x1f8] sm:$0xff]
    %v2199 = vld [vmem:[%s6] sm:$0xf]
    %v2200 = vld [vmem:[#allocation3] sm:$0x3]
    %v2201 = vld [vmem:[#allocation3 + $0x2] sm:$0x3]
    %v2202 = vld [vmem:[#allocation3 + $0x4] sm:$0x3]
    %v2203 = vld [vmem:[#allocation3 + $0x6] sm:$0x3]
    %v2204 = vld [vmem:[#allocation3 + $0x8] sm:$0x3]
    %v2205 = vld [vmem:[#allocation3 + $0xa] sm:$0x3]
    %v2206 = vld [vmem:[#allocation3 + $0xc] sm:$0x3]
    %v2207 = vld [vmem:[#allocation3 + $0xe] sm:$0x3]
    %v2209 = vlaneseq
    %v2210 = vshrl.u32 %v2209, 7
    %v2211 = vsub.s32 0, %v2210
    %v2212 = vrot.slane %v2199, %v2211
    %v2213 = vlaneseq
    %v2214 = vshrl.u32 %v2213, 7
    %v2215 = vsub.s32 1, %v2214
    %v2216 = vrot.slane %v2199, %v2215
    %v2217 = vlaneseq
    %v2218 = vshrl.u32 %v2217, 7
    %v2219 = vsub.s32 2, %v2218
    %v2220 = vrot.slane %v2199, %v2219
    %v2221 = vlaneseq
    %v2222 = vshrl.u32 %v2221, 7
    %v2223 = vsub.s32 3, %v2222
    %v2224 = vrot.slane %v2199, %v2223
    %v2237 = vcombine.low %v2200, %v2201
    %v2238 = vcombine.low %v2202, %v2203
    %v2240 = vunpack.c.l.s4 1983009808
    %v2241 = vunpack.c.0.s8 %v2240
    %v2242 = vlaneseq
    %v2243 = vshrl.u32 %v2242, 7
    %v2244 = vsub.s32 %v2241, %v2243
    %v2245 = vrot.slane %v2237, %v2244
    %v2247 = vunpack.c.l.s4 1983009808
    %v2248 = vunpack.c.0.s8 %v2247
    %v2249 = vlaneseq
    %v2250 = vshrl.u32 %v2249, 7
    %v2251 = vsub.s32 %v2248, %v2250
    %v2252 = vrot.slane %v2238, %v2251
    %v2253 = vcombine.low %v2245, %v2252
    %v2254 = vcombine.low %v2204, %v2205
    %v2255 = vcombine.low %v2206, %v2207
    %v2257 = vunpack.c.l.s4 1983009808
    %v2258 = vunpack.c.0.s8 %v2257
    %v2259 = vlaneseq
    %v2260 = vshrl.u32 %v2259, 7
    %v2261 = vsub.s32 %v2258, %v2260
    %v2262 = vrot.slane %v2254, %v2261
    %v2264 = vunpack.c.l.s4 1983009808
    %v2265 = vunpack.c.0.s8 %v2264
    %v2266 = vlaneseq
    %v2267 = vshrl.u32 %v2266, 7
    %v2268 = vsub.s32 %v2265, %v2267
    %v2269 = vrot.slane %v2255, %v2268
    %v2270 = vcombine.low %v2262, %v2269
    %2273 = vmatprep.subr.mxu0 %v2072
    %2274 = vmatpush1.msra.mxu0 %v2071
    %2275 = vmatprep.subr.mxu0 %v2076
    %2276 = vmatpush1.msra.mxu0 %v2075
    %2277 = vmatprep.subr.mxu0 %v2080
    %2278 = vmatpush1.msra.mxu0 %v2079
    %2279 = vmatprep.subr.mxu0 %v2084
    %2280 = vmatpush1.msra.mxu0 %v2083
    %2281 = vmatprep.subr.mxu0 %v2088
    %2282 = vmatpush1.msra.mxu0 %v2087
    %2283 = vmatprep.subr.mxu0 %v2092
    %2284 = vmatpush1.msra.mxu0 %v2091
    %2285 = vmatprep.subr.mxu0 %v2096
    %2286 = vmatpush1.msra.mxu0 %v2095
    %2287 = vmatprep.subr.mxu0 %v2100
    %2288 = vmatpush1.msra.mxu0 %v2099
    %2289 = vmatprep.subr.mxu0 %v2104
    %2290 = vmatpush1.msra.mxu0 %v2103
    %2291 = vmatprep.subr.mxu0 %v2108
    %2292 = vmatpush1.msra.mxu0 %v2107
    %2293 = vmatprep.subr.mxu0 %v2112
    %2294 = vmatpush1.msra.mxu0 %v2111
    %2295 = vmatprep.subr.mxu0 %v2116
    %2296 = vmatpush1.msra.mxu0 %v2115
    %2297 = vmatprep.subr.mxu0 %v2120
    %2298 = vmatpush1.msra.mxu0 %v2119
    %2299 = vmatprep.subr.mxu0 %v2124
    %2300 = vmatpush1.msra.mxu0 %v2123
    %2301 = vmatprep.subr.mxu0 %v2128
    %2302 = vmatpush1.msra.mxu0 %v2127
    %2303 = vmatprep.subr.mxu0 %v2132
    %2304 = vmatpush1.msra.mxu0 %v2131
    %2305 = vmatprep.subr.mxu0 0.0
    %2306 = vmatpush1.msra.mxu0 0.0
    %2307 = vmatprep.subr.mxu0 0.0
    %2308 = vmatpush1.msra.mxu0 0.0
    %2309 = vmatprep.subr.mxu0 0.0
    %2310 = vmatpush1.msra.mxu0 0.0
    %2311 = vmatprep.subr.mxu0 0.0
    %2312 = vmatpush1.msra.mxu0 0.0
    %2313 = vmatprep.subr.mxu0 0.0
    %2314 = vmatpush1.msra.mxu0 0.0
    %2315 = vmatprep.subr.mxu0 0.0
    %2316 = vmatpush1.msra.mxu0 0.0
    %2317 = vmatprep.subr.mxu0 0.0
    %2318 = vmatpush1.msra.mxu0 0.0
    %2319 = vmatprep.subr.mxu0 0.0
    %2320 = vmatpush1.msra.mxu0 0.0
    %2321 = vmatprep.subr.mxu0 0.0
    %2322 = vmatpush1.msra.mxu0 0.0
    %2323 = vmatprep.subr.mxu0 0.0
    %2324 = vmatpush1.msra.mxu0 0.0
    %2325 = vmatprep.subr.mxu0 0.0
    %2326 = vmatpush1.msra.mxu0 0.0
    %2327 = vmatprep.subr.mxu0 0.0
    %2328 = vmatpush1.msra.mxu0 0.0
    %2329 = vmatprep.subr.mxu0 0.0
    %2330 = vmatpush1.msra.mxu0 0.0
    %2331 = vmatprep.subr.mxu0 0.0
    %2332 = vmatpush1.msra.mxu0 0.0
    %2333 = vmatprep.subr.mxu0 0.0
    %2334 = vmatpush1.msra.mxu0 0.0
    %2335 = vmatprep.subr.mxu0 0.0
    %2336 = vmatpush1.msra.mxu0 0.0
    %2337 = vmatprep.mubr.f32.mxu0 0.0
    %2338 = vmatmul.mubr.f32.gmra.mrb[0].mxu0 %v2253
    %v2339 = vpop.f32.mrb[0].mxu0
    %v2340 = vadd.f32 %v2212, %v2339
    %v2341 = vpop.f32.mrb[0].mxu0
    %v2342 = vadd.f32 %v2216, %v2341
    %2343 = vmatprep.mubr.f32.mxu0 0.0
    %2344 = vmatmul.mubr.f32.gmra.mrb[0].mxu0 %v2270
    %v2345 = vpop.f32.mrb[0].mxu0
    %v2346 = vadd.f32 %v2212, %v2345
    %v2347 = vpop.f32.mrb[0].mxu0
    %v2348 = vadd.f32 %v2216, %v2347
    %2349 = vdwg.mxu0
    %2350 = vmatprep.subr.mxu0 %v2074
    %2351 = vmatpush1.msra.mxu0 %v2073
    %2352 = vmatprep.subr.mxu0 %v2078
    %2353 = vmatpush1.msra.mxu0 %v2077
    %2354 = vmatprep.subr.mxu0 %v2082
    %2355 = vmatpush1.msra.mxu0 %v2081
    %2356 = vmatprep.subr.mxu0 %v2086
    %2357 = vmatpush1.msra.mxu0 %v2085
    %2358 = vmatprep.subr.mxu0 %v2090
    %2359 = vmatpush1.msra.mxu0 %v2089
    %2360 = vmatprep.subr.mxu0 %v2094
    %2361 = vmatpush1.msra.mxu0 %v2093
    %2362 = vmatprep.subr.mxu0 %v2098
    %2363 = vmatpush1.msra.mxu0 %v2097
    %2364 = vmatprep.subr.mxu0 %v2102
    %2365 = vmatpush1.msra.mxu0 %v2101
    %2366 = vmatprep.subr.mxu0 %v2106
    %2367 = vmatpush1.msra.mxu0 %v2105
    %2368 = vmatprep.subr.mxu0 %v2110
    %2369 = vmatpush1.msra.mxu0 %v2109
    %2370 = vmatprep.subr.mxu0 %v2114
    %2371 = vmatpush1.msra.mxu0 %v2113
    %2372 = vmatprep.subr.mxu0 %v2118
    %2373 = vmatpush1.msra.mxu0 %v2117
    %2374 = vmatprep.subr.mxu0 %v2122
    %2375 = vmatpush1.msra.mxu0 %v2121
    %2376 = vmatprep.subr.mxu0 %v2126
    %2377 = vmatpush1.msra.mxu0 %v2125
    %2378 = vmatprep.subr.mxu0 %v2130
    %2379 = vmatpush1.msra.mxu0 %v2129
    %2380 = vmatprep.subr.mxu0 %v2134
    %2381 = vmatpush1.msra.mxu0 %v2133
    %2382 = vmatprep.subr.mxu0 0.0
    %2383 = vmatpush1.msra.mxu0 0.0
    %2384 = vmatprep.subr.mxu0 0.0
    %2385 = vmatpush1.msra.mxu0 0.0
    %2386 = vmatprep.subr.mxu0 0.0
    %2387 = vmatpush1.msra.mxu0 0.0
    %2388 = vmatprep.subr.mxu0 0.0
    %2389 = vmatpush1.msra.mxu0 0.0
    %2390 = vmatprep.subr.mxu0 0.0
    %2391 = vmatpush1.msra.mxu0 0.0
    %2392 = vmatprep.subr.mxu0 0.0
    %2393 = vmatpush1.msra.mxu0 0.0
    %2394 = vmatprep.subr.mxu0 0.0
    %2395 = vmatpush1.msra.mxu0 0.0
    %2396 = vmatprep.subr.mxu0 0.0
    %2397 = vmatpush1.msra.mxu0 0.0
    %2398 = vmatprep.subr.mxu0 0.0
    %2399 = vmatpush1.msra.mxu0 0.0
    %2400 = vmatprep.subr.mxu0 0.0
    %2401 = vmatpush1.msra.mxu0 0.0
    %2402 = vmatprep.subr.mxu0 0.0
    %2403 = vmatpush1.msra.mxu0 0.0
    %2404 = vmatprep.subr.mxu0 0.0
    %2405 = vmatpush1.msra.mxu0 0.0
    %2406 = vmatprep.subr.mxu0 0.0
    %2407 = vmatpush1.msra.mxu0 0.0
    %2408 = vmatprep.subr.mxu0 0.0
    %2409 = vmatpush1.msra.mxu0 0.0
    %2410 = vmatprep.subr.mxu0 0.0
    %2411 = vmatpush1.msra.mxu0 0.0
    %2412 = vmatprep.subr.mxu0 0.0
    %2413 = vmatpush1.msra.mxu0 0.0
    %2414 = vmatprep.mubr.f32.mxu0 0.0
    %2415 = vmatmul.mubr.f32.gmra.mrb[0].mxu0 %v2253
    %v2416 = vpop.f32.mrb[0].mxu0
    %v2417 = vadd.f32 %v2220, %v2416
    %v2418 = vpop.f32.mrb[0].mxu0
    %v2419 = vadd.f32 %v2224, %v2418
    %2420 = vmatprep.mubr.f32.mxu0 0.0
    %2421 = vmatmul.mubr.f32.gmra.mrb[0].mxu0 %v2270
    %v2422 = vpop.f32.mrb[0].mxu0
    %v2423 = vadd.f32 %v2220, %v2422
    %v2424 = vpop.f32.mrb[0].mxu0
    %v2425 = vadd.f32 %v2224, %v2424
    %2426 = vdwg.mxu0
    %v2435 = vcombine.low %v2340, %v2342
    %v2436 = vcombine.high %v2340, %v2342
    %v2437 = vcombine.low %v2417, %v2419
    %v2438 = vcombine.high %v2417, %v2419
    %v2440 = vunpack.c.l.s4 1983009808
    %v2441 = vunpack.c.0.s8 %v2440
    %v2442 = vlaneseq
    %v2443 = vshrl.u32 %v2442, 7
    %v2444 = vsub.s32 %v2441, %v2443
    %v2445 = vrot.slane %v2435, %v2444
    %v2447 = vunpack.c.l.s4 1983009808
    %v2448 = vunpack.c.0.s8 %v2447
    %v2449 = vlaneseq
    %v2450 = vshrl.u32 %v2449, 7
    %v2451 = vsub.s32 %v2448, %v2450
    %v2452 = vrot.slane %v2436, %v2451
    %v2454 = vunpack.c.l.s4 1983009808
    %v2455 = vunpack.c.0.s8 %v2454
    %v2456 = vlaneseq
    %v2457 = vshrl.u32 %v2456, 7
    %v2458 = vsub.s32 %v2455, %v2457
    %v2459 = vrot.slane %v2437, %v2458
    %v2461 = vunpack.c.l.s4 1983009808
    %v2462 = vunpack.c.0.s8 %v2461
    %v2463 = vlaneseq
    %v2464 = vshrl.u32 %v2463, 7
    %v2465 = vsub.s32 %v2462, %v2464
    %v2466 = vrot.slane %v2438, %v2465
    %v2467 = vcombine.low %v2445, %v2459
    %v2468 = vcombine.high %v2445, %v2459
    %v2469 = vcombine.low %v2452, %v2466
    %v2470 = vcombine.high %v2452, %v2466
    %v2471 = vcombine.low %v2346, %v2348
    %v2472 = vcombine.high %v2346, %v2348
    %v2473 = vcombine.low %v2423, %v2425
    %v2474 = vcombine.high %v2423, %v2425
    %v2476 = vunpack.c.l.s4 1983009808
    %v2477 = vunpack.c.0.s8 %v2476
    %v2478 = vlaneseq
    %v2479 = vshrl.u32 %v2478, 7
    %v2480 = vsub.s32 %v2477, %v2479
    %v2481 = vrot.slane %v2471, %v2480
    %v2483 = vunpack.c.l.s4 1983009808
    %v2484 = vunpack.c.0.s8 %v2483
    %v2485 = vlaneseq
    %v2486 = vshrl.u32 %v2485, 7
    %v2487 = vsub.s32 %v2484, %v2486
    %v2488 = vrot.slane %v2472, %v2487
    %v2490 = vunpack.c.l.s4 1983009808
    %v2491 = vunpack.c.0.s8 %v2490
    %v2492 = vlaneseq
    %v2493 = vshrl.u32 %v2492, 7
    %v2494 = vsub.s32 %v2491, %v2493
    %v2495 = vrot.slane %v2473, %v2494
    %v2497 = vunpack.c.l.s4 1983009808
    %v2498 = vunpack.c.0.s8 %v2497
    %v2499 = vlaneseq
    %v2500 = vshrl.u32 %v2499, 7
    %v2501 = vsub.s32 %v2498, %v2500
    %v2502 = vrot.slane %v2474, %v2501
    %v2503 = vcombine.low %v2481, %v2495
    %v2504 = vcombine.high %v2481, %v2495
    %v2505 = vcombine.low %v2488, %v2502
    %v2506 = vcombine.high %v2488, %v2502
    %2515 = vst [vmem:[#allocation2] sm:$0xff] %v2467
    %2516 = vst [vmem:[#allocation2 + $0x8] sm:$0xff] %v2468
    %2517 = vst [vmem:[#allocation2 + $0x10] sm:$0xff] %v2469
    %2518 = vst [vmem:[#allocation2 + $0x18] sm:$0xff] %v2470
    %2519 = vst [vmem:[#allocation2 + $0x20] sm:$0xff] %v2503
    %2520 = vst [vmem:[#allocation2 + $0x28] sm:$0xff] %v2504
    %2521 = vst [vmem:[#allocation2 + $0x30] sm:$0xff] %v2505
    %2522 = vst [vmem:[#allocation2 + $0x38] sm:$0xff] %v2506
    %v2523 = vld [vmem:[#allocation2] sm:$0xff]
    %2524 = vmatprep.subr.mxu0 %v2136
    %2525 = vmatpush1.msra.mxu0 %v2135
    %2526 = vmatprep.subr.mxu0 %v2140
    %2527 = vmatpush1.msra.mxu0 %v2139
    %2528 = vmatprep.subr.mxu0 %v2144
    %2529 = vmatpush1.msra.mxu0 %v2143
    %2530 = vmatprep.subr.mxu0 %v2148
    %2531 = vmatpush1.msra.mxu0 %v2147
    %2532 = vmatprep.subr.mxu0 %v2152
    %2533 = vmatpush1.msra.mxu0 %v2151
    %2534 = vmatprep.subr.mxu0 %v2156
    %2535 = vmatpush1.msra.mxu0 %v2155
    %2536 = vmatprep.subr.mxu0 %v2160
    %2537 = vmatpush1.msra.mxu0 %v2159
    %2538 = vmatprep.subr.mxu0 %v2164
    %2539 = vmatpush1.msra.mxu0 %v2163
    %2540 = vmatprep.subr.mxu0 %v2168
    %2541 = vmatpush1.msra.mxu0 %v2167
    %2542 = vmatprep.subr.mxu0 %v2172
    %2543 = vmatpush1.msra.mxu0 %v2171
    %2544 = vmatprep.subr.mxu0 %v2176
    %2545 = vmatpush1.msra.mxu0 %v2175
    %2546 = vmatprep.subr.mxu0 %v2180
    %2547 = vmatpush1.msra.mxu0 %v2179
    %2548 = vmatprep.subr.mxu0 %v2184
    %2549 = vmatpush1.msra.mxu0 %v2183
    %2550 = vmatprep.subr.mxu0 %v2188
    %2551 = vmatpush1.msra.mxu0 %v2187
    %2552 = vmatprep.subr.mxu0 %v2192
    %2553 = vmatpush1.msra.mxu0 %v2191
    %2554 = vmatprep.subr.mxu0 %v2196
    %2555 = vmatpush1.msra.mxu0 %v2195
    %2556 = vmatprep.subr.mxu0 0.0
    %2557 = vmatpush1.msra.mxu0 0.0
    %2558 = vmatprep.subr.mxu0 0.0
    %2559 = vmatpush1.msra.mxu0 0.0
    %2560 = vmatprep.subr.mxu0 0.0
    %2561 = vmatpush1.msra.mxu0 0.0
    %2562 = vmatprep.subr.mxu0 0.0
    %2563 = vmatpush1.msra.mxu0 0.0
    %2564 = vmatprep.subr.mxu0 0.0
    %2565 = vmatpush1.msra.mxu0 0.0
    %2566 = vmatprep.subr.mxu0 0.0
    %2567 = vmatpush1.msra.mxu0 0.0
    %2568 = vmatprep.subr.mxu0 0.0
    %2569 = vmatpush1.msra.mxu0 0.0
    %2570 = vmatprep.subr.mxu0 0.0
    %2571 = vmatpush1.msra.mxu0 0.0
    %2572 = vmatprep.subr.mxu0 0.0
    %2573 = vmatpush1.msra.mxu0 0.0
    %2574 = vmatprep.subr.mxu0 0.0
    %2575 = vmatpush1.msra.mxu0 0.0
    %2576 = vmatprep.subr.mxu0 0.0
    %2577 = vmatpush1.msra.mxu0 0.0
    %2578 = vmatprep.subr.mxu0 0.0
    %2579 = vmatpush1.msra.mxu0 0.0
    %2580 = vmatprep.subr.mxu0 0.0
    %2581 = vmatpush1.msra.mxu0 0.0
    %2582 = vmatprep.subr.mxu0 0.0
    %2583 = vmatpush1.msra.mxu0 0.0
    %2584 = vmatprep.subr.mxu0 0.0
    %2585 = vmatpush1.msra.mxu0 0.0
    %2586 = vmatprep.subr.mxu0 0.0
    %2587 = vmatpush1.msra.mxu0 0.0
    %2588 = vmatprep.mubr.f32.mxu0 0.0
    %2589 = vmatmul.mubr.f32.gmra.mrb[0].mxu0 0.0
    %v2590 = vpop.f32.mrb[0].mxu0
    %v2591 = vadd.f32 0.0, %v2590
    %v2592 = vpop.f32.mrb[0].mxu0
    %v2593 = vadd.f32 0.0, %v2592
    %2594 = vdwg.mxu0
    %2595 = vmatprep.subr.mxu0 %v2138
    %2596 = vmatpush1.msra.mxu0 %v2137
    %2597 = vmatprep.subr.mxu0 %v2142
    %2598 = vmatpush1.msra.mxu0 %v2141
    %2599 = vmatprep.subr.mxu0 %v2146
    %2600 = vmatpush1.msra.mxu0 %v2145
    %2601 = vmatprep.subr.mxu0 %v2150
    %2602 = vmatpush1.msra.mxu0 %v2149
    %2603 = vmatprep.subr.mxu0 %v2154
    %2604 = vmatpush1.msra.mxu0 %v2153
    %2605 = vmatprep.subr.mxu0 %v2158
    %2606 = vmatpush1.msra.mxu0 %v2157
    %2607 = vmatprep.subr.mxu0 %v2162
    %2608 = vmatpush1.msra.mxu0 %v2161
    %2609 = vmatprep.subr.mxu0 %v2166
    %2610 = vmatpush1.msra.mxu0 %v2165
    %2611 = vmatprep.subr.mxu0 %v2170
    %2612 = vmatpush1.msra.mxu0 %v2169
    %2613 = vmatprep.subr.mxu0 %v2174
    %2614 = vmatpush1.msra.mxu0 %v2173
    %2615 = vmatprep.subr.mxu0 %v2178
    %2616 = vmatpush1.msra.mxu0 %v2177
    %2617 = vmatprep.subr.mxu0 %v2182
    %2618 = vmatpush1.msra.mxu0 %v2181
    %2619 = vmatprep.subr.mxu0 %v2186
    %2620 = vmatpush1.msra.mxu0 %v2185
    %2621 = vmatprep.subr.mxu0 %v2190
    %2622 = vmatpush1.msra.mxu0 %v2189
    %2623 = vmatprep.subr.mxu0 %v2194
    %2624 = vmatpush1.msra.mxu0 %v2193
    %2625 = vmatprep.subr.mxu0 %v2198
    %2626 = vmatpush1.msra.mxu0 %v2197
    %2627 = vmatprep.subr.mxu0 0.0
    %2628 = vmatpush1.msra.mxu0 0.0
    %2629 = vmatprep.subr.mxu0 0.0
    %2630 = vmatpush1.msra.mxu0 0.0
    %2631 = vmatprep.subr.mxu0 0.0
    %2632 = vmatpush1.msra.mxu0 0.0
    %2633 = vmatprep.subr.mxu0 0.0
    %2634 = vmatpush1.msra.mxu0 0.0
    %2635 = vmatprep.subr.mxu0 0.0
    %2636 = vmatpush1.msra.mxu0 0.0
    %2637 = vmatprep.subr.mxu0 0.0
    %2638 = vmatpush1.msra.mxu0 0.0
    %2639 = vmatprep.subr.mxu0 0.0
    %2640 = vmatpush1.msra.mxu0 0.0
    %2641 = vmatprep.subr.mxu0 0.0
    %2642 = vmatpush1.msra.mxu0 0.0
    %2643 = vmatprep.subr.mxu0 0.0
    %2644 = vmatpush1.msra.mxu0 0.0
    %2645 = vmatprep.subr.mxu0 0.0
    %2646 = vmatpush1.msra.mxu0 0.0
    %2647 = vmatprep.subr.mxu0 0.0
    %2648 = vmatpush1.msra.mxu0 0.0
    %2649 = vmatprep.subr.mxu0 0.0
    %2650 = vmatpush1.msra.mxu0 0.0
    %2651 = vmatprep.subr.mxu0 0.0
    %2652 = vmatpush1.msra.mxu0 0.0
    %2653 = vmatprep.subr.mxu0 0.0
    %2654 = vmatpush1.msra.mxu0 0.0
    %2655 = vmatprep.subr.mxu0 0.0
    %2656 = vmatpush1.msra.mxu0 0.0
    %2657 = vmatprep.subr.mxu0 0.0
    %2658 = vmatpush1.msra.mxu0 0.0
    %2659 = vmatprep.mubr.f32.mxu0 0.0
    %2660 = vmatmul.mubr.f32.gmra.mrb[0].mxu0 0.0
    %v2661 = vpop.f32.mrb[0].mxu0
    %v2662 = vadd.f32 0.0, %v2661
    %v2663 = vpop.f32.mrb[0].mxu0
    %v2664 = vadd.f32 0.0, %v2663
    %2665 = vdwg.mxu0
    %v2670 = vcombine.low %v2591, %v2593
    %v2671 = vcombine.low %v2662, %v2664
    %v2673 = vunpack.c.l.s4 1983009808
    %v2674 = vunpack.c.0.s8 %v2673
    %v2675 = vlaneseq
    %v2676 = vshrl.u32 %v2675, 7
    %v2677 = vsub.s32 %v2674, %v2676
    %v2678 = vrot.slane %v2670, %v2677
    %v2680 = vunpack.c.l.s4 1983009808
    %v2681 = vunpack.c.0.s8 %v2680
    %v2682 = vlaneseq
    %v2683 = vshrl.u32 %v2682, 7
    %v2684 = vsub.s32 %v2681, %v2683
    %v2685 = vrot.slane %v2671, %v2684
    %v2686 = vcombine.low %v2678, %v2685
    %v2688 = vadd.f32 %v2523, %v2686
    %v2689 = vxor.u32 %v2688, 2147483648
    %v2690 = vmul.f32 %v2689, 1.442695
    %v2691 = vpow.pop %v2690
    %v2692 = vadd.f32 %v2691, 1.0
    %v2693 = vrcp.pop %v2692
    %v2694 = vmul.f32 1.0, %v2693
    %v2696 = vrot.slane %v2688, 2
    %v2698 = vxor.u32 %v2696, 2147483648
    %v2699 = vmul.f32 %v2698, 1.442695
    %v2700 = vpow.pop %v2699
    %v2701 = vadd.f32 %v2700, 1.0
    %v2702 = vrcp.pop %v2701
    %v2703 = vmul.f32 1.0, %v2702
    %v2704 = vrot.slane %v2688, 4
    %v2706 = vtanh.pop %v2704
    %v2707 = vrot.slane %v2688, 6
    %v2709 = vxor.u32 %v2707, 2147483648
    %v2710 = vmul.f32 %v2709, 1.442695
    %v2711 = vpow.pop %v2710
    %v2712 = vadd.f32 %v2711, 1.0
    %v2713 = vrcp.pop %v2712
    %v2714 = vmul.f32 1.0, %v2713
    %v2715 = vmul.f32 %v2703, 0.0
    %v2716 = vmul.f32 %v2694, %v2706
    %v2717 = vadd.f32 %v2715, %v2716
    %v2718 = vtanh.pop %v2717
    %v2719 = vmul.f32 %v2714, %v2718
    %v2720 = vld [vmem:[%s671] sm:$0xff]
    %2721 = vmatprep.subr.mxu0 %v2136
    %2722 = vmatpush1.msra.mxu0 %v2135
    %2723 = vmatprep.subr.mxu0 %v2140
    %2724 = vmatpush1.msra.mxu0 %v2139
    %2725 = vmatprep.subr.mxu0 %v2144
    %2726 = vmatpush1.msra.mxu0 %v2143
    %2727 = vmatprep.subr.mxu0 %v2148
    %2728 = vmatpush1.msra.mxu0 %v2147
    %2729 = vmatprep.subr.mxu0 %v2152
    %2730 = vmatpush1.msra.mxu0 %v2151
    %2731 = vmatprep.subr.mxu0 %v2156
    %2732 = vmatpush1.msra.mxu0 %v2155
    %2733 = vmatprep.subr.mxu0 %v2160
    %2734 = vmatpush1.msra.mxu0 %v2159
    %2735 = vmatprep.subr.mxu0 %v2164
    %2736 = vmatpush1.msra.mxu0 %v2163
    %2737 = vmatprep.subr.mxu0 %v2168
    %2738 = vmatpush1.msra.mxu0 %v2167
    %2739 = vmatprep.subr.mxu0 %v2172
    %2740 = vmatpush1.msra.mxu0 %v2171
    %2741 = vmatprep.subr.mxu0 %v2176
    %2742 = vmatpush1.msra.mxu0 %v2175
    %2743 = vmatprep.subr.mxu0 %v2180
    %2744 = vmatpush1.msra.mxu0 %v2179
    %2745 = vmatprep.subr.mxu0 %v2184
    %2746 = vmatpush1.msra.mxu0 %v2183
    %2747 = vmatprep.subr.mxu0 %v2188
    %2748 = vmatpush1.msra.mxu0 %v2187
    %2749 = vmatprep.subr.mxu0 %v2192
    %2750 = vmatpush1.msra.mxu0 %v2191
    %2751 = vmatprep.subr.mxu0 %v2196
    %2752 = vmatpush1.msra.mxu0 %v2195
    %2753 = vmatprep.subr.mxu0 0.0
    %2754 = vmatpush1.msra.mxu0 0.0
    %2755 = vmatprep.subr.mxu0 0.0
    %2756 = vmatpush1.msra.mxu0 0.0
    %2757 = vmatprep.subr.mxu0 0.0
    %2758 = vmatpush1.msra.mxu0 0.0
    %2759 = vmatprep.subr.mxu0 0.0
    %2760 = vmatpush1.msra.mxu0 0.0
    %2761 = vmatprep.subr.mxu0 0.0
    %2762 = vmatpush1.msra.mxu0 0.0
    %2763 = vmatprep.subr.mxu0 0.0
    %2764 = vmatpush1.msra.mxu0 0.0
    %2765 = vmatprep.subr.mxu0 0.0
    %2766 = vmatpush1.msra.mxu0 0.0
    %2767 = vmatprep.subr.mxu0 0.0
    %2768 = vmatpush1.msra.mxu0 0.0
    %2769 = vmatprep.subr.mxu0 0.0
    %2770 = vmatpush1.msra.mxu0 0.0
    %2771 = vmatprep.subr.mxu0 0.0
    %2772 = vmatpush1.msra.mxu0 0.0
    %2773 = vmatprep.subr.mxu0 0.0
    %2774 = vmatpush1.msra.mxu0 0.0
    %2775 = vmatprep.subr.mxu0 0.0
    %2776 = vmatpush1.msra.mxu0 0.0
    %2777 = vmatprep.subr.mxu0 0.0
    %2778 = vmatpush1.msra.mxu0 0.0
    %2779 = vmatprep.subr.mxu0 0.0
    %2780 = vmatpush1.msra.mxu0 0.0
    %2781 = vmatprep.subr.mxu0 0.0
    %2782 = vmatpush1.msra.mxu0 0.0
    %2783 = vmatprep.subr.mxu0 0.0
    %2784 = vmatpush1.msra.mxu0 0.0
    %2785 = vmatprep.mubr.f32.mxu0 0.0
    %2786 = vmatmul.mubr.f32.gmra.mrb[0].mxu0 %v2719
    %v2787 = vpop.f32.mrb[0].mxu0
    %v2788 = vadd.f32 0.0, %v2787
    %v2789 = vpop.f32.mrb[0].mxu0
    %v2790 = vadd.f32 0.0, %v2789
    %2791 = vdwg.mxu0
    %2792 = vmatprep.subr.mxu0 %v2138
    %2793 = vmatpush1.msra.mxu0 %v2137
    %2794 = vmatprep.subr.mxu0 %v2142
    %2795 = vmatpush1.msra.mxu0 %v2141
    %2796 = vmatprep.subr.mxu0 %v2146
    %2797 = vmatpush1.msra.mxu0 %v2145
    %2798 = vmatprep.subr.mxu0 %v2150
    %2799 = vmatpush1.msra.mxu0 %v2149
    %2800 = vmatprep.subr.mxu0 %v2154
    %2801 = vmatpush1.msra.mxu0 %v2153
    %2802 = vmatprep.subr.mxu0 %v2158
    %2803 = vmatpush1.msra.mxu0 %v2157
    %2804 = vmatprep.subr.mxu0 %v2162
    %2805 = vmatpush1.msra.mxu0 %v2161
    %2806 = vmatprep.subr.mxu0 %v2166
    %2807 = vmatpush1.msra.mxu0 %v2165
    %2808 = vmatprep.subr.mxu0 %v2170
    %2809 = vmatpush1.msra.mxu0 %v2169
    %2810 = vmatprep.subr.mxu0 %v2174
    %2811 = vmatpush1.msra.mxu0 %v2173
    %2812 = vmatprep.subr.mxu0 %v2178
    %2813 = vmatpush1.msra.mxu0 %v2177
    %2814 = vmatprep.subr.mxu0 %v2182
    %2815 = vmatpush1.msra.mxu0 %v2181
    %2816 = vmatprep.subr.mxu0 %v2186
    %2817 = vmatpush1.msra.mxu0 %v2185
    %2818 = vmatprep.subr.mxu0 %v2190
    %2819 = vmatpush1.msra.mxu0 %v2189
    %2820 = vmatprep.subr.mxu0 %v2194
    %2821 = vmatpush1.msra.mxu0 %v2193
    %2822 = vmatprep.subr.mxu0 %v2198
    %2823 = vmatpush1.msra.mxu0 %v2197
    %2824 = vmatprep.subr.mxu0 0.0
    %2825 = vmatpush1.msra.mxu0 0.0
    %2826 = vmatprep.subr.mxu0 0.0
    %2827 = vmatpush1.msra.mxu0 0.0
    %2828 = vmatprep.subr.mxu0 0.0
    %2829 = vmatpush1.msra.mxu0 0.0
    %2830 = vmatprep.subr.mxu0 0.0
    %2831 = vmatpush1.msra.mxu0 0.0
    %2832 = vmatprep.subr.mxu0 0.0
    %2833 = vmatpush1.msra.mxu0 0.0
    %2834 = vmatprep.subr.mxu0 0.0
    %2835 = vmatpush1.msra.mxu0 0.0
    %2836 = vmatprep.subr.mxu0 0.0
    %2837 = vmatpush1.msra.mxu0 0.0
    %2838 = vmatprep.subr.mxu0 0.0
    %2839 = vmatpush1.msra.mxu0 0.0
    %2840 = vmatprep.subr.mxu0 0.0
    %2841 = vmatpush1.msra.mxu0 0.0
    %2842 = vmatprep.subr.mxu0 0.0
    %2843 = vmatpush1.msra.mxu0 0.0
    %2844 = vmatprep.subr.mxu0 0.0
    %2845 = vmatpush1.msra.mxu0 0.0
    %2846 = vmatprep.subr.mxu0 0.0
    %2847 = vmatpush1.msra.mxu0 0.0
    %2848 = vmatprep.subr.mxu0 0.0
    %2849 = vmatpush1.msra.mxu0 0.0
    %2850 = vmatprep.subr.mxu0 0.0
    %2851 = vmatpush1.msra.mxu0 0.0
    %2852 = vmatprep.subr.mxu0 0.0
    %2853 = vmatpush1.msra.mxu0 0.0
    %2854 = vmatprep.subr.mxu0 0.0
    %2855 = vmatpush1.msra.mxu0 0.0
    %2856 = vmatprep.mubr.f32.mxu0 0.0
    %2857 = vmatmul.mubr.f32.gmra.mrb[0].mxu0 %v2719
    %v2858 = vpop.f32.mrb[0].mxu0
    %v2859 = vadd.f32 0.0, %v2858
    %v2860 = vpop.f32.mrb[0].mxu0
    %v2861 = vadd.f32 0.0, %v2860
    %2862 = vdwg.mxu0
    %v2867 = vcombine.low %v2788, %v2790
    %v2868 = vcombine.low %v2859, %v2861
    %v2870 = vunpack.c.l.s4 1983009808
    %v2871 = vunpack.c.0.s8 %v2870
    %v2872 = vlaneseq
    %v2873 = vshrl.u32 %v2872, 7
    %v2874 = vsub.s32 %v2871, %v2873
    %v2875 = vrot.slane %v2867, %v2874
    %v2877 = vunpack.c.l.s4 1983009808
    %v2878 = vunpack.c.0.s8 %v2877
    %v2879 = vlaneseq
    %v2880 = vshrl.u32 %v2879, 7
    %v2881 = vsub.s32 %v2878, %v2880
    %v2882 = vrot.slane %v2868, %v2881
    %v2883 = vcombine.low %v2875, %v2882
    %v2885 = vadd.f32 %v2720, %v2883
    %v2886 = vxor.u32 %v2885, 2147483648
    %v2887 = vmul.f32 %v2886, 1.442695
    %v2888 = vpow.pop %v2887
    %v2889 = vadd.f32 %v2888, 1.0
    %v2890 = vrcp.pop %v2889
    %v2891 = vmul.f32 1.0, %v2890
    %v2893 = vrot.slane %v2885, 2
    %v2895 = vxor.u32 %v2893, 2147483648
    %v2896 = vmul.f32 %v2895, 1.442695
    %v2897 = vpow.pop %v2896
    %v2898 = vadd.f32 %v2897, 1.0
    %v2899 = vrcp.pop %v2898
    %v2900 = vmul.f32 1.0, %v2899
    %v2901 = vrot.slane %v2885, 4
    %v2903 = vtanh.pop %v2901
    %v2904 = vrot.slane %v2885, 6
    %v2906 = vxor.u32 %v2904, 2147483648
    %v2907 = vmul.f32 %v2906, 1.442695
    %v2908 = vpow.pop %v2907
    %v2909 = vadd.f32 %v2908, 1.0
    %v2910 = vrcp.pop %v2909
    %v2911 = vmul.f32 1.0, %v2910
    %v2912 = vmul.f32 %v2900, %v2717
    %v2913 = vmul.f32 %v2891, %v2903
    %v2914 = vadd.f32 %v2912, %v2913
    %v2915 = vtanh.pop %v2914
    %v2916 = vmul.f32 %v2911, %v2915
    %v2917 = vld [vmem:[%s871] sm:$0xff]
    %2918 = vmatprep.subr.mxu0 %v2136
    %2919 = vmatpush1.msra.mxu0 %v2135
    %2920 = vmatprep.subr.mxu0 %v2140
    %2921 = vmatpush1.msra.mxu0 %v2139
    %2922 = vmatprep.subr.mxu0 %v2144
    %2923 = vmatpush1.msra.mxu0 %v2143
    %2924 = vmatprep.subr.mxu0 %v2148
    %2925 = vmatpush1.msra.mxu0 %v2147
    %2926 = vmatprep.subr.mxu0 %v2152
    %2927 = vmatpush1.msra.mxu0 %v2151
    %2928 = vmatprep.subr.mxu0 %v2156
    %2929 = vmatpush1.msra.mxu0 %v2155
    %2930 = vmatprep.subr.mxu0 %v2160
    %2931 = vmatpush1.msra.mxu0 %v2159
    %2932 = vmatprep.subr.mxu0 %v2164
    %2933 = vmatpush1.msra.mxu0 %v2163
    %2934 = vmatprep.subr.mxu0 %v2168
    %2935 = vmatpush1.msra.mxu0 %v2167
    %2936 = vmatprep.subr.mxu0 %v2172
    %2937 = vmatpush1.msra.mxu0 %v2171
    %2938 = vmatprep.subr.mxu0 %v2176
    %2939 = vmatpush1.msra.mxu0 %v2175
    %2940 = vmatprep.subr.mxu0 %v2180
    %2941 = vmatpush1.msra.mxu0 %v2179
    %2942 = vmatprep.subr.mxu0 %v2184
    %2943 = vmatpush1.msra.mxu0 %v2183
    %2944 = vmatprep.subr.mxu0 %v2188
    %2945 = vmatpush1.msra.mxu0 %v2187
    %2946 = vmatprep.subr.mxu0 %v2192
    %2947 = vmatpush1.msra.mxu0 %v2191
    %2948 = vmatprep.subr.mxu0 %v2196
    %2949 = vmatpush1.msra.mxu0 %v2195
    %2950 = vmatprep.subr.mxu0 0.0
    %2951 = vmatpush1.msra.mxu0 0.0
    %2952 = vmatprep.subr.mxu0 0.0
    %2953 = vmatpush1.msra.mxu0 0.0
    %2954 = vmatprep.subr.mxu0 0.0
    %2955 = vmatpush1.msra.mxu0 0.0
    %2956 = vmatprep.subr.mxu0 0.0
    %2957 = vmatpush1.msra.mxu0 0.0
    %2958 = vmatprep.subr.mxu0 0.0
    %2959 = vmatpush1.msra.mxu0 0.0
    %2960 = vmatprep.subr.mxu0 0.0
    %2961 = vmatpush1.msra.mxu0 0.0
    %2962 = vmatprep.subr.mxu0 0.0
    %2963 = vmatpush1.msra.mxu0 0.0
    %2964 = vmatprep.subr.mxu0 0.0
    %2965 = vmatpush1.msra.mxu0 0.0
    %2966 = vmatprep.subr.mxu0 0.0
    %2967 = vmatpush1.msra.mxu0 0.0
    %2968 = vmatprep.subr.mxu0 0.0
    %2969 = vmatpush1.msra.mxu0 0.0
    %2970 = vmatprep.subr.mxu0 0.0
    %2971 = vmatpush1.msra.mxu0 0.0
    %2972 = vmatprep.subr.mxu0 0.0
    %2973 = vmatpush1.msra.mxu0 0.0
    %2974 = vmatprep.subr.mxu0 0.0
    %2975 = vmatpush1.msra.mxu0 0.0
    %2976 = vmatprep.subr.mxu0 0.0
    %2977 = vmatpush1.msra.mxu0 0.0
    %2978 = vmatprep.subr.mxu0 0.0
    %2979 = vmatpush1.msra.mxu0 0.0
    %2980 = vmatprep.subr.mxu0 0.0
    %2981 = vmatpush1.msra.mxu0 0.0
    %2982 = vmatprep.mubr.f32.mxu0 0.0
    %2983 = vmatmul.mubr.f32.gmra.mrb[0].mxu0 %v2916
    %v2984 = vpop.f32.mrb[0].mxu0
    %v2985 = vadd.f32 0.0, %v2984
    %v2986 = vpop.f32.mrb[0].mxu0
    %v2987 = vadd.f32 0.0, %v2986
    %2988 = vdwg.mxu0
    %2989 = vmatprep.subr.mxu0 %v2138
    %2990 = vmatpush1.msra.mxu0 %v2137
    %2991 = vmatprep.subr.mxu0 %v2142
    %2992 = vmatpush1.msra.mxu0 %v2141
    %2993 = vmatprep.subr.mxu0 %v2146
    %2994 = vmatpush1.msra.mxu0 %v2145
    %2995 = vmatprep.subr.mxu0 %v2150
    %2996 = vmatpush1.msra.mxu0 %v2149
    %2997 = vmatprep.subr.mxu0 %v2154
    %2998 = vmatpush1.msra.mxu0 %v2153
    %2999 = vmatprep.subr.mxu0 %v2158
    %3000 = vmatpush1.msra.mxu0 %v2157
    %3001 = vmatprep.subr.mxu0 %v2162
    %3002 = vmatpush1.msra.mxu0 %v2161
    %3003 = vmatprep.subr.mxu0 %v2166
    %3004 = vmatpush1.msra.mxu0 %v2165
    %3005 = vmatprep.subr.mxu0 %v2170
    %3006 = vmatpush1.msra.mxu0 %v2169
    %3007 = vmatprep.subr.mxu0 %v2174
    %3008 = vmatpush1.msra.mxu0 %v2173
    %3009 = vmatprep.subr.mxu0 %v2178
    %3010 = vmatpush1.msra.mxu0 %v2177
    %3011 = vmatprep.subr.mxu0 %v2182
    %3012 = vmatpush1.msra.mxu0 %v2181
    %3013 = vmatprep.subr.mxu0 %v2186
    %3014 = vmatpush1.msra.mxu0 %v2185
    %3015 = vmatprep.subr.mxu0 %v2190
    %3016 = vmatpush1.msra.mxu0 %v2189
    %3017 = vmatprep.subr.mxu0 %v2194
    %3018 = vmatpush1.msra.mxu0 %v2193
    %3019 = vmatprep.subr.mxu0 %v2198
    %3020 = vmatpush1.msra.mxu0 %v2197
    %3021 = vmatprep.subr.mxu0 0.0
    %3022 = vmatpush1.msra.mxu0 0.0
    %3023 = vmatprep.subr.mxu0 0.0
    %3024 = vmatpush1.msra.mxu0 0.0
    %3025 = vmatprep.subr.mxu0 0.0
    %3026 = vmatpush1.msra.mxu0 0.0
    %3027 = vmatprep.subr.mxu0 0.0
    %3028 = vmatpush1.msra.mxu0 0.0
    %3029 = vmatprep.subr.mxu0 0.0
    %3030 = vmatpush1.msra.mxu0 0.0
    %3031 = vmatprep.subr.mxu0 0.0
    %3032 = vmatpush1.msra.mxu0 0.0
    %3033 = vmatprep.subr.mxu0 0.0
    %3034 = vmatpush1.msra.mxu0 0.0
    %3035 = vmatprep.subr.mxu0 0.0
    %3036 = vmatpush1.msra.mxu0 0.0
    %3037 = vmatprep.subr.mxu0 0.0
    %3038 = vmatpush1.msra.mxu0 0.0
    %3039 = vmatprep.subr.mxu0 0.0
    %3040 = vmatpush1.msra.mxu0 0.0
    %3041 = vmatprep.subr.mxu0 0.0
    %3042 = vmatpush1.msra.mxu0 0.0
    %3043 = vmatprep.subr.mxu0 0.0
    %3044 = vmatpush1.msra.mxu0 0.0
    %3045 = vmatprep.subr.mxu0 0.0
    %3046 = vmatpush1.msra.mxu0 0.0
    %3047 = vmatprep.subr.mxu0 0.0
    %3048 = vmatpush1.msra.mxu0 0.0
    %3049 = vmatprep.subr.mxu0 0.0
    %3050 = vmatpush1.msra.mxu0 0.0
    %3051 = vmatprep.subr.mxu0 0.0
    %3052 = vmatpush1.msra.mxu0 0.0
    %3053 = vmatprep.mubr.f32.mxu0 0.0
    %3054 = vmatmul.mubr.f32.gmra.mrb[0].mxu0 %v2916
    %v3055 = vpop.f32.mrb[0].mxu0
    %v3056 = vadd.f32 0.0, %v3055
    %v3057 = vpop.f32.mrb[0].mxu0
    %v3058 = vadd.f32 0.0, %v3057
    %3059 = vdwg.mxu0
    %v3064 = vcombine.low %v2985, %v2987
    %v3065 = vcombine.low %v3056, %v3058
    %v3067 = vunpack.c.l.s4 1983009808
    %v3068 = vunpack.c.0.s8 %v3067
    %v3069 = vlaneseq
    %v3070 = vshrl.u32 %v3069, 7
    %v3071 = vsub.s32 %v3068, %v3070
    %v3072 = vrot.slane %v3064, %v3071
    %v3074 = vunpack.c.l.s4 1983009808
    %v3075 = vunpack.c.0.s8 %v3074
    %v3076 = vlaneseq
    %v3077 = vshrl.u32 %v3076, 7
    %v3078 = vsub.s32 %v3075, %v3077
    %v3079 = vrot.slane %v3065, %v3078
    %v3080 = vcombine.low %v3072, %v3079
    %v3082 = vadd.f32 %v2917, %v3080
    %v3083 = vxor.u32 %v3082, 2147483648
    %v3084 = vmul.f32 %v3083, 1.442695
    %v3085 = vpow.pop %v3084
    %v3086 = vadd.f32 %v3085, 1.0
    %v3087 = vrcp.pop %v3086
    %v3088 = vmul.f32 1.0, %v3087
    %v3090 = vrot.slane %v3082, 2
    %v3092 = vxor.u32 %v3090, 2147483648
    %v3093 = vmul.f32 %v3092, 1.442695
    %v3094 = vpow.pop %v3093
    %v3095 = vadd.f32 %v3094, 1.0
    %v3096 = vrcp.pop %v3095
    %v3097 = vmul.f32 1.0, %v3096
    %v3098 = vrot.slane %v3082, 4
    %v3100 = vtanh.pop %v3098
    %v3101 = vrot.slane %v3082, 6
    %v3103 = vxor.u32 %v3101, 2147483648
    %v3104 = vmul.f32 %v3103, 1.442695
    %v3105 = vpow.pop %v3104
    %v3106 = vadd.f32 %v3105, 1.0
    %v3107 = vrcp.pop %v3106
    %v3108 = vmul.f32 1.0, %v3107
    %v3109 = vmul.f32 %v3097, %v2914
    %v3110 = vmul.f32 %v3088, %v3100
    %v3111 = vadd.f32 %v3109, %v3110
    %v3112 = vtanh.pop %v3111
    %v3113 = vmul.f32 %v3108, %v3112
    %v3114 = vld [vmem:[%s1071] sm:$0xff]
    %3115 = vmatprep.subr.mxu0 %v2136
    %3116 = vmatpush1.msra.mxu0 %v2135
    %3117 = vmatprep.subr.mxu0 %v2140
    %3118 = vmatpush1.msra.mxu0 %v2139
    %3119 = vmatprep.subr.mxu0 %v2144
    %3120 = vmatpush1.msra.mxu0 %v2143
    %3121 = vmatprep.subr.mxu0 %v2148
    %3122 = vmatpush1.msra.mxu0 %v2147
    %3123 = vmatprep.subr.mxu0 %v2152
    %3124 = vmatpush1.msra.mxu0 %v2151
    %3125 = vmatprep.subr.mxu0 %v2156
    %3126 = vmatpush1.msra.mxu0 %v2155
    %3127 = vmatprep.subr.mxu0 %v2160
    %3128 = vmatpush1.msra.mxu0 %v2159
    %3129 = vmatprep.subr.mxu0 %v2164
    %3130 = vmatpush1.msra.mxu0 %v2163
    %3131 = vmatprep.subr.mxu0 %v2168
    %3132 = vmatpush1.msra.mxu0 %v2167
    %3133 = vmatprep.subr.mxu0 %v2172
    %3134 = vmatpush1.msra.mxu0 %v2171
    %3135 = vmatprep.subr.mxu0 %v2176
    %3136 = vmatpush1.msra.mxu0 %v2175
    %3137 = vmatprep.subr.mxu0 %v2180
    %3138 = vmatpush1.msra.mxu0 %v2179
    %3139 = vmatprep.subr.mxu0 %v2184
    %3140 = vmatpush1.msra.mxu0 %v2183
    %3141 = vmatprep.subr.mxu0 %v2188
    %3142 = vmatpush1.msra.mxu0 %v2187
    %3143 = vmatprep.subr.mxu0 %v2192
    %3144 = vmatpush1.msra.mxu0 %v2191
    %3145 = vmatprep.subr.mxu0 %v2196
    %3146 = vmatpush1.msra.mxu0 %v2195
    %3147 = vmatprep.subr.mxu0 0.0
    %3148 = vmatpush1.msra.mxu0 0.0
    %3149 = vmatprep.subr.mxu0 0.0
    %3150 = vmatpush1.msra.mxu0 0.0
    %3151 = vmatprep.subr.mxu0 0.0
    %3152 = vmatpush1.msra.mxu0 0.0
    %3153 = vmatprep.subr.mxu0 0.0
    %3154 = vmatpush1.msra.mxu0 0.0
    %3155 = vmatprep.subr.mxu0 0.0
    %3156 = vmatpush1.msra.mxu0 0.0
    %3157 = vmatprep.subr.mxu0 0.0
    %3158 = vmatpush1.msra.mxu0 0.0
    %3159 = vmatprep.subr.mxu0 0.0
    %3160 = vmatpush1.msra.mxu0 0.0
    %3161 = vmatprep.subr.mxu0 0.0
    %3162 = vmatpush1.msra.mxu0 0.0
    %3163 = vmatprep.subr.mxu0 0.0
    %3164 = vmatpush1.msra.mxu0 0.0
    %3165 = vmatprep.subr.mxu0 0.0
    %3166 = vmatpush1.msra.mxu0 0.0
    %3167 = vmatprep.subr.mxu0 0.0
    %3168 = vmatpush1.msra.mxu0 0.0
    %3169 = vmatprep.subr.mxu0 0.0
    %3170 = vmatpush1.msra.mxu0 0.0
    %3171 = vmatprep.subr.mxu0 0.0
    %3172 = vmatpush1.msra.mxu0 0.0
    %3173 = vmatprep.subr.mxu0 0.0
    %3174 = vmatpush1.msra.mxu0 0.0
    %3175 = vmatprep.subr.mxu0 0.0
    %3176 = vmatpush1.msra.mxu0 0.0
    %3177 = vmatprep.subr.mxu0 0.0
    %3178 = vmatpush1.msra.mxu0 0.0
    %3179 = vmatprep.mubr.f32.mxu0 0.0
    %3180 = vmatmul.mubr.f32.gmra.mrb[0].mxu0 %v3113
    %v3181 = vpop.f32.mrb[0].mxu0
    %v3182 = vadd.f32 0.0, %v3181
    %v3183 = vpop.f32.mrb[0].mxu0
    %v3184 = vadd.f32 0.0, %v3183
    %3185 = vdwg.mxu0
    %3186 = vmatprep.subr.mxu0 %v2138
    %3187 = vmatpush1.msra.mxu0 %v2137
    %3188 = vmatprep.subr.mxu0 %v2142
    %3189 = vmatpush1.msra.mxu0 %v2141
    %3190 = vmatprep.subr.mxu0 %v2146
    %3191 = vmatpush1.msra.mxu0 %v2145
    %3192 = vmatprep.subr.mxu0 %v2150
    %3193 = vmatpush1.msra.mxu0 %v2149
    %3194 = vmatprep.subr.mxu0 %v2154
    %3195 = vmatpush1.msra.mxu0 %v2153
    %3196 = vmatprep.subr.mxu0 %v2158
    %3197 = vmatpush1.msra.mxu0 %v2157
    %3198 = vmatprep.subr.mxu0 %v2162
    %3199 = vmatpush1.msra.mxu0 %v2161
    %3200 = vmatprep.subr.mxu0 %v2166
    %3201 = vmatpush1.msra.mxu0 %v2165
    %3202 = vmatprep.subr.mxu0 %v2170
    %3203 = vmatpush1.msra.mxu0 %v2169
    %3204 = vmatprep.subr.mxu0 %v2174
    %3205 = vmatpush1.msra.mxu0 %v2173
    %3206 = vmatprep.subr.mxu0 %v2178
    %3207 = vmatpush1.msra.mxu0 %v2177
    %3208 = vmatprep.subr.mxu0 %v2182
    %3209 = vmatpush1.msra.mxu0 %v2181
    %3210 = vmatprep.subr.mxu0 %v2186
    %3211 = vmatpush1.msra.mxu0 %v2185
    %3212 = vmatprep.subr.mxu0 %v2190
    %3213 = vmatpush1.msra.mxu0 %v2189
    %3214 = vmatprep.subr.mxu0 %v2194
    %3215 = vmatpush1.msra.mxu0 %v2193
    %3216 = vmatprep.subr.mxu0 %v2198
    %3217 = vmatpush1.msra.mxu0 %v2197
    %3218 = vmatprep.subr.mxu0 0.0
    %3219 = vmatpush1.msra.mxu0 0.0
    %3220 = vmatprep.subr.mxu0 0.0
    %3221 = vmatpush1.msra.mxu0 0.0
    %3222 = vmatprep.subr.mxu0 0.0
    %3223 = vmatpush1.msra.mxu0 0.0
    %3224 = vmatprep.subr.mxu0 0.0
    %3225 = vmatpush1.msra.mxu0 0.0
    %3226 = vmatprep.subr.mxu0 0.0
    %3227 = vmatpush1.msra.mxu0 0.0
    %3228 = vmatprep.subr.mxu0 0.0
    %3229 = vmatpush1.msra.mxu0 0.0
    %3230 = vmatprep.subr.mxu0 0.0
    %3231 = vmatpush1.msra.mxu0 0.0
    %3232 = vmatprep.subr.mxu0 0.0
    %3233 = vmatpush1.msra.mxu0 0.0
    %3234 = vmatprep.subr.mxu0 0.0
    %3235 = vmatpush1.msra.mxu0 0.0
    %3236 = vmatprep.subr.mxu0 0.0
    %3237 = vmatpush1.msra.mxu0 0.0
    %3238 = vmatprep.subr.mxu0 0.0
    %3239 = vmatpush1.msra.mxu0 0.0
    %3240 = vmatprep.subr.mxu0 0.0
    %3241 = vmatpush1.msra.mxu0 0.0
    %3242 = vmatprep.subr.mxu0 0.0
    %3243 = vmatpush1.msra.mxu0 0.0
    %3244 = vmatprep.subr.mxu0 0.0
    %3245 = vmatpush1.msra.mxu0 0.0
    %3246 = vmatprep.subr.mxu0 0.0
    %3247 = vmatpush1.msra.mxu0 0.0
    %3248 = vmatprep.subr.mxu0 0.0
    %3249 = vmatpush1.msra.mxu0 0.0
    %3250 = vmatprep.mubr.f32.mxu0 0.0
    %3251 = vmatmul.mubr.f32.gmra.mrb[0].mxu0 %v3113
    %v3252 = vpop.f32.mrb[0].mxu0
    %v3253 = vadd.f32 0.0, %v3252
    %v3254 = vpop.f32.mrb[0].mxu0
    %v3255 = vadd.f32 0.0, %v3254
    %3256 = vdwg.mxu0
    %v3261 = vcombine.low %v3182, %v3184
    %v3262 = vcombine.low %v3253, %v3255
    %v3264 = vunpack.c.l.s4 1983009808
    %v3265 = vunpack.c.0.s8 %v3264
    %v3266 = vlaneseq
    %v3267 = vshrl.u32 %v3266, 7
    %v3268 = vsub.s32 %v3265, %v3267
    %v3269 = vrot.slane %v3261, %v3268
    %v3271 = vunpack.c.l.s4 1983009808
    %v3272 = vunpack.c.0.s8 %v3271
    %v3273 = vlaneseq
    %v3274 = vshrl.u32 %v3273, 7
    %v3275 = vsub.s32 %v3272, %v3274
    %v3276 = vrot.slane %v3262, %v3275
    %v3277 = vcombine.low %v3269, %v3276
    %v3279 = vadd.f32 %v3114, %v3277
    %v3280 = vxor.u32 %v3279, 2147483648
    %v3281 = vmul.f32 %v3280, 1.442695
    %v3282 = vpow.pop %v3281
    %v3283 = vadd.f32 %v3282, 1.0
    %v3284 = vrcp.pop %v3283
    %v3285 = vmul.f32 1.0, %v3284
    %v3287 = vrot.slane %v3279, 2
    %v3289 = vxor.u32 %v3287, 2147483648
    %v3290 = vmul.f32 %v3289, 1.442695
    %v3291 = vpow.pop %v3290
    %v3292 = vadd.f32 %v3291, 1.0
    %v3293 = vrcp.pop %v3292
    %v3294 = vmul.f32 1.0, %v3293
    %v3295 = vrot.slane %v3279, 4
    %v3297 = vtanh.pop %v3295
    %v3298 = vrot.slane %v3279, 6
    %v3300 = vxor.u32 %v3298, 2147483648
    %v3301 = vmul.f32 %v3300, 1.442695
    %v3302 = vpow.pop %v3301
    %v3303 = vadd.f32 %v3302, 1.0
    %v3304 = vrcp.pop %v3303
    %v3305 = vmul.f32 1.0, %v3304
    %v3306 = vmul.f32 %v3294, %v3111
    %v3307 = vmul.f32 %v3285, %v3297
    %v3308 = vadd.f32 %v3306, %v3307
    %v3309 = vtanh.pop %v3308
    %v3310 = vmul.f32 %v3305, %v3309
    %v3311 = vld [vmem:[%s1271] sm:$0xff]
    %3312 = vmatprep.subr.mxu0 %v2136
    %3313 = vmatpush1.msra.mxu0 %v2135
    %3314 = vmatprep.subr.mxu0 %v2140
    %3315 = vmatpush1.msra.mxu0 %v2139
    %3316 = vmatprep.subr.mxu0 %v2144
    %3317 = vmatpush1.msra.mxu0 %v2143
    %3318 = vmatprep.subr.mxu0 %v2148
    %3319 = vmatpush1.msra.mxu0 %v2147
    %3320 = vmatprep.subr.mxu0 %v2152
    %3321 = vmatpush1.msra.mxu0 %v2151
    %3322 = vmatprep.subr.mxu0 %v2156
    %3323 = vmatpush1.msra.mxu0 %v2155
    %3324 = vmatprep.subr.mxu0 %v2160
    %3325 = vmatpush1.msra.mxu0 %v2159
    %3326 = vmatprep.subr.mxu0 %v2164
    %3327 = vmatpush1.msra.mxu0 %v2163
    %3328 = vmatprep.subr.mxu0 %v2168
    %3329 = vmatpush1.msra.mxu0 %v2167
    %3330 = vmatprep.subr.mxu0 %v2172
    %3331 = vmatpush1.msra.mxu0 %v2171
    %3332 = vmatprep.subr.mxu0 %v2176
    %3333 = vmatpush1.msra.mxu0 %v2175
    %3334 = vmatprep.subr.mxu0 %v2180
    %3335 = vmatpush1.msra.mxu0 %v2179
    %3336 = vmatprep.subr.mxu0 %v2184
    %3337 = vmatpush1.msra.mxu0 %v2183
    %3338 = vmatprep.subr.mxu0 %v2188
    %3339 = vmatpush1.msra.mxu0 %v2187
    %3340 = vmatprep.subr.mxu0 %v2192
    %3341 = vmatpush1.msra.mxu0 %v2191
    %3342 = vmatprep.subr.mxu0 %v2196
    %3343 = vmatpush1.msra.mxu0 %v2195
    %3344 = vmatprep.subr.mxu0 0.0
    %3345 = vmatpush1.msra.mxu0 0.0
    %3346 = vmatprep.subr.mxu0 0.0
    %3347 = vmatpush1.msra.mxu0 0.0
    %3348 = vmatprep.subr.mxu0 0.0
    %3349 = vmatpush1.msra.mxu0 0.0
    %3350 = vmatprep.subr.mxu0 0.0
    %3351 = vmatpush1.msra.mxu0 0.0
    %3352 = vmatprep.subr.mxu0 0.0
    %3353 = vmatpush1.msra.mxu0 0.0
    %3354 = vmatprep.subr.mxu0 0.0
    %3355 = vmatpush1.msra.mxu0 0.0
    %3356 = vmatprep.subr.mxu0 0.0
    %3357 = vmatpush1.msra.mxu0 0.0
    %3358 = vmatprep.subr.mxu0 0.0
    %3359 = vmatpush1.msra.mxu0 0.0
    %3360 = vmatprep.subr.mxu0 0.0
    %3361 = vmatpush1.msra.mxu0 0.0
    %3362 = vmatprep.subr.mxu0 0.0
    %3363 = vmatpush1.msra.mxu0 0.0
    %3364 = vmatprep.subr.mxu0 0.0
    %3365 = vmatpush1.msra.mxu0 0.0
    %3366 = vmatprep.subr.mxu0 0.0
    %3367 = vmatpush1.msra.mxu0 0.0
    %3368 = vmatprep.subr.mxu0 0.0
    %3369 = vmatpush1.msra.mxu0 0.0
    %3370 = vmatprep.subr.mxu0 0.0
    %3371 = vmatpush1.msra.mxu0 0.0
    %3372 = vmatprep.subr.mxu0 0.0
    %3373 = vmatpush1.msra.mxu0 0.0
    %3374 = vmatprep.subr.mxu0 0.0
    %3375 = vmatpush1.msra.mxu0 0.0
    %3376 = vmatprep.mubr.f32.mxu0 0.0
    %3377 = vmatmul.mubr.f32.gmra.mrb[0].mxu0 %v3310
    %v3378 = vpop.f32.mrb[0].mxu0
    %v3379 = vadd.f32 0.0, %v3378
    %v3380 = vpop.f32.mrb[0].mxu0
    %v3381 = vadd.f32 0.0, %v3380
    %3382 = vdwg.mxu0
    %3383 = vmatprep.subr.mxu0 %v2138
    %3384 = vmatpush1.msra.mxu0 %v2137
    %3385 = vmatprep.subr.mxu0 %v2142
    %3386 = vmatpush1.msra.mxu0 %v2141
    %3387 = vmatprep.subr.mxu0 %v2146
    %3388 = vmatpush1.msra.mxu0 %v2145
    %3389 = vmatprep.subr.mxu0 %v2150
    %3390 = vmatpush1.msra.mxu0 %v2149
    %3391 = vmatprep.subr.mxu0 %v2154
    %3392 = vmatpush1.msra.mxu0 %v2153
    %3393 = vmatprep.subr.mxu0 %v2158
    %3394 = vmatpush1.msra.mxu0 %v2157
    %3395 = vmatprep.subr.mxu0 %v2162
    %3396 = vmatpush1.msra.mxu0 %v2161
    %3397 = vmatprep.subr.mxu0 %v2166
    %3398 = vmatpush1.msra.mxu0 %v2165
    %3399 = vmatprep.subr.mxu0 %v2170
    %3400 = vmatpush1.msra.mxu0 %v2169
    %3401 = vmatprep.subr.mxu0 %v2174
    %3402 = vmatpush1.msra.mxu0 %v2173
    %3403 = vmatprep.subr.mxu0 %v2178
    %3404 = vmatpush1.msra.mxu0 %v2177
    %3405 = vmatprep.subr.mxu0 %v2182
    %3406 = vmatpush1.msra.mxu0 %v2181
    %3407 = vmatprep.subr.mxu0 %v2186
    %3408 = vmatpush1.msra.mxu0 %v2185
    %3409 = vmatprep.subr.mxu0 %v2190
    %3410 = vmatpush1.msra.mxu0 %v2189
    %3411 = vmatprep.subr.mxu0 %v2194
    %3412 = vmatpush1.msra.mxu0 %v2193
    %3413 = vmatprep.subr.mxu0 %v2198
    %3414 = vmatpush1.msra.mxu0 %v2197
    %3415 = vmatprep.subr.mxu0 0.0
    %3416 = vmatpush1.msra.mxu0 0.0
    %3417 = vmatprep.subr.mxu0 0.0
    %3418 = vmatpush1.msra.mxu0 0.0
    %3419 = vmatprep.subr.mxu0 0.0
    %3420 = vmatpush1.msra.mxu0 0.0
    %3421 = vmatprep.subr.mxu0 0.0
    %3422 = vmatpush1.msra.mxu0 0.0
    %3423 = vmatprep.subr.mxu0 0.0
    %3424 = vmatpush1.msra.mxu0 0.0
    %3425 = vmatprep.subr.mxu0 0.0
    %3426 = vmatpush1.msra.mxu0 0.0
    %3427 = vmatprep.subr.mxu0 0.0
    %3428 = vmatpush1.msra.mxu0 0.0
    %3429 = vmatprep.subr.mxu0 0.0
    %3430 = vmatpush1.msra.mxu0 0.0
    %3431 = vmatprep.subr.mxu0 0.0
    %3432 = vmatpush1.msra.mxu0 0.0
    %3433 = vmatprep.subr.mxu0 0.0
    %3434 = vmatpush1.msra.mxu0 0.0
    %3435 = vmatprep.subr.mxu0 0.0
    %3436 = vmatpush1.msra.mxu0 0.0
    %3437 = vmatprep.subr.mxu0 0.0
    %3438 = vmatpush1.msra.mxu0 0.0
    %3439 = vmatprep.subr.mxu0 0.0
    %3440 = vmatpush1.msra.mxu0 0.0
    %3441 = vmatprep.subr.mxu0 0.0
    %3442 = vmatpush1.msra.mxu0 0.0
    %3443 = vmatprep.subr.mxu0 0.0
    %3444 = vmatpush1.msra.mxu0 0.0
    %3445 = vmatprep.subr.mxu0 0.0
    %3446 = vmatpush1.msra.mxu0 0.0
    %3447 = vmatprep.mubr.f32.mxu0 0.0
    %3448 = vmatmul.mubr.f32.gmra.mrb[0].mxu0 %v3310
    %v3449 = vpop.f32.mrb[0].mxu0
    %v3450 = vadd.f32 0.0, %v3449
    %v3451 = vpop.f32.mrb[0].mxu0
    %v3452 = vadd.f32 0.0, %v3451
    %3453 = vdwg.mxu0
    %v3458 = vcombine.low %v3379, %v3381
    %v3459 = vcombine.low %v3450, %v3452
    %v3461 = vunpack.c.l.s4 1983009808
    %v3462 = vunpack.c.0.s8 %v3461
    %v3463 = vlaneseq
    %v3464 = vshrl.u32 %v3463, 7
    %v3465 = vsub.s32 %v3462, %v3464
    %v3466 = vrot.slane %v3458, %v3465
    %v3468 = vunpack.c.l.s4 1983009808
    %v3469 = vunpack.c.0.s8 %v3468
    %v3470 = vlaneseq
    %v3471 = vshrl.u32 %v3470, 7
    %v3472 = vsub.s32 %v3469, %v3471
    %v3473 = vrot.slane %v3459, %v3472
    %v3474 = vcombine.low %v3466, %v3473
    %v3476 = vadd.f32 %v3311, %v3474
    %v3477 = vxor.u32 %v3476, 2147483648
    %v3478 = vmul.f32 %v3477, 1.442695
    %v3479 = vpow.pop %v3478
    %v3480 = vadd.f32 %v3479, 1.0
    %v3481 = vrcp.pop %v3480
    %v3482 = vmul.f32 1.0, %v3481
    %v3484 = vrot.slane %v3476, 2
    %v3486 = vxor.u32 %v3484, 2147483648
    %v3487 = vmul.f32 %v3486, 1.442695
    %v3488 = vpow.pop %v3487
    %v3489 = vadd.f32 %v3488, 1.0
    %v3490 = vrcp.pop %v3489
    %v3491 = vmul.f32 1.0, %v3490
    %v3492 = vrot.slane %v3476, 4
    %v3494 = vtanh.pop %v3492
    %v3495 = vrot.slane %v3476, 6
    %v3497 = vxor.u32 %v3495, 2147483648
    %v3498 = vmul.f32 %v3497, 1.442695
    %v3499 = vpow.pop %v3498
    %v3500 = vadd.f32 %v3499, 1.0
    %v3501 = vrcp.pop %v3500
    %v3502 = vmul.f32 1.0, %v3501
    %v3503 = vmul.f32 %v3491, %v3308
    %v3504 = vmul.f32 %v3482, %v3494
    %v3505 = vadd.f32 %v3503, %v3504
    %v3506 = vtanh.pop %v3505
    %v3507 = vmul.f32 %v3502, %v3506
    %v3508 = vld [vmem:[%s1471] sm:$0xff]
    %3509 = vmatprep.subr.mxu0 %v2136
    %3510 = vmatpush1.msra.mxu0 %v2135
    %3511 = vmatprep.subr.mxu0 %v2140
    %3512 = vmatpush1.msra.mxu0 %v2139
    %3513 = vmatprep.subr.mxu0 %v2144
    %3514 = vmatpush1.msra.mxu0 %v2143
    %3515 = vmatprep.subr.mxu0 %v2148
    %3516 = vmatpush1.msra.mxu0 %v2147
    %3517 = vmatprep.subr.mxu0 %v2152
    %3518 = vmatpush1.msra.mxu0 %v2151
    %3519 = vmatprep.subr.mxu0 %v2156
    %3520 = vmatpush1.msra.mxu0 %v2155
    %3521 = vmatprep.subr.mxu0 %v2160
    %3522 = vmatpush1.msra.mxu0 %v2159
    %3523 = vmatprep.subr.mxu0 %v2164
    %3524 = vmatpush1.msra.mxu0 %v2163
    %3525 = vmatprep.subr.mxu0 %v2168
    %3526 = vmatpush1.msra.mxu0 %v2167
    %3527 = vmatprep.subr.mxu0 %v2172
    %3528 = vmatpush1.msra.mxu0 %v2171
    %3529 = vmatprep.subr.mxu0 %v2176
    %3530 = vmatpush1.msra.mxu0 %v2175
    %3531 = vmatprep.subr.mxu0 %v2180
    %3532 = vmatpush1.msra.mxu0 %v2179
    %3533 = vmatprep.subr.mxu0 %v2184
    %3534 = vmatpush1.msra.mxu0 %v2183
    %3535 = vmatprep.subr.mxu0 %v2188
    %3536 = vmatpush1.msra.mxu0 %v2187
    %3537 = vmatprep.subr.mxu0 %v2192
    %3538 = vmatpush1.msra.mxu0 %v2191
    %3539 = vmatprep.subr.mxu0 %v2196
    %3540 = vmatpush1.msra.mxu0 %v2195
    %3541 = vmatprep.subr.mxu0 0.0
    %3542 = vmatpush1.msra.mxu0 0.0
    %3543 = vmatprep.subr.mxu0 0.0
    %3544 = vmatpush1.msra.mxu0 0.0
    %3545 = vmatprep.subr.mxu0 0.0
    %3546 = vmatpush1.msra.mxu0 0.0
    %3547 = vmatprep.subr.mxu0 0.0
    %3548 = vmatpush1.msra.mxu0 0.0
    %3549 = vmatprep.subr.mxu0 0.0
    %3550 = vmatpush1.msra.mxu0 0.0
    %3551 = vmatprep.subr.mxu0 0.0
    %3552 = vmatpush1.msra.mxu0 0.0
    %3553 = vmatprep.subr.mxu0 0.0
    %3554 = vmatpush1.msra.mxu0 0.0
    %3555 = vmatprep.subr.mxu0 0.0
    %3556 = vmatpush1.msra.mxu0 0.0
    %3557 = vmatprep.subr.mxu0 0.0
    %3558 = vmatpush1.msra.mxu0 0.0
    %3559 = vmatprep.subr.mxu0 0.0
    %3560 = vmatpush1.msra.mxu0 0.0
    %3561 = vmatprep.subr.mxu0 0.0
    %3562 = vmatpush1.msra.mxu0 0.0
    %3563 = vmatprep.subr.mxu0 0.0
    %3564 = vmatpush1.msra.mxu0 0.0
    %3565 = vmatprep.subr.mxu0 0.0
    %3566 = vmatpush1.msra.mxu0 0.0
    %3567 = vmatprep.subr.mxu0 0.0
    %3568 = vmatpush1.msra.mxu0 0.0
    %3569 = vmatprep.subr.mxu0 0.0
    %3570 = vmatpush1.msra.mxu0 0.0
    %3571 = vmatprep.subr.mxu0 0.0
    %3572 = vmatpush1.msra.mxu0 0.0
    %3573 = vmatprep.mubr.f32.mxu0 0.0
    %3574 = vmatmul.mubr.f32.gmra.mrb[0].mxu0 %v3507
    %v3575 = vpop.f32.mrb[0].mxu0
    %v3576 = vadd.f32 0.0, %v3575
    %v3577 = vpop.f32.mrb[0].mxu0
    %v3578 = vadd.f32 0.0, %v3577
    %3579 = vdwg.mxu0
    %3580 = vmatprep.subr.mxu0 %v2138
    %3581 = vmatpush1.msra.mxu0 %v2137
    %3582 = vmatprep.subr.mxu0 %v2142
    %3583 = vmatpush1.msra.mxu0 %v2141
    %3584 = vmatprep.subr.mxu0 %v2146
    %3585 = vmatpush1.msra.mxu0 %v2145
    %3586 = vmatprep.subr.mxu0 %v2150
    %3587 = vmatpush1.msra.mxu0 %v2149
    %3588 = vmatprep.subr.mxu0 %v2154
    %3589 = vmatpush1.msra.mxu0 %v2153
    %3590 = vmatprep.subr.mxu0 %v2158
    %3591 = vmatpush1.msra.mxu0 %v2157
    %3592 = vmatprep.subr.mxu0 %v2162
    %3593 = vmatpush1.msra.mxu0 %v2161
    %3594 = vmatprep.subr.mxu0 %v2166
    %3595 = vmatpush1.msra.mxu0 %v2165
    %3596 = vmatprep.subr.mxu0 %v2170
    %3597 = vmatpush1.msra.mxu0 %v2169
    %3598 = vmatprep.subr.mxu0 %v2174
    %3599 = vmatpush1.msra.mxu0 %v2173
    %3600 = vmatprep.subr.mxu0 %v2178
    %3601 = vmatpush1.msra.mxu0 %v2177
    %3602 = vmatprep.subr.mxu0 %v2182
    %3603 = vmatpush1.msra.mxu0 %v2181
    %3604 = vmatprep.subr.mxu0 %v2186
    %3605 = vmatpush1.msra.mxu0 %v2185
    %3606 = vmatprep.subr.mxu0 %v2190
    %3607 = vmatpush1.msra.mxu0 %v2189
    %3608 = vmatprep.subr.mxu0 %v2194
    %3609 = vmatpush1.msra.mxu0 %v2193
    %3610 = vmatprep.subr.mxu0 %v2198
    %3611 = vmatpush1.msra.mxu0 %v2197
    %3612 = vmatprep.subr.mxu0 0.0
    %3613 = vmatpush1.msra.mxu0 0.0
    %3614 = vmatprep.subr.mxu0 0.0
    %3615 = vmatpush1.msra.mxu0 0.0
    %3616 = vmatprep.subr.mxu0 0.0
    %3617 = vmatpush1.msra.mxu0 0.0
    %3618 = vmatprep.subr.mxu0 0.0
    %3619 = vmatpush1.msra.mxu0 0.0
    %3620 = vmatprep.subr.mxu0 0.0
    %3621 = vmatpush1.msra.mxu0 0.0
    %3622 = vmatprep.subr.mxu0 0.0
    %3623 = vmatpush1.msra.mxu0 0.0
    %3624 = vmatprep.subr.mxu0 0.0
    %3625 = vmatpush1.msra.mxu0 0.0
    %3626 = vmatprep.subr.mxu0 0.0
    %3627 = vmatpush1.msra.mxu0 0.0
    %3628 = vmatprep.subr.mxu0 0.0
    %3629 = vmatpush1.msra.mxu0 0.0
    %3630 = vmatprep.subr.mxu0 0.0
    %3631 = vmatpush1.msra.mxu0 0.0
    %3632 = vmatprep.subr.mxu0 0.0
    %3633 = vmatpush1.msra.mxu0 0.0
    %3634 = vmatprep.subr.mxu0 0.0
    %3635 = vmatpush1.msra.mxu0 0.0
    %3636 = vmatprep.subr.mxu0 0.0
    %3637 = vmatpush1.msra.mxu0 0.0
    %3638 = vmatprep.subr.mxu0 0.0
    %3639 = vmatpush1.msra.mxu0 0.0
    %3640 = vmatprep.subr.mxu0 0.0
    %3641 = vmatpush1.msra.mxu0 0.0
    %3642 = vmatprep.subr.mxu0 0.0
    %3643 = vmatpush1.msra.mxu0 0.0
    %3644 = vmatprep.mubr.f32.mxu0 0.0
    %3645 = vmatmul.mubr.f32.gmra.mrb[0].mxu0 %v3507
    %v3646 = vpop.f32.mrb[0].mxu0
    %v3647 = vadd.f32 0.0, %v3646
    %v3648 = vpop.f32.mrb[0].mxu0
    %v3649 = vadd.f32 0.0, %v3648
    %3650 = vdwg.mxu0
    %v3655 = vcombine.low %v3576, %v3578
    %v3656 = vcombine.low %v3647, %v3649
    %v3658 = vunpack.c.l.s4 1983009808
    %v3659 = vunpack.c.0.s8 %v3658
    %v3660 = vlaneseq
    %v3661 = vshrl.u32 %v3660, 7
    %v3662 = vsub.s32 %v3659, %v3661
    %v3663 = vrot.slane %v3655, %v3662
    %v3665 = vunpack.c.l.s4 1983009808
    %v3666 = vunpack.c.0.s8 %v3665
    %v3667 = vlaneseq
    %v3668 = vshrl.u32 %v3667, 7
    %v3669 = vsub.s32 %v3666, %v3668
    %v3670 = vrot.slane %v3656, %v3669
    %v3671 = vcombine.low %v3663, %v3670
    %v3673 = vadd.f32 %v3508, %v3671
    %v3674 = vxor.u32 %v3673, 2147483648
    %v3675 = vmul.f32 %v3674, 1.442695
    %v3676 = vpow.pop %v3675
    %v3677 = vadd.f32 %v3676, 1.0
    %v3678 = vrcp.pop %v3677
    %v3679 = vmul.f32 1.0, %v3678
    %v3681 = vrot.slane %v3673, 2
    %v3683 = vxor.u32 %v3681, 2147483648
    %v3684 = vmul.f32 %v3683, 1.442695
    %v3685 = vpow.pop %v3684
    %v3686 = vadd.f32 %v3685, 1.0
    %v3687 = vrcp.pop %v3686
    %v3688 = vmul.f32 1.0, %v3687
    %v3689 = vrot.slane %v3673, 4
    %v3691 = vtanh.pop %v3689
    %v3692 = vrot.slane %v3673, 6
    %v3694 = vxor.u32 %v3692, 2147483648
    %v3695 = vmul.f32 %v3694, 1.442695
    %v3696 = vpow.pop %v3695
    %v3697 = vadd.f32 %v3696, 1.0
    %v3698 = vrcp.pop %v3697
    %v3699 = vmul.f32 1.0, %v3698
    %v3700 = vmul.f32 %v3688, %v3505
    %v3701 = vmul.f32 %v3679, %v3691
    %v3702 = vadd.f32 %v3700, %v3701
    %v3703 = vtanh.pop %v3702
    %v3704 = vmul.f32 %v3699, %v3703
    %v3705 = vld [vmem:[%s1671] sm:$0xff]
    %3706 = vmatprep.subr.mxu0 %v2136
    %3707 = vmatpush1.msra.mxu0 %v2135
    %3708 = vmatprep.subr.mxu0 %v2140
    %3709 = vmatpush1.msra.mxu0 %v2139
    %3710 = vmatprep.subr.mxu0 %v2144
    %3711 = vmatpush1.msra.mxu0 %v2143
    %3712 = vmatprep.subr.mxu0 %v2148
    %3713 = vmatpush1.msra.mxu0 %v2147
    %3714 = vmatprep.subr.mxu0 %v2152
    %3715 = vmatpush1.msra.mxu0 %v2151
    %3716 = vmatprep.subr.mxu0 %v2156
    %3717 = vmatpush1.msra.mxu0 %v2155
    %3718 = vmatprep.subr.mxu0 %v2160
    %3719 = vmatpush1.msra.mxu0 %v2159
    %3720 = vmatprep.subr.mxu0 %v2164
    %3721 = vmatpush1.msra.mxu0 %v2163
    %3722 = vmatprep.subr.mxu0 %v2168
    %3723 = vmatpush1.msra.mxu0 %v2167
    %3724 = vmatprep.subr.mxu0 %v2172
    %3725 = vmatpush1.msra.mxu0 %v2171
    %3726 = vmatprep.subr.mxu0 %v2176
    %3727 = vmatpush1.msra.mxu0 %v2175
    %3728 = vmatprep.subr.mxu0 %v2180
    %3729 = vmatpush1.msra.mxu0 %v2179
    %3730 = vmatprep.subr.mxu0 %v2184
    %3731 = vmatpush1.msra.mxu0 %v2183
    %3732 = vmatprep.subr.mxu0 %v2188
    %3733 = vmatpush1.msra.mxu0 %v2187
    %3734 = vmatprep.subr.mxu0 %v2192
    %3735 = vmatpush1.msra.mxu0 %v2191
    %3736 = vmatprep.subr.mxu0 %v2196
    %3737 = vmatpush1.msra.mxu0 %v2195
    %3738 = vmatprep.subr.mxu0 0.0
    %3739 = vmatpush1.msra.mxu0 0.0
    %3740 = vmatprep.subr.mxu0 0.0
    %3741 = vmatpush1.msra.mxu0 0.0
    %3742 = vmatprep.subr.mxu0 0.0
    %3743 = vmatpush1.msra.mxu0 0.0
    %3744 = vmatprep.subr.mxu0 0.0
    %3745 = vmatpush1.msra.mxu0 0.0
    %3746 = vmatprep.subr.mxu0 0.0
    %3747 = vmatpush1.msra.mxu0 0.0
    %3748 = vmatprep.subr.mxu0 0.0
    %3749 = vmatpush1.msra.mxu0 0.0
    %3750 = vmatprep.subr.mxu0 0.0
    %3751 = vmatpush1.msra.mxu0 0.0
    %3752 = vmatprep.subr.mxu0 0.0
    %3753 = vmatpush1.msra.mxu0 0.0
    %3754 = vmatprep.subr.mxu0 0.0
    %3755 = vmatpush1.msra.mxu0 0.0
    %3756 = vmatprep.subr.mxu0 0.0
    %3757 = vmatpush1.msra.mxu0 0.0
    %3758 = vmatprep.subr.mxu0 0.0
    %3759 = vmatpush1.msra.mxu0 0.0
    %3760 = vmatprep.subr.mxu0 0.0
    %3761 = vmatpush1.msra.mxu0 0.0
    %3762 = vmatprep.subr.mxu0 0.0
    %3763 = vmatpush1.msra.mxu0 0.0
    %3764 = vmatprep.subr.mxu0 0.0
    %3765 = vmatpush1.msra.mxu0 0.0
    %3766 = vmatprep.subr.mxu0 0.0
    %3767 = vmatpush1.msra.mxu0 0.0
    %3768 = vmatprep.subr.mxu0 0.0
    %3769 = vmatpush1.msra.mxu0 0.0
    %3770 = vmatprep.mubr.f32.mxu0 0.0
    %3771 = vmatmul.mubr.f32.gmra.mrb[0].mxu0 %v3704
    %v3772 = vpop.f32.mrb[0].mxu0
    %v3773 = vadd.f32 0.0, %v3772
    %v3774 = vpop.f32.mrb[0].mxu0
    %v3775 = vadd.f32 0.0, %v3774
    %3776 = vdwg.mxu0
    %3777 = vmatprep.subr.mxu0 %v2138
    %3778 = vmatpush1.msra.mxu0 %v2137
    %3779 = vmatprep.subr.mxu0 %v2142
    %3780 = vmatpush1.msra.mxu0 %v2141
    %3781 = vmatprep.subr.mxu0 %v2146
    %3782 = vmatpush1.msra.mxu0 %v2145
    %3783 = vmatprep.subr.mxu0 %v2150
    %3784 = vmatpush1.msra.mxu0 %v2149
    %3785 = vmatprep.subr.mxu0 %v2154
    %3786 = vmatpush1.msra.mxu0 %v2153
    %3787 = vmatprep.subr.mxu0 %v2158
    %3788 = vmatpush1.msra.mxu0 %v2157
    %3789 = vmatprep.subr.mxu0 %v2162
    %3790 = vmatpush1.msra.mxu0 %v2161
    %3791 = vmatprep.subr.mxu0 %v2166
    %3792 = vmatpush1.msra.mxu0 %v2165
    %3793 = vmatprep.subr.mxu0 %v2170
    %3794 = vmatpush1.msra.mxu0 %v2169
    %3795 = vmatprep.subr.mxu0 %v2174
    %3796 = vmatpush1.msra.mxu0 %v2173
    %3797 = vmatprep.subr.mxu0 %v2178
    %3798 = vmatpush1.msra.mxu0 %v2177
    %3799 = vmatprep.subr.mxu0 %v2182
    %3800 = vmatpush1.msra.mxu0 %v2181
    %3801 = vmatprep.subr.mxu0 %v2186
    %3802 = vmatpush1.msra.mxu0 %v2185
    %3803 = vmatprep.subr.mxu0 %v2190
    %3804 = vmatpush1.msra.mxu0 %v2189
    %3805 = vmatprep.subr.mxu0 %v2194
    %3806 = vmatpush1.msra.mxu0 %v2193
    %3807 = vmatprep.subr.mxu0 %v2198
    %3808 = vmatpush1.msra.mxu0 %v2197
    %3809 = vmatprep.subr.mxu0 0.0
    %3810 = vmatpush1.msra.mxu0 0.0
    %3811 = vmatprep.subr.mxu0 0.0
    %3812 = vmatpush1.msra.mxu0 0.0
    %3813 = vmatprep.subr.mxu0 0.0
    %3814 = vmatpush1.msra.mxu0 0.0
    %3815 = vmatprep.subr.mxu0 0.0
    %3816 = vmatpush1.msra.mxu0 0.0
    %3817 = vmatprep.subr.mxu0 0.0
    %3818 = vmatpush1.msra.mxu0 0.0
    %3819 = vmatprep.subr.mxu0 0.0
    %3820 = vmatpush1.msra.mxu0 0.0
    %3821 = vmatprep.subr.mxu0 0.0
    %3822 = vmatpush1.msra.mxu0 0.0
    %3823 = vmatprep.subr.mxu0 0.0
    %3824 = vmatpush1.msra.mxu0 0.0
    %3825 = vmatprep.subr.mxu0 0.0
    %3826 = vmatpush1.msra.mxu0 0.0
    %3827 = vmatprep.subr.mxu0 0.0
    %3828 = vmatpush1.msra.mxu0 0.0
    %3829 = vmatprep.subr.mxu0 0.0
    %3830 = vmatpush1.msra.mxu0 0.0
    %3831 = vmatprep.subr.mxu0 0.0
    %3832 = vmatpush1.msra.mxu0 0.0
    %3833 = vmatprep.subr.mxu0 0.0
    %3834 = vmatpush1.msra.mxu0 0.0
    %3835 = vmatprep.subr.mxu0 0.0
    %3836 = vmatpush1.msra.mxu0 0.0
    %3837 = vmatprep.subr.mxu0 0.0
    %3838 = vmatpush1.msra.mxu0 0.0
    %3839 = vmatprep.subr.mxu0 0.0
    %3840 = vmatpush1.msra.mxu0 0.0
    %3841 = vmatprep.mubr.f32.mxu0 0.0
    %3842 = vmatmul.mubr.f32.gmra.mrb[0].mxu0 %v3704
    %v3843 = vpop.f32.mrb[0].mxu0
    %v3844 = vadd.f32 0.0, %v3843
    %v3845 = vpop.f32.mrb[0].mxu0
    %v3846 = vadd.f32 0.0, %v3845
    %3847 = vdwg.mxu0
    %v3852 = vcombine.low %v3773, %v3775
    %v3853 = vcombine.low %v3844, %v3846
    %v3855 = vunpack.c.l.s4 1983009808
    %v3856 = vunpack.c.0.s8 %v3855
    %v3857 = vlaneseq
    %v3858 = vshrl.u32 %v3857, 7
    %v3859 = vsub.s32 %v3856, %v3858
    %v3860 = vrot.slane %v3852, %v3859
    %v3862 = vunpack.c.l.s4 1983009808
    %v3863 = vunpack.c.0.s8 %v3862
    %v3864 = vlaneseq
    %v3865 = vshrl.u32 %v3864, 7
    %v3866 = vsub.s32 %v3863, %v3865
    %v3867 = vrot.slane %v3853, %v3866
    %v3868 = vcombine.low %v3860, %v3867
    %v3870 = vadd.f32 %v3705, %v3868
    %v3871 = vxor.u32 %v3870, 2147483648
    %v3872 = vmul.f32 %v3871, 1.442695
    %v3873 = vpow.pop %v3872
    %v3874 = vadd.f32 %v3873, 1.0
    %v3875 = vrcp.pop %v3874
    %v3876 = vmul.f32 1.0, %v3875
    %v3878 = vrot.slane %v3870, 2
    %v3880 = vxor.u32 %v3878, 2147483648
    %v3881 = vmul.f32 %v3880, 1.442695
    %v3882 = vpow.pop %v3881
    %v3883 = vadd.f32 %v3882, 1.0
    %v3884 = vrcp.pop %v3883
    %v3885 = vmul.f32 1.0, %v3884
    %v3886 = vrot.slane %v3870, 4
    %v3888 = vtanh.pop %v3886
    %v3889 = vrot.slane %v3870, 6
    %v3891 = vxor.u32 %v3889, 2147483648
    %v3892 = vmul.f32 %v3891, 1.442695
    %v3893 = vpow.pop %v3892
    %v3894 = vadd.f32 %v3893, 1.0
    %v3895 = vrcp.pop %v3894
    %v3896 = vmul.f32 1.0, %v3895
    %v3897 = vmul.f32 %v3885, %v3702
    %v3898 = vmul.f32 %v3876, %v3888
    %v3899 = vadd.f32 %v3897, %v3898
    %v3900 = vtanh.pop %v3899
    %v3901 = vmul.f32 %v3896, %v3900
    %v3902 = vld [vmem:[%s1871] sm:$0xff]
    %3903 = vmatprep.subr.mxu0 %v2136
    %3904 = vmatpush1.msra.mxu0 %v2135
    %3905 = vmatprep.subr.mxu0 %v2140
    %3906 = vmatpush1.msra.mxu0 %v2139
    %3907 = vmatprep.subr.mxu0 %v2144
    %3908 = vmatpush1.msra.mxu0 %v2143
    %3909 = vmatprep.subr.mxu0 %v2148
    %3910 = vmatpush1.msra.mxu0 %v2147
    %3911 = vmatprep.subr.mxu0 %v2152
    %3912 = vmatpush1.msra.mxu0 %v2151
    %3913 = vmatprep.subr.mxu0 %v2156
    %3914 = vmatpush1.msra.mxu0 %v2155
    %3915 = vmatprep.subr.mxu0 %v2160
    %3916 = vmatpush1.msra.mxu0 %v2159
    %3917 = vmatprep.subr.mxu0 %v2164
    %3918 = vmatpush1.msra.mxu0 %v2163
    %3919 = vmatprep.subr.mxu0 %v2168
    %3920 = vmatpush1.msra.mxu0 %v2167
    %3921 = vmatprep.subr.mxu0 %v2172
    %3922 = vmatpush1.msra.mxu0 %v2171
    %3923 = vmatprep.subr.mxu0 %v2176
    %3924 = vmatpush1.msra.mxu0 %v2175
    %3925 = vmatprep.subr.mxu0 %v2180
    %3926 = vmatpush1.msra.mxu0 %v2179
    %3927 = vmatprep.subr.mxu0 %v2184
    %3928 = vmatpush1.msra.mxu0 %v2183
    %3929 = vmatprep.subr.mxu0 %v2188
    %3930 = vmatpush1.msra.mxu0 %v2187
    %3931 = vmatprep.subr.mxu0 %v2192
    %3932 = vmatpush1.msra.mxu0 %v2191
    %3933 = vmatprep.subr.mxu0 %v2196
    %3934 = vmatpush1.msra.mxu0 %v2195
    %3935 = vmatprep.subr.mxu0 0.0
    %3936 = vmatpush1.msra.mxu0 0.0
    %3937 = vmatprep.subr.mxu0 0.0
    %3938 = vmatpush1.msra.mxu0 0.0
    %3939 = vmatprep.subr.mxu0 0.0
    %3940 = vmatpush1.msra.mxu0 0.0
    %3941 = vmatprep.subr.mxu0 0.0
    %3942 = vmatpush1.msra.mxu0 0.0
    %3943 = vmatprep.subr.mxu0 0.0
    %3944 = vmatpush1.msra.mxu0 0.0
    %3945 = vmatprep.subr.mxu0 0.0
    %3946 = vmatpush1.msra.mxu0 0.0
    %3947 = vmatprep.subr.mxu0 0.0
    %3948 = vmatpush1.msra.mxu0 0.0
    %3949 = vmatprep.subr.mxu0 0.0
    %3950 = vmatpush1.msra.mxu0 0.0
    %3951 = vmatprep.subr.mxu0 0.0
    %3952 = vmatpush1.msra.mxu0 0.0
    %3953 = vmatprep.subr.mxu0 0.0
    %3954 = vmatpush1.msra.mxu0 0.0
    %3955 = vmatprep.subr.mxu0 0.0
    %3956 = vmatpush1.msra.mxu0 0.0
    %3957 = vmatprep.subr.mxu0 0.0
    %3958 = vmatpush1.msra.mxu0 0.0
    %3959 = vmatprep.subr.mxu0 0.0
    %3960 = vmatpush1.msra.mxu0 0.0
    %3961 = vmatprep.subr.mxu0 0.0
    %3962 = vmatpush1.msra.mxu0 0.0
    %3963 = vmatprep.subr.mxu0 0.0
    %3964 = vmatpush1.msra.mxu0 0.0
    %3965 = vmatprep.subr.mxu0 0.0
    %3966 = vmatpush1.msra.mxu0 0.0
    %3967 = vmatprep.mubr.f32.mxu0 0.0
    %3968 = vmatmul.mubr.f32.gmra.mrb[0].mxu0 %v3901
    %v3969 = vpop.f32.mrb[0].mxu0
    %v3970 = vadd.f32 0.0, %v3969
    %v3971 = vpop.f32.mrb[0].mxu0
    %v3972 = vadd.f32 0.0, %v3971
    %3973 = vdwg.mxu0
    %3974 = vmatprep.subr.mxu0 %v2138
    %3975 = vmatpush1.msra.mxu0 %v2137
    %3976 = vmatprep.subr.mxu0 %v2142
    %3977 = vmatpush1.msra.mxu0 %v2141
    %3978 = vmatprep.subr.mxu0 %v2146
    %3979 = vmatpush1.msra.mxu0 %v2145
    %3980 = vmatprep.subr.mxu0 %v2150
    %3981 = vmatpush1.msra.mxu0 %v2149
    %3982 = vmatprep.subr.mxu0 %v2154
    %3983 = vmatpush1.msra.mxu0 %v2153
    %3984 = vmatprep.subr.mxu0 %v2158
    %3985 = vmatpush1.msra.mxu0 %v2157
    %3986 = vmatprep.subr.mxu0 %v2162
    %3987 = vmatpush1.msra.mxu0 %v2161
    %3988 = vmatprep.subr.mxu0 %v2166
    %3989 = vmatpush1.msra.mxu0 %v2165
    %3990 = vmatprep.subr.mxu0 %v2170
    %3991 = vmatpush1.msra.mxu0 %v2169
    %3992 = vmatprep.subr.mxu0 %v2174
    %3993 = vmatpush1.msra.mxu0 %v2173
    %3994 = vmatprep.subr.mxu0 %v2178
    %3995 = vmatpush1.msra.mxu0 %v2177
    %3996 = vmatprep.subr.mxu0 %v2182
    %3997 = vmatpush1.msra.mxu0 %v2181
    %3998 = vmatprep.subr.mxu0 %v2186
    %3999 = vmatpush1.msra.mxu0 %v2185
    %4000 = vmatprep.subr.mxu0 %v2190
    %4001 = vmatpush1.msra.mxu0 %v2189
    %4002 = vmatprep.subr.mxu0 %v2194
    %4003 = vmatpush1.msra.mxu0 %v2193
    %4004 = vmatprep.subr.mxu0 %v2198
    %4005 = vmatpush1.msra.mxu0 %v2197
    %4006 = vmatprep.subr.mxu0 0.0
    %4007 = vmatpush1.msra.mxu0 0.0
    %4008 = vmatprep.subr.mxu0 0.0
    %4009 = vmatpush1.msra.mxu0 0.0
    %4010 = vmatprep.subr.mxu0 0.0
    %4011 = vmatpush1.msra.mxu0 0.0
    %4012 = vmatprep.subr.mxu0 0.0
    %4013 = vmatpush1.msra.mxu0 0.0
    %4014 = vmatprep.subr.mxu0 0.0
    %4015 = vmatpush1.msra.mxu0 0.0
    %4016 = vmatprep.subr.mxu0 0.0
    %4017 = vmatpush1.msra.mxu0 0.0
    %4018 = vmatprep.subr.mxu0 0.0
    %4019 = vmatpush1.msra.mxu0 0.0
    %4020 = vmatprep.subr.mxu0 0.0
    %4021 = vmatpush1.msra.mxu0 0.0
    %4022 = vmatprep.subr.mxu0 0.0
    %4023 = vmatpush1.msra.mxu0 0.0
    %4024 = vmatprep.subr.mxu0 0.0
    %4025 = vmatpush1.msra.mxu0 0.0
    %4026 = vmatprep.subr.mxu0 0.0
    %4027 = vmatpush1.msra.mxu0 0.0
    %4028 = vmatprep.subr.mxu0 0.0
    %4029 = vmatpush1.msra.mxu0 0.0
    %4030 = vmatprep.subr.mxu0 0.0
    %4031 = vmatpush1.msra.mxu0 0.0
    %4032 = vmatprep.subr.mxu0 0.0
    %4033 = vmatpush1.msra.mxu0 0.0
    %4034 = vmatprep.subr.mxu0 0.0
    %4035 = vmatpush1.msra.mxu0 0.0
    %4036 = vmatprep.subr.mxu0 0.0
    %4037 = vmatpush1.msra.mxu0 0.0
    %4038 = vmatprep.mubr.f32.mxu0 0.0
    %4039 = vmatmul.mubr.f32.gmra.mrb[0].mxu0 %v3901
    %v4040 = vpop.f32.mrb[0].mxu0
    %v4041 = vadd.f32 0.0, %v4040
    %v4042 = vpop.f32.mrb[0].mxu0
    %v4043 = vadd.f32 0.0, %v4042
    %4044 = vdwg.mxu0
    %v4049 = vcombine.low %v3970, %v3972
    %v4050 = vcombine.low %v4041, %v4043
    %v4052 = vunpack.c.l.s4 1983009808
    %v4053 = vunpack.c.0.s8 %v4052
    %v4054 = vlaneseq
    %v4055 = vshrl.u32 %v4054, 7
    %v4056 = vsub.s32 %v4053, %v4055
    %v4057 = vrot.slane %v4049, %v4056
    %v4059 = vunpack.c.l.s4 1983009808
    %v4060 = vunpack.c.0.s8 %v4059
    %v4061 = vlaneseq
    %v4062 = vshrl.u32 %v4061, 7
    %v4063 = vsub.s32 %v4060, %v4062
    %v4064 = vrot.slane %v4050, %v4063
    %v4065 = vcombine.low %v4057, %v4064
    %v4067 = vadd.f32 %v3902, %v4065
    %v4068 = vxor.u32 %v4067, 2147483648
    %v4069 = vmul.f32 %v4068, 1.442695
    %v4070 = vpow.pop %v4069
    %v4071 = vadd.f32 %v4070, 1.0
    %v4072 = vrcp.pop %v4071
    %v4073 = vmul.f32 1.0, %v4072
    %v4075 = vrot.slane %v4067, 2
    %v4077 = vxor.u32 %v4075, 2147483648
    %v4078 = vmul.f32 %v4077, 1.442695
    %v4079 = vpow.pop %v4078
    %v4080 = vadd.f32 %v4079, 1.0
    %v4081 = vrcp.pop %v4080
    %v4082 = vmul.f32 1.0, %v4081
    %v4083 = vrot.slane %v4067, 4
    %v4085 = vtanh.pop %v4083
    %v4086 = vrot.slane %v4067, 6
    %v4088 = vxor.u32 %v4086, 2147483648
    %v4089 = vmul.f32 %v4088, 1.442695
    %v4090 = vpow.pop %v4089
    %v4091 = vadd.f32 %v4090, 1.0
    %v4092 = vrcp.pop %v4091
    %v4093 = vmul.f32 1.0, %v4092
    %v4094 = vmul.f32 %v4082, %v3899
    %v4095 = vmul.f32 %v4073, %v4085
    %v4096 = vadd.f32 %v4094, %v4095
    %v4097 = vtanh.pop %v4096
    %v4098 = vmul.f32 %v4093, %v4097
    %v4099 = vld [vmem:[%s7] sm:$0xff]
    %v4100 = vld [vmem:[%s7 + $0x8] sm:$0xff]
    %v4101 = vld [vmem:[%s7 + $0x10] sm:$0xff]
    %v4102 = vld [vmem:[%s7 + $0x18] sm:$0xff]
    %v4103 = vld [vmem:[%s7 + $0x20] sm:$0xff]
    %v4104 = vld [vmem:[%s7 + $0x28] sm:$0xff]
    %v4105 = vld [vmem:[%s7 + $0x30] sm:$0xff]
    %v4106 = vld [vmem:[%s7 + $0x38] sm:$0xff]
    %v4107 = vld [vmem:[%s7 + $0x40] sm:$0xff]
    %v4108 = vld [vmem:[%s7 + $0x48] sm:$0xff]
    %v4109 = vld [vmem:[%s7 + $0x50] sm:$0xff]
    %v4110 = vld [vmem:[%s7 + $0x58] sm:$0xff]
    %v4111 = vld [vmem:[%s7 + $0x60] sm:$0xff]
    %v4112 = vld [vmem:[%s7 + $0x68] sm:$0xff]
    %v4113 = vld [vmem:[%s7 + $0x70] sm:$0xff]
    %v4114 = vld [vmem:[%s7 + $0x78] sm:$0xff]
    %v4115 = vld [vmem:[%s8] sm:$0x1]
    %v4117 = vlaneseq
    %v4118 = vshrl.u32 %v4117, 7
    %v4119 = vsub.s32 0, %v4118
    %v4120 = vrot.slane %v4115, %v4119
    %4122 = vmatprep.subr.mxu0 0.0
    %4123 = vmatpush1.msra.mxu0 %v4099
    %4124 = vmatprep.subr.mxu0 0.0
    %4125 = vmatpush1.msra.mxu0 %v4100
    %4126 = vmatprep.subr.mxu0 0.0
    %4127 = vmatpush1.msra.mxu0 %v4101
    %4128 = vmatprep.subr.mxu0 0.0
    %4129 = vmatpush1.msra.mxu0 %v4102
    %4130 = vmatprep.subr.mxu0 0.0
    %4131 = vmatpush1.msra.mxu0 %v4103
    %4132 = vmatprep.subr.mxu0 0.0
    %4133 = vmatpush1.msra.mxu0 %v4104
    %4134 = vmatprep.subr.mxu0 0.0
    %4135 = vmatpush1.msra.mxu0 %v4105
    %4136 = vmatprep.subr.mxu0 0.0
    %4137 = vmatpush1.msra.mxu0 %v4106
    %4138 = vmatprep.subr.mxu0 0.0
    %4139 = vmatpush1.msra.mxu0 %v4107
    %4140 = vmatprep.subr.mxu0 0.0
    %4141 = vmatpush1.msra.mxu0 %v4108
    %4142 = vmatprep.subr.mxu0 0.0
    %4143 = vmatpush1.msra.mxu0 %v4109
    %4144 = vmatprep.subr.mxu0 0.0
    %4145 = vmatpush1.msra.mxu0 %v4110
    %4146 = vmatprep.subr.mxu0 0.0
    %4147 = vmatpush1.msra.mxu0 %v4111
    %4148 = vmatprep.subr.mxu0 0.0
    %4149 = vmatpush1.msra.mxu0 %v4112
    %4150 = vmatprep.subr.mxu0 0.0
    %4151 = vmatpush1.msra.mxu0 %v4113
    %4152 = vmatprep.subr.mxu0 0.0
    %4153 = vmatpush1.msra.mxu0 %v4114
    %4154 = vmatprep.subr.mxu0 0.0
    %4155 = vmatpush1.msra.mxu0 0.0
    %4156 = vmatprep.subr.mxu0 0.0
    %4157 = vmatpush1.msra.mxu0 0.0
    %4158 = vmatprep.subr.mxu0 0.0
    %4159 = vmatpush1.msra.mxu0 0.0
    %4160 = vmatprep.subr.mxu0 0.0
    %4161 = vmatpush1.msra.mxu0 0.0
    %4162 = vmatprep.subr.mxu0 0.0
    %4163 = vmatpush1.msra.mxu0 0.0
    %4164 = vmatprep.subr.mxu0 0.0
    %4165 = vmatpush1.msra.mxu0 0.0
    %4166 = vmatprep.subr.mxu0 0.0
    %4167 = vmatpush1.msra.mxu0 0.0
    %4168 = vmatprep.subr.mxu0 0.0
    %4169 = vmatpush1.msra.mxu0 0.0
    %4170 = vmatprep.subr.mxu0 0.0
    %4171 = vmatpush1.msra.mxu0 0.0
    %4172 = vmatprep.subr.mxu0 0.0
    %4173 = vmatpush1.msra.mxu0 0.0
    %4174 = vmatprep.subr.mxu0 0.0
    %4175 = vmatpush1.msra.mxu0 0.0
    %4176 = vmatprep.subr.mxu0 0.0
    %4177 = vmatpush1.msra.mxu0 0.0
    %4178 = vmatprep.subr.mxu0 0.0
    %4179 = vmatpush1.msra.mxu0 0.0
    %4180 = vmatprep.subr.mxu0 0.0
    %4181 = vmatpush1.msra.mxu0 0.0
    %4182 = vmatprep.subr.mxu0 0.0
    %4183 = vmatpush1.msra.mxu0 0.0
    %4184 = vmatprep.subr.mxu0 0.0
    %4185 = vmatpush1.msra.mxu0 0.0
    %4186 = vmatprep.mubr.f32.mxu0 0.0
    %4187 = vmatmul.mubr.f32.gmra.mrb[0].mxu0 %v4098
    %v4188 = vpop.f32.mrb[0].mxu0
    %v4189 = vadd.f32 %v4120, %v4188
    %v4190 = vpop.f32.mrb[0].mxu0
    %4191 = vdwg.mxu0
    %vm4192 = vcmask 25600
    %4193 = vst.msk [vmem:[#allocation10] sm:$0x3] %vm4192, %v4189
    // Predicated region
    $region50: #{tpu_custom_call.1} parent=1 // pred_check
      _
    $region51: #{tpu_custom_call.1} parent=1 // pred_check_branch
      %4195 = sbr.rel (0) target = $region53
    $region52: #{tpu_custom_call.1} parent=1 // pred_region
      %s4197 = ssub.s32 32, 32
      %4198 = vsyncadd [#allocation6], %s4197
      %s4200 = sshll.u32 [#allocation10], 4
      %s4201 = int_to_ptr.vmem [resolvable:$true] %s4200
      %4203 = dma.vmem_to_hbm [thread:$0]  %s4201, 32, %s9, [#allocation6]
    $region53: #{tpu_custom_call.1} parent=1 // pred_fallthru
      _
    // Predicated region
    $region54: #{tpu_custom_call.1} parent=1 // pred_check
      _
    $region55: #{tpu_custom_call.1} parent=1 // pred_check_branch
      %4205 = sbr.rel (0) target = $region57
    $region56: #{tpu_custom_call.1} parent=1 // pred_region
      %4206 = dma.done [#allocation6], 32
    $region57: #{tpu_custom_call.1} parent=1 // pred_fallthru
      _
    %4207 = vsyncpa [#allocation5], 1
    %4208 = vsyncpa [#allocation8], 1
    %4209 = vsyncpa [#allocation6], 1

</llo_original>
